<compile_context>
chip_gen: v6e
topology: v6e:2x2x1
jax: 0.10.0
libtpu: 0.0.40
codegen_flags: <defaults>
</compile_context>

<pallas_src>
import functools

import jax
import jax.numpy as jnp
import numpy as np
from jax import lax
from jax.experimental import pallas as pl
from jax.experimental.pallas import tpu as pltpu


# ---------------------------------------------------------------------------
# pltpu.roll rotation-convention probe (run once; guarantees shift correctness)
# ---------------------------------------------------------------------------
@functools.lru_cache(maxsize=1)
def _pltpu_roll_sign():
    """+1 if pltpu.roll == jnp.roll, -1 if it rotates the other way, None -> use jnp.roll."""
    def _probe(x_ref, o_ref):
        o_ref[...] = pltpu.roll(x_ref[...], shift=1, axis=0)

    x = jnp.broadcast_to(jnp.arange(8, dtype=jnp.float32)[:, None], (8, 128))
    try:
        y = pl.pallas_call(
            _probe, out_shape=jax.ShapeDtypeStruct((8, 128), jnp.float32))(x)
        y = np.asarray(jax.device_get(y))
    except Exception:
        return None
    xn = np.asarray(jax.device_get(x))
    if np.array_equal(y, np.roll(xn, 1, axis=0)):
        return 1
    if np.array_equal(y, np.roll(xn, -1, axis=0)):
        return -1
    return None


# ---------------------------------------------------------------------------
# Kernel
# ---------------------------------------------------------------------------
def _gated_conv_body(xl, xr, hl, hr, w_ref, b_ref, oe_ref, oo_ref, *, roll_sign, block_l):
    """Shared compute.

    xl / xr : (TL, C) f32  left-half (feeds `out`) / right-half (feeds `gate`) input channels
    hl / hr : (2, C)  f32  rows t=-2,-1 of the same channels (zeros on the first L-tile)
    w_ref   : (4, 3, C)    taps, rows = [out-even, out-odd, gate-even, gate-odd]
    b_ref   : (4, C)       biases, same row order
    oe/oo   : (1, TL, C)   even / odd output channels of this tile
    """
    f32 = jnp.float32
    row = lax.broadcasted_iota(jnp.int32, xl.shape, 0)

    def _roll_rows(v, k):
        if roll_sign is None:
            return jnp.roll(v, k, axis=0)                              # slice+concat fallback
        return pltpu.roll(v, shift=(roll_sign * k) % block_l, axis=0)  # XLU rotate

    def _shifted(v, halo):
        # returns (v[t-1], v[t-2]) for t in [0, TL), halo supplies t < 0
        hm2 = halo[0:1, :]   # row t-2
        hm1 = halo[1:2, :]   # row t-1
        vm1 = jnp.where(row >= 1, _roll_rows(v, 1), hm1)
        vm2 = jnp.where(row >= 2, _roll_rows(v, 2), jnp.where(row >= 1, hm1, hm2))
        return vm1, vm2

    xl1, xl2 = _shifted(xl, hl)
    xr1, xr2 = _shifted(xr, hr)

    def _conv3(v0, v1, v2, p):
        # y[t] = w[0]*x[t-2] + w[1]*x[t-1] + w[2]*x[t] + b  (PyTorch Conv1d cross-correlation)
        w0 = w_ref[p, 0:1, :].astype(f32)   # weight rows read once per tile, (1, C) broadcasts
        w1 = w_ref[p, 1:2, :].astype(f32)
        w2 = w_ref[p, 2:3, :].astype(f32)
        bb = b_ref[p:p + 1, :].astype(f32)
        return v2 * w0 + v1 * w1 + v0 * w2 + bb

    o_even = _conv3(xl, xl1, xl2, 0)
    o_odd = _conv3(xl, xl1, xl2, 1)
    g_even = _conv3(xr, xr1, xr2, 2)
    g_odd = _conv3(xr, xr1, xr2, 3)

    oe_ref[0] = (o_even * jax.nn.sigmoid(g_even)).astype(oe_ref.dtype)
    oo_ref[0] = (o_odd * jax.nn.sigmoid(g_odd)).astype(oo_ref.dtype)


def _gated_conv_kernel_split(xl_ref, xr_ref, hl_ref, hr_ref, w_ref, b_ref, oe_ref, oo_ref,
                             *, roll_sign, block_l):
    """Channel-tiled path (d_model/2 a multiple of 128): halves arrive as separate blocks."""
    f32 = jnp.float32
    not_first = (pl.program_id(1) > 0).astype(f32)
    xl = xl_ref[0].astype(f32)
    xr = xr_ref[0].astype(f32)
    hl = hl_ref[0, 6:8, :].astype(f32) * not_first
    hr = hr_ref[0, 6:8, :].astype(f32) * not_first
    _gated_conv_body(xl, xr, hl, hr, w_ref, b_ref, oe_ref, oo_ref,
                     roll_sign=roll_sign, block_l=block_l)


def _gated_conv_kernel_fused(x_ref, h_ref, w_ref, b_ref, oe_ref, oo_ref,
                             *, roll_sign, block_l, d_half):
    """Small-d_model fallback: full-width x block, halves sliced in-kernel."""
    f32 = jnp.float32
    not_first = (pl.program_id(1) > 0).astype(f32)
    x = x_ref[0].astype(f32)
    h = h_ref[0, 6:8, :].astype(f32) * not_first
    _gated_conv_body(x[:, :d_half], x[:, d_half:], h[:, :d_half], h[:, d_half:],
                     w_ref, b_ref, oe_ref, oo_ref, roll_sign=roll_sign, block_l=block_l)


# ---------------------------------------------------------------------------
# Wrapper
# ---------------------------------------------------------------------------
def _pick_tile(n, candidates, fallback):
    for t in candidates:
        if n % t == 0:
            return t
    return fallback


def gated_convolution(x, weight, bias, *, block_l=None, block_c=None, out_dtype=None):
    """x: (B, L, d_model); weight: (2*d_model, 1, 3); bias: (2*d_model,) -> (B, L, d_model)."""
    B, L, D = x.shape
    assert D % 2 == 0, "d_model must be even"
    D2 = D // 2
    assert weight.shape == (2 * D, 1, 3), weight.shape
    assert bias.shape == (2 * D,), bias.shape
    assert L % 8 == 0, "sequence length must be a multiple of 8"
    out_dtype = x.dtype if out_dtype is None else jnp.dtype(out_dtype)

    split = (D2 % 128 == 0)  # lane-dense channel tiling possible

    # --- tile selection: sized for v7x's 64 MiB VMEM (also fine on v5e/v6e) ---
    if block_l is None:
        block_l = _pick_tile(L, (512, 256, 128, 64, 32, 16, 8), L)
    if block_c is None:
        block_c = _pick_tile(D2, (256, 128), D2) if split else D2
    assert L % block_l == 0 and block_l % 8 == 0
    assert D2 % block_c == 0 and (block_c % 128 == 0 or block_c == D2)
    if not split:
        assert block_c == D2, "channel tiling requires d_model/2 to be a multiple of 128"
    n_l, n_c = L // block_l, D2 // block_c

    # --- repack grouped-conv parameters (tiny, one-time XLA work) ---
    wo = weight[:D, 0, :]       # (D, 3)  taps for the `out` half
    wg = weight[D:, 0, :]       # (D, 3)  taps for the `gate` half
    w_all = jnp.stack([wo[0::2].T, wo[1::2].T, wg[0::2].T, wg[1::2].T],
                      axis=0).astype(jnp.float32)                      # (4, 3, D2)
    b_all = jnp.stack([bias[:D][0::2], bias[:D][1::2], bias[D:][0::2], bias[D:][1::2]],
                      axis=0).astype(jnp.float32)                      # (4, D2)

    roll_sign = _pltpu_roll_sign()
    halo_blk = block_l // 8
    w_spec = pl.BlockSpec((4, 3, block_c), lambda b, i, c: (0, 0, c))
    b_spec = pl.BlockSpec((4, block_c), lambda b, i, c: (0, c))

    if split:
        kernel = functools.partial(_gated_conv_kernel_split,
                                   roll_sign=roll_sign, block_l=block_l)
        in_specs = [
            pl.BlockSpec((1, block_l, block_c), lambda b, i, c: (b, i, c)),         # x left half
            pl.BlockSpec((1, block_l, block_c), lambda b, i, c: (b, i, c + n_c)),   # x right half
            pl.BlockSpec((1, 8, block_c),
                         lambda b, i, c: (b, jnp.maximum(i * halo_blk - 1, 0), c)),        # halo L
            pl.BlockSpec((1, 8, block_c),
                         lambda b, i, c: (b, jnp.maximum(i * halo_blk - 1, 0), c + n_c)),  # halo R
            w_spec, b_spec,
        ]
        args = (x, x, x, x, w_all, b_all)
    else:
        kernel = functools.partial(_gated_conv_kernel_fused,
                                   roll_sign=roll_sign, block_l=block_l, d_half=D2)
        in_specs = [
            pl.BlockSpec((1, block_l, D), lambda b, i, c: (b, i, 0)),                # x (full width)
            pl.BlockSpec((1, 8, D),
                         lambda b, i, c: (b, jnp.maximum(i * halo_blk - 1, 0), 0)),  # halo
            w_spec, b_spec,
        ]
        args = (x, x, w_all, b_all)

    out_even, out_odd = pl.pallas_call(
        kernel,
        out_shape=(jax.ShapeDtypeStruct((B, L, D2), out_dtype),
                   jax.ShapeDtypeStruct((B, L, D2), out_dtype)),
        grid=(B, n_l, n_c),
        in_specs=in_specs,
        out_specs=(pl.BlockSpec((1, block_l, block_c), lambda b, i, c: (b, i, c)),
                   pl.BlockSpec((1, block_l, block_c), lambda b, i, c: (b, i, c))),
        compiler_params=pltpu.CompilerParams(
            dimension_semantics=("parallel", "parallel", "parallel"),
            vmem_limit_bytes=48 * 1024 * 1024,
        ),
    )(*args)

    # Interleave even/odd output channels: out[..., 2m] = even[..., m], out[..., 2m+1] = odd[..., m].
    # Layout-only stack+reshape in XLA (the lone step kept outside the kernel).
    return jnp.stack([out_even, out_odd], axis=-1).reshape(B, L, D)


# ---------------------------------------------------------------------------
# Pure-JAX reference (replica of the PyTorch forward) for verification
# ---------------------------------------------------------------------------
def _reference(x, weight, bias, *, padding=1):
    B, L, D = x.shape
    x_ncl = jnp.transpose(x, (0, 2, 1))                              # (B, D, L)
    x_pad = jnp.pad(x_ncl, ((0, 0), (0, 0), (padding * 2, 0)))       # causal left pad
    y = lax.conv_general_dilated(
        x_pad, weight, window_strides=(1,), padding="VALID",
        dimension_numbers=("NCH", "OIH", "NCH"), feature_group_count=D,
        precision=lax.Precision.HIGHEST,
    ) + bias[None, :, None]                                          # (B, 2D, L)
    y = jnp.transpose(y, (0, 2, 1))                                  # (B, L, 2D)
    out, gate = y[..., :D], y[..., D:]
    return out * jax.nn.sigmoid(gate)


if __name__ == "__main__":
    key = jax.random.PRNGKey(0)
    fan_in = 1 * 3  # in_channels_per_group * kernel_size
    bound = 1.0 / (fan_in ** 0.5)

    checks = [
        # production-like: multiple L tiles (exercises the causal halo), 128-lane channel tiles
        dict(B=2, L=1024, D=256, dtype=jnp.float32, tols=(1e-5, 1e-5), tiles={}),
        # force multi-tile in BOTH the L-axis and the channel-pair axis
        dict(B=2, L=256, D=512, dtype=jnp.float32, tols=(1e-5, 1e-5),
             tiles=dict(block_l=64, block_c=128)),
        # tiny shape (original self-test size; exercises the small-d_model fallback path)
        dict(B=2, L=8, D=32, dtype=jnp.float32, tols=(1e-5, 1e-5), tiles={}),
        # bf16 HBM I/O (v6e/v7x recommendation) with f32 in-kernel compute
        dict(B=1, L=1024, D=256, dtype=jnp.bfloat16, tols=(3e-2, 3e-2), tiles={}),
    ]

    for cfg in checks:
        B, L, D = cfg["B"], cfg["L"], cfg["D"]
        key, kx, kw, kb = jax.random.split(key, 4)
        x = jax.random.normal(kx, (B, L, D), jnp.float32)
        weight = jax.random.uniform(kw, (2 * D, 1, 3), jnp.float32, -bound, bound)
        bias = jax.random.uniform(kb, (2 * D,), jnp.float32, -bound, bound)

        x_in = x.astype(cfg["dtype"])
        out = gated_convolution(x_in, weight, bias, **cfg["tiles"])
        out = jax.block_until_ready(out)

        ref = _reference(x_in.astype(jnp.float32), weight, bias)
        atol, rtol = cfg["tols"]
        assert out.shape == (B, L, D)
        assert out.dtype == jnp.dtype(cfg["dtype"])
        max_err = float(jnp.max(jnp.abs(out.astype(jnp.float32) - ref)))
        assert jnp.allclose(out.astype(jnp.float32), ref, atol=atol, rtol=rtol), (
            f"Pallas result mismatch (B={B}, L={L}, D={D}, dtype={cfg['dtype']}): "
            f"max abs err = {max_err}")

    print("KERNEL_OK")
</pallas_src>

<mosaic_0001>
module attributes {stable_mosaic.version = 11 : i64} {
  func.func @_probe(%arg0: memref<8x128xf32, #tpu.memory_space<vmem>>, %arg1: memref<8x128xf32, #tpu.memory_space<vmem>>) attributes {dimension_semantics = [], scalar_prefetch = 0 : i64, scratch_operands = 0 : i64, tpu.core_type = #tpu.core_type<tc>} {
    %c0 = arith.constant 0 : index
    %c0_0 = arith.constant 0 : index
    %0 = vector.load %arg0[%c0, %c0_0] : memref<8x128xf32, #tpu.memory_space<vmem>>, vector<8x128xf32>
    %c1_i32 = arith.constant 1 : i32
    %1 = tpu.dynamic_rotate %0 by %c1_i32 dim 0 : vector<8x128xf32>, i32 -> vector<8x128xf32>
    %c0_1 = arith.constant 0 : index
    %c0_2 = arith.constant 0 : index
    %2 = vector.load %arg1[%c0_1, %c0_2] : memref<8x128xf32, #tpu.memory_space<vmem>>, vector<8x128xf32>
    tpu.vector_store %arg1[%c0_1, %c0_2], %1 {strides = array<i32>} : memref<8x128xf32, #tpu.memory_space<vmem>>, vector<8x128xf32>,
    return
  }
}

module attributes {stable_mosaic.version = 11 : i64} {
  func.func @_gated_conv_kernel_split(%arg0: i32, %arg1: i32, %arg2: i32, %arg3: memref<1x512x128xf32, #tpu.memory_space<vmem>>, %arg4: memref<1x512x128xf32, #tpu.memory_space<vmem>>, %arg5: memref<1x8x128xf32, #tpu.memory_space<vmem>>, %arg6: memref<1x8x128xf32, #tpu.memory_space<vmem>>, %arg7: memref<4x3x128xf32, #tpu.memory_space<vmem>>, %arg8: memref<4x128xf32, #tpu.memory_space<vmem>>, %arg9: memref<1x512x128xf32, #tpu.memory_space<vmem>>, %arg10: memref<1x512x128xf32, #tpu.memory_space<vmem>>) attributes {dimension_semantics = [#tpu.dimension_semantics<parallel>, #tpu.dimension_semantics<parallel>, #tpu.dimension_semantics<parallel>], iteration_bounds = array<i64: 2, 2, 1>, scalar_prefetch = 0 : i64, scratch_operands = 0 : i64, tpu.core_type = #tpu.core_type<tc>, window_params = [{transform_indices = @transform_0, window_bounds = array<i64: 1, 512, 128>}, {transform_indices = @transform_1, window_bounds = array<i64: 1, 512, 128>}, {transform_indices = @transform_2, window_bounds = array<i64: 1, 8, 128>}, {transform_indices = @transform_3, window_bounds = array<i64: 1, 8, 128>}, {transform_indices = @transform_4, window_bounds = array<i64: 4, 3, 128>}, {transform_indices = @transform_5, window_bounds = array<i64: 4, 128>}, {transform_indices = @transform_6, window_bounds = array<i64: 1, 512, 128>}, {transform_indices = @transform_7, window_bounds = array<i64: 1, 512, 128>}]} {
    %c0_i32 = arith.constant 0 : i32
    %0 = arith.cmpi sgt, %arg1, %c0_i32 : i32
    %1 = arith.extui %0 : i1 to i32
    %2 = arith.sitofp %1 : i32 to f32
    %c0 = arith.constant 0 : index
    %c0_0 = arith.constant 0 : index
    %c0_1 = arith.constant 0 : index
    %3 = vector.load %arg3[%c0, %c0_0, %c0_1] : memref<1x512x128xf32, #tpu.memory_space<vmem>>, vector<1x512x128xf32>
    %4 = vector.shape_cast %3 : vector<1x512x128xf32> to vector<512x128xf32>
    %c0_2 = arith.constant 0 : index
    %c0_3 = arith.constant 0 : index
    %c0_4 = arith.constant 0 : index
    %5 = vector.load %arg4[%c0_2, %c0_3, %c0_4] : memref<1x512x128xf32, #tpu.memory_space<vmem>>, vector<1x512x128xf32>
    %6 = vector.shape_cast %5 : vector<1x512x128xf32> to vector<512x128xf32>
    %c0_5 = arith.constant 0 : index
    %c6 = arith.constant 6 : index
    %c0_6 = arith.constant 0 : index
    %7 = vector.load %arg5[%c0_5, %c6, %c0_6] : memref<1x8x128xf32, #tpu.memory_space<vmem>>, vector<1x2x128xf32>
    %8 = vector.shape_cast %7 : vector<1x2x128xf32> to vector<2x128xf32>
    %9 = vector.broadcast %2 : f32 to vector<2x128xf32>
    %10 = arith.mulf %8, %9 : vector<2x128xf32>
    %c0_7 = arith.constant 0 : index
    %c6_8 = arith.constant 6 : index
    %c0_9 = arith.constant 0 : index
    %11 = vector.load %arg6[%c0_7, %c6_8, %c0_9] : memref<1x8x128xf32, #tpu.memory_space<vmem>>, vector<1x2x128xf32>
    %12 = vector.shape_cast %11 : vector<1x2x128xf32> to vector<2x128xf32>
    %13 = vector.broadcast %2 : f32 to vector<2x128xf32>
    %14 = arith.mulf %12, %13 : vector<2x128xf32>
    %15 = tpu.iota {dimensions = array<i32: 0>} : vector<512x128xi32>
    %16 = vector.extract_strided_slice %10 {offsets = [0, 0], sizes = [1, 128], strides = [1, 1]} : vector<2x128xf32> to vector<1x128xf32>
    %17 = vector.extract_strided_slice %10 {offsets = [1, 0], sizes = [1, 128], strides = [1, 1]} : vector<2x128xf32> to vector<1x128xf32>
    %c1_i32 = arith.constant 1 : i32
    %18 = vector.broadcast %c1_i32 : i32 to vector<512x128xi32>
    %19 = arith.cmpi sge, %15, %18 : vector<512x128xi32>
    %20 = vector.extract_strided_slice %4 {offsets = [511, 0], sizes = [1, 128], strides = [1, 1]} : vector<512x128xf32> to vector<1x128xf32>
    %21 = vector.extract_strided_slice %4 {offsets = [0, 0], sizes = [511, 128], strides = [1, 1]} : vector<512x128xf32> to vector<511x128xf32>
    %22 = tpu.concatenate %20, %21 in 0 : vector<1x128xf32>, vector<511x128xf32> -> vector<512x128xf32>
    %23 = vector.shape_cast %17 : vector<1x128xf32> to vector<1x128xf32>
    %24 = vector.broadcast %23 : vector<1x128xf32> to vector<512x128xf32>
    %25 = arith.select %19, %22, %24 : vector<512x128xi1>, vector<512x128xf32>
    %c2_i32 = arith.constant 2 : i32
    %26 = vector.broadcast %c2_i32 : i32 to vector<512x128xi32>
    %27 = arith.cmpi sge, %15, %26 : vector<512x128xi32>
    %28 = vector.extract_strided_slice %4 {offsets = [510, 0], sizes = [2, 128], strides = [1, 1]} : vector<512x128xf32> to vector<2x128xf32>
    %29 = vector.extract_strided_slice %4 {offsets = [0, 0], sizes = [510, 128], strides = [1, 1]} : vector<512x128xf32> to vector<510x128xf32>
    %30 = tpu.concatenate %28, %29 in 0 : vector<2x128xf32>, vector<510x128xf32> -> vector<512x128xf32>
    %c1_i32_10 = arith.constant 1 : i32
    %31 = vector.broadcast %c1_i32_10 : i32 to vector<512x128xi32>
    %32 = arith.cmpi sge, %15, %31 : vector<512x128xi32>
    %33 = vector.shape_cast %17 : vector<1x128xf32> to vector<1x128xf32>
    %34 = vector.broadcast %33 : vector<1x128xf32> to vector<512x128xf32>
    %35 = vector.shape_cast %16 : vector<1x128xf32> to vector<1x128xf32>
    %36 = vector.broadcast %35 : vector<1x128xf32> to vector<512x128xf32>
    %37 = arith.select %32, %34, %36 : vector<512x128xi1>, vector<512x128xf32>
    %38 = arith.select %27, %30, %37 : vector<512x128xi1>, vector<512x128xf32>
    %39 = vector.extract_strided_slice %14 {offsets = [0, 0], sizes = [1, 128], strides = [1, 1]} : vector<2x128xf32> to vector<1x128xf32>
    %40 = vector.extract_strided_slice %14 {offsets = [1, 0], sizes = [1, 128], strides = [1, 1]} : vector<2x128xf32> to vector<1x128xf32>
    %c1_i32_11 = arith.constant 1 : i32
    %41 = vector.broadcast %c1_i32_11 : i32 to vector<512x128xi32>
    %42 = arith.cmpi sge, %15, %41 : vector<512x128xi32>
    %43 = vector.extract_strided_slice %6 {offsets = [511, 0], sizes = [1, 128], strides = [1, 1]} : vector<512x128xf32> to vector<1x128xf32>
    %44 = vector.extract_strided_slice %6 {offsets = [0, 0], sizes = [511, 128], strides = [1, 1]} : vector<512x128xf32> to vector<511x128xf32>
    %45 = tpu.concatenate %43, %44 in 0 : vector<1x128xf32>, vector<511x128xf32> -> vector<512x128xf32>
    %46 = vector.shape_cast %40 : vector<1x128xf32> to vector<1x128xf32>
    %47 = vector.broadcast %46 : vector<1x128xf32> to vector<512x128xf32>
    %48 = arith.select %42, %45, %47 : vector<512x128xi1>, vector<512x128xf32>
    %c2_i32_12 = arith.constant 2 : i32
    %49 = vector.broadcast %c2_i32_12 : i32 to vector<512x128xi32>
    %50 = arith.cmpi sge, %15, %49 : vector<512x128xi32>
    %51 = vector.extract_strided_slice %6 {offsets = [510, 0], sizes = [2, 128], strides = [1, 1]} : vector<512x128xf32> to vector<2x128xf32>
    %52 = vector.extract_strided_slice %6 {offsets = [0, 0], sizes = [510, 128], strides = [1, 1]} : vector<512x128xf32> to vector<510x128xf32>
    %53 = tpu.concatenate %51, %52 in 0 : vector<2x128xf32>, vector<510x128xf32> -> vector<512x128xf32>
    %c1_i32_13 = arith.constant 1 : i32
    %54 = vector.broadcast %c1_i32_13 : i32 to vector<512x128xi32>
    %55 = arith.cmpi sge, %15, %54 : vector<512x128xi32>
    %56 = vector.shape_cast %40 : vector<1x128xf32> to vector<1x128xf32>
    %57 = vector.broadcast %56 : vector<1x128xf32> to vector<512x128xf32>
    %58 = vector.shape_cast %39 : vector<1x128xf32> to vector<1x128xf32>
    %59 = vector.broadcast %58 : vector<1x128xf32> to vector<512x128xf32>
    %60 = arith.select %55, %57, %59 : vector<512x128xi1>, vector<512x128xf32>
    %61 = arith.select %50, %53, %60 : vector<512x128xi1>, vector<512x128xf32>
    %c0_14 = arith.constant 0 : index
    %c0_15 = arith.constant 0 : index
    %c0_16 = arith.constant 0 : index
    %62 = vector.load %arg7[%c0_14, %c0_15, %c0_16] : memref<4x3x128xf32, #tpu.memory_space<vmem>>, vector<1x1x128xf32>
    %63 = vector.shape_cast %62 : vector<1x1x128xf32> to vector<1x128xf32>
    %c0_17 = arith.constant 0 : index
    %c1 = arith.constant 1 : index
    %c0_18 = arith.constant 0 : index
    %64 = vector.load %arg7[%c0_17, %c1, %c0_18] : memref<4x3x128xf32, #tpu.memory_space<vmem>>, vector<1x1x128xf32>
    %65 = vector.shape_cast %64 : vector<1x1x128xf32> to vector<1x128xf32>
    %c0_19 = arith.constant 0 : index
    %c2 = arith.constant 2 : index
    %c0_20 = arith.constant 0 : index
    %66 = vector.load %arg7[%c0_19, %c2, %c0_20] : memref<4x3x128xf32, #tpu.memory_space<vmem>>, vector<1x1x128xf32>
    %67 = vector.shape_cast %66 : vector<1x1x128xf32> to vector<1x128xf32>
    %c0_21 = arith.constant 0 : index
    %c0_22 = arith.constant 0 : index
    %68 = vector.load %arg8[%c0_21, %c0_22] : memref<4x128xf32, #tpu.memory_space<vmem>>, vector<1x128xf32>
    %69 = vector.broadcast %63 : vector<1x128xf32> to vector<512x128xf32>
    %70 = arith.mulf %38, %69 : vector<512x128xf32>
    %71 = vector.broadcast %65 : vector<1x128xf32> to vector<512x128xf32>
    %72 = arith.mulf %25, %71 : vector<512x128xf32>
    %73 = arith.addf %70, %72 : vector<512x128xf32>
    %74 = vector.broadcast %67 : vector<1x128xf32> to vector<512x128xf32>
    %75 = arith.mulf %4, %74 : vector<512x128xf32>
    %76 = arith.addf %73, %75 : vector<512x128xf32>
    %77 = vector.broadcast %68 : vector<1x128xf32> to vector<512x128xf32>
    %78 = arith.addf %76, %77 : vector<512x128xf32>
    %c1_23 = arith.constant 1 : index
    %c0_24 = arith.constant 0 : index
    %c0_25 = arith.constant 0 : index
    %79 = vector.load %arg7[%c1_23, %c0_24, %c0_25] : memref<4x3x128xf32, #tpu.memory_space<vmem>>, vector<1x1x128xf32>
    %80 = vector.shape_cast %79 : vector<1x1x128xf32> to vector<1x128xf32>
    %c1_26 = arith.constant 1 : index
    %c1_27 = arith.constant 1 : index
    %c0_28 = arith.constant 0 : index
    %81 = vector.load %arg7[%c1_26, %c1_27, %c0_28] : memref<4x3x128xf32, #tpu.memory_space<vmem>>, vector<1x1x128xf32>
    %82 = vector.shape_cast %81 : vector<1x1x128xf32> to vector<1x128xf32>
    %c1_29 = arith.constant 1 : index
    %c2_30 = arith.constant 2 : index
    %c0_31 = arith.constant 0 : index
    %83 = vector.load %arg7[%c1_29, %c2_30, %c0_31] : memref<4x3x128xf32, #tpu.memory_space<vmem>>, vector<1x1x128xf32>
    %84 = vector.shape_cast %83 : vector<1x1x128xf32> to vector<1x128xf32>
    %c1_32 = arith.constant 1 : index
    %c0_33 = arith.constant 0 : index
    %85 = vector.load %arg8[%c1_32, %c0_33] : memref<4x128xf32, #tpu.memory_space<vmem>>, vector<1x128xf32>
    %86 = vector.broadcast %80 : vector<1x128xf32> to vector<512x128xf32>
    %87 = arith.mulf %38, %86 : vector<512x128xf32>
    %88 = vector.broadcast %82 : vector<1x128xf32> to vector<512x128xf32>
    %89 = arith.mulf %25, %88 : vector<512x128xf32>
    %90 = arith.addf %87, %89 : vector<512x128xf32>
    %91 = vector.broadcast %84 : vector<1x128xf32> to vector<512x128xf32>
    %92 = arith.mulf %4, %91 : vector<512x128xf32>
    %93 = arith.addf %90, %92 : vector<512x128xf32>
    %94 = vector.broadcast %85 : vector<1x128xf32> to vector<512x128xf32>
    %95 = arith.addf %93, %94 : vector<512x128xf32>
    %c2_34 = arith.constant 2 : index
    %c0_35 = arith.constant 0 : index
    %c0_36 = arith.constant 0 : index
    %96 = vector.load %arg7[%c2_34, %c0_35, %c0_36] : memref<4x3x128xf32, #tpu.memory_space<vmem>>, vector<1x1x128xf32>
    %97 = vector.shape_cast %96 : vector<1x1x128xf32> to vector<1x128xf32>
    %c2_37 = arith.constant 2 : index
    %c1_38 = arith.constant 1 : index
    %c0_39 = arith.constant 0 : index
    %98 = vector.load %arg7[%c2_37, %c1_38, %c0_39] : memref<4x3x128xf32, #tpu.memory_space<vmem>>, vector<1x1x128xf32>
    %99 = vector.shape_cast %98 : vector<1x1x128xf32> to vector<1x128xf32>
    %c2_40 = arith.constant 2 : index
    %c2_41 = arith.constant 2 : index
    %c0_42 = arith.constant 0 : index
    %100 = vector.load %arg7[%c2_40, %c2_41, %c0_42] : memref<4x3x128xf32, #tpu.memory_space<vmem>>, vector<1x1x128xf32>
    %101 = vector.shape_cast %100 : vector<1x1x128xf32> to vector<1x128xf32>
    %c2_43 = arith.constant 2 : index
    %c0_44 = arith.constant 0 : index
    %102 = vector.load %arg8[%c2_43, %c0_44] : memref<4x128xf32, #tpu.memory_space<vmem>>, vector<1x128xf32>
    %103 = vector.broadcast %97 : vector<1x128xf32> to vector<512x128xf32>
    %104 = arith.mulf %61, %103 : vector<512x128xf32>
    %105 = vector.broadcast %99 : vector<1x128xf32> to vector<512x128xf32>
    %106 = arith.mulf %48, %105 : vector<512x128xf32>
    %107 = arith.addf %104, %106 : vector<512x128xf32>
    %108 = vector.broadcast %101 : vector<1x128xf32> to vector<512x128xf32>
    %109 = arith.mulf %6, %108 : vector<512x128xf32>
    %110 = arith.addf %107, %109 : vector<512x128xf32>
    %111 = vector.broadcast %102 : vector<1x128xf32> to vector<512x128xf32>
    %112 = arith.addf %110, %111 : vector<512x128xf32>
    %c3 = arith.constant 3 : index
    %c0_45 = arith.constant 0 : index
    %c0_46 = arith.constant 0 : index
    %113 = vector.load %arg7[%c3, %c0_45, %c0_46] : memref<4x3x128xf32, #tpu.memory_space<vmem>>, vector<1x1x128xf32>
    %114 = vector.shape_cast %113 : vector<1x1x128xf32> to vector<1x128xf32>
    %c3_47 = arith.constant 3 : index
    %c1_48 = arith.constant 1 : index
    %c0_49 = arith.constant 0 : index
    %115 = vector.load %arg7[%c3_47, %c1_48, %c0_49] : memref<4x3x128xf32, #tpu.memory_space<vmem>>, vector<1x1x128xf32>
    %116 = vector.shape_cast %115 : vector<1x1x128xf32> to vector<1x128xf32>
    %c3_50 = arith.constant 3 : index
    %c2_51 = arith.constant 2 : index
    %c0_52 = arith.constant 0 : index
    %117 = vector.load %arg7[%c3_50, %c2_51, %c0_52] : memref<4x3x128xf32, #tpu.memory_space<vmem>>, vector<1x1x128xf32>
    %118 = vector.shape_cast %117 : vector<1x1x128xf32> to vector<1x128xf32>
    %c3_53 = arith.constant 3 : index
    %c0_54 = arith.constant 0 : index
    %119 = vector.load %arg8[%c3_53, %c0_54] : memref<4x128xf32, #tpu.memory_space<vmem>>, vector<1x128xf32>
    %120 = vector.broadcast %114 : vector<1x128xf32> to vector<512x128xf32>
    %121 = arith.mulf %61, %120 : vector<512x128xf32>
    %122 = vector.broadcast %116 : vector<1x128xf32> to vector<512x128xf32>
    %123 = arith.mulf %48, %122 : vector<512x128xf32>
    %124 = arith.addf %121, %123 : vector<512x128xf32>
    %125 = vector.broadcast %118 : vector<1x128xf32> to vector<512x128xf32>
    %126 = arith.mulf %6, %125 : vector<512x128xf32>
    %127 = arith.addf %124, %126 : vector<512x128xf32>
    %128 = vector.broadcast %119 : vector<1x128xf32> to vector<512x128xf32>
    %129 = arith.addf %127, %128 : vector<512x128xf32>
    %130 = arith.negf %112 : vector<512x128xf32>
    %131 = math.exp %130 : vector<512x128xf32>
    %cst = arith.constant 1.000000e+00 : f32
    %132 = vector.broadcast %cst : f32 to vector<512x128xf32>
    %133 = arith.addf %132, %131 : vector<512x128xf32>
    %134 = arith.divf %132, %133 : vector<512x128xf32>
    %135 = arith.mulf %78, %134 : vector<512x128xf32>
    %c0_55 = arith.constant 0 : index
    %c0_56 = arith.constant 0 : index
    %c0_57 = arith.constant 0 : index
    %136 = vector.load %arg9[%c0_55, %c0_56, %c0_57] : memref<1x512x128xf32, #tpu.memory_space<vmem>>, vector<1x512x128xf32>
    %137 = vector.shape_cast %136 : vector<1x512x128xf32> to vector<512x128xf32>
    %138 = vector.shape_cast %135 : vector<512x128xf32> to vector<1x512x128xf32>
    tpu.vector_store %arg9[%c0_55, %c0_56, %c0_57], %138 {strides = array<i32>} : memref<1x512x128xf32, #tpu.memory_space<vmem>>, vector<1x512x128xf32>,
    %139 = arith.negf %129 : vector<512x128xf32>
    %140 = math.exp %139 : vector<512x128xf32>
    %cst_58 = arith.constant 1.000000e+00 : f32
    %141 = vector.broadcast %cst_58 : f32 to vector<512x128xf32>
    %142 = arith.addf %141, %140 : vector<512x128xf32>
    %143 = arith.divf %141, %142 : vector<512x128xf32>
    %144 = arith.mulf %95, %143 : vector<512x128xf32>
    %c0_59 = arith.constant 0 : index
    %c0_60 = arith.constant 0 : index
    %c0_61 = arith.constant 0 : index
    %145 = vector.load %arg10[%c0_59, %c0_60, %c0_61] : memref<1x512x128xf32, #tpu.memory_space<vmem>>, vector<1x512x128xf32>
    %146 = vector.shape_cast %145 : vector<1x512x128xf32> to vector<512x128xf32>
    %147 = vector.shape_cast %144 : vector<512x128xf32> to vector<1x512x128xf32>
    tpu.vector_store %arg10[%c0_59, %c0_60, %c0_61], %147 {strides = array<i32>} : memref<1x512x128xf32, #tpu.memory_space<vmem>>, vector<1x512x128xf32>,
    return
  }
  func.func @transform_0(%arg0: i32, %arg1: i32, %arg2: i32) -> (i32, i32, i32) {
    %c0_i32 = arith.constant 0 : i32
    return %arg0, %arg1, %arg2 : i32, i32, i32
  }
  func.func @transform_1(%arg0: i32, %arg1: i32, %arg2: i32) -> (i32, i32, i32) {
    %c1_i32 = arith.constant 1 : i32
    %0 = arith.addi %arg2, %c1_i32 : i32
    %c0_i32 = arith.constant 0 : i32
    return %arg0, %arg1, %0 : i32, i32, i32
  }
  func.func @transform_2(%arg0: i32, %arg1: i32, %arg2: i32) -> (i32, i32, i32) {
    %c64_i32 = arith.constant 64 : i32
    %0 = arith.muli %arg1, %c64_i32 : i32
    %c1_i32 = arith.constant 1 : i32
    %1 = arith.subi %0, %c1_i32 : i32
    %c0_i32 = arith.constant 0 : i32
    %2 = arith.maxsi %1, %c0_i32 : i32
    %c0_i32_0 = arith.constant 0 : i32
    return %arg0, %2, %arg2 : i32, i32, i32
  }
  func.func @transform_3(%arg0: i32, %arg1: i32, %arg2: i32) -> (i32, i32, i32) {
    %c64_i32 = arith.constant 64 : i32
    %0 = arith.muli %arg1, %c64_i32 : i32
    %c1_i32 = arith.constant 1 : i32
    %1 = arith.subi %0, %c1_i32 : i32
    %c0_i32 = arith.constant 0 : i32
    %2 = arith.maxsi %1, %c0_i32 : i32
    %c1_i32_0 = arith.constant 1 : i32
    %3 = arith.addi %arg2, %c1_i32_0 : i32
    %c0_i32_1 = arith.constant 0 : i32
    return %arg0, %2, %3 : i32, i32, i32
  }
  func.func @transform_4(%arg0: i32, %arg1: i32, %arg2: i32) -> (i32, i32, i32) {
    %c0_i32 = arith.constant 0 : i32
    %c0_i32_0 = arith.constant 0 : i32
    %c0_i32_1 = arith.constant 0 : i32
    return %c0_i32, %c0_i32_0, %arg2 : i32, i32, i32
  }
  func.func @transform_5(%arg0: i32, %arg1: i32, %arg2: i32) -> (i32, i32) {
    %c0_i32 = arith.constant 0 : i32
    %c0_i32_0 = arith.constant 0 : i32
    return %c0_i32, %arg2 : i32, i32
  }
  func.func @transform_6(%arg0: i32, %arg1: i32, %arg2: i32) -> (i32, i32, i32) {
    %c0_i32 = arith.constant 0 : i32
    return %arg0, %arg1, %arg2 : i32, i32, i32
  }
  func.func @transform_7(%arg0: i32, %arg1: i32, %arg2: i32) -> (i32, i32, i32) {
    %c0_i32 = arith.constant 0 : i32
    return %arg0, %arg1, %arg2 : i32, i32, i32
  }
}

</mosaic_0001>

<llo_original>
// kernel: tpu_custom_call.1
$region0: #{tpu_custom_call.1}
  #allocation0 [shape = 'u32[]', space=smem, size = 0x4, offset = 0x4, fixed_abs, tag = 'smem constant byte address 0x4 - core index']
  #allocation1 [shape = 'u32[144,128]{1,0:T(1,128)}', space=vmem, size = 0x12000, scoped, tag = 'internal scratch']
  %s0 = inlined_call_operand.hbm [shape: f32[8,128], index: 0, kind: input, shape index: {}]
  %s1 = inlined_call_operand.hbm [shape: f32[8,128], index: 1, kind: output, shape index: {}]
  %s2 = sld [smem:[#allocation0]]
  $region18: #{tpu_custom_call.1} parent=0
    _
  %s4 = ssub.s32 1, %s2
  %s5 = scalar_select 0, %s4, %s2
  $region1: #{tpu_custom_call.1} parent=0
    #allocation2 [shape = 'u8[4096]{0}', space=vmem, size = 0x1000, scoped, tag = 'input window, operand 0, single buffered']
    #allocation3 [shape = 's32[1]{0}', space=sflag, size = 0x4, scoped, tag = 'scoped memory for tpu_custom_call.1']
    #allocation4 [shape = 's32[1]{0}', space=sflag, size = 0x4, scoped, tag = 'scoped memory for tpu_custom_call.1']
    #allocation5 [shape = 'u8[4096]{0}', space=vmem, size = 0x1000, scoped, tag = 'output window, operand 0, single buffered']
    %6 = vsyncpa [#allocation3], 0
    %7 = vsyncpa [#allocation4], 0
    // Predicated region
    $region2: #{tpu_custom_call.1} parent=1 // pred_check
      _
    $region3: #{tpu_custom_call.1} parent=1 // pred_check_branch
      %9 = sbr.rel (0) target = $region5
    $region4: #{tpu_custom_call.1} parent=1 // pred_region
      %s11 = ssub.s32 128, 128
      %12 = vsyncadd [#allocation3], %s11
      %s14 = sshll.u32 [#allocation2], 4
      %s15 = int_to_ptr.vmem [resolvable:$true] %s14
      %17 = dma.hbm_to_vmem [thread:$0]  %s0, 128, %s15, [#allocation3]
    $region5: #{tpu_custom_call.1} parent=1 // pred_fallthru
      _
    // Predicated region
    $region6: #{tpu_custom_call.1} parent=1 // pred_check
      _
    $region7: #{tpu_custom_call.1} parent=1 // pred_check_branch
      %19 = sbr.rel (0) target = $region9
    $region8: #{tpu_custom_call.1} parent=1 // pred_region
      %20 = dma.done [#allocation3], 128
    $region9: #{tpu_custom_call.1} parent=1 // pred_fallthru
      _
    %v21 = vld [vmem:[#allocation2] sm:$0xff]
    %v22 = vrot.slane %v21, 7
    %23 = vst [vmem:[#allocation5] sm:$0xff] %v22
    // Predicated region
    $region10: #{tpu_custom_call.1} parent=1 // pred_check
      _
    $region11: #{tpu_custom_call.1} parent=1 // pred_check_branch
      %25 = sbr.rel (0) target = $region13
    $region12: #{tpu_custom_call.1} parent=1 // pred_region
      %s27 = ssub.s32 128, 128
      %28 = vsyncadd [#allocation4], %s27
      %s30 = sshll.u32 [#allocation5], 4
      %s31 = int_to_ptr.vmem [resolvable:$true] %s30
      %33 = dma.vmem_to_hbm [thread:$0]  %s31, 128, %s1, [#allocation4]
    $region13: #{tpu_custom_call.1} parent=1 // pred_fallthru
      _
    // Predicated region
    $region14: #{tpu_custom_call.1} parent=1 // pred_check
      _
    $region15: #{tpu_custom_call.1} parent=1 // pred_check_branch
      %35 = sbr.rel (0) target = $region17
    $region16: #{tpu_custom_call.1} parent=1 // pred_region
      %36 = dma.done [#allocation4], 128
    $region17: #{tpu_custom_call.1} parent=1 // pred_fallthru
      _
    %37 = vsyncpa [#allocation3], 1
    %38 = vsyncpa [#allocation4], 1

// kernel: tpu_custom_call.1
$region0: #{tpu_custom_call.1}
  #allocation0 [shape = 'u32[]', space=smem, size = 0x4, offset = 0x4, fixed_abs, tag = 'smem constant byte address 0x4 - core index']
  #allocation1 [shape = 'u32[144,128]{1,0:T(1,128)}', space=vmem, size = 0x12000, scoped, tag = 'internal scratch']
  %s0 = inlined_call_operand.hbm [shape: f32[2,1024,256], index: 0, kind: input, shape index: {}]
  %s1 = inlined_call_operand.hbm [shape: f32[2,1024,256], index: 1, kind: input, shape index: {}]
  %s2 = inlined_call_operand.hbm [shape: f32[2,1024,256], index: 2, kind: input, shape index: {}]
  %s3 = inlined_call_operand.hbm [shape: f32[2,1024,256], index: 3, kind: input, shape index: {}]
  %s4 = inlined_call_operand.vmem [shape: f32[4,3,128], index: 4, kind: input, shape index: {}]
  %s5 = inlined_call_operand.hbm [shape: f32[4,128], index: 5, kind: input, shape index: {}]
  %s6 = inlined_call_operand.hbm [shape: f32[2,1024,128], index: 6, kind: output, shape index: {0}]
  %s7 = inlined_call_operand.hbm [shape: f32[2,1024,128], index: 7, kind: output, shape index: {1}]
  %8 = xla_tuple %s6, %s7
  %s9 = sld [smem:[#allocation0]]
  $region85: #{tpu_custom_call.1} parent=0
    _
  %s11 = ssub.s32 1, %s9
  %s12 = scalar_select 0, %s11, %s9
  $region1: #{tpu_custom_call.1} parent=0
    #allocation2 [shape = 'u8[524288]{0}', space=vmem, size = 0x80000, scoped, tag = 'input window, operand 0']
    #allocation3 [shape = 's32[2]{0}', space=sflag, size = 0x8, scoped, tag = 'scoped memory for tpu_custom_call.1']
    #allocation4 [shape = 's32[2]{0}', space=sflag, size = 0x8, scoped, tag = 'scoped memory for tpu_custom_call.1']
    #allocation5 [shape = 'u8[524288]{0}', space=vmem, size = 0x80000, scoped, tag = 'input window, operand 1']
    #allocation6 [shape = 's32[2]{0}', space=sflag, size = 0x8, scoped, tag = 'scoped memory for tpu_custom_call.1']
    #allocation7 [shape = 'u8[8192]{0}', space=vmem, size = 0x2000, scoped, tag = 'input window, operand 2']
    #allocation8 [shape = 'u8[8192]{0}', space=vmem, size = 0x2000, scoped, tag = 'input window, operand 3']
    #allocation9 [shape = 's32[2]{0}', space=sflag, size = 0x8, scoped, tag = 'scoped memory for tpu_custom_call.1']
    #allocation10 [shape = 'u8[2048]{0}', space=vmem, size = 0x800, scoped, tag = 'input window, operand 5, single buffered']
    #allocation11 [shape = 'u8[524288]{0}', space=vmem, size = 0x80000, scoped, tag = 'output window, operand 0']
    #allocation12 [shape = 'u8[524288]{0}', space=vmem, size = 0x80000, scoped, tag = 'output window, operand 1']
    #allocation13 [shape = 's32[2]{0}', space=sflag, size = 0x8, scoped, tag = 'scoped memory for tpu_custom_call.1']
    %13 = vsyncpa [#allocation3], 0
    %s14 = scalar_lea.sflag [#allocation3], 1
    %15 = vsyncpa %s14, 0
    %16 = vsyncpa [#allocation6], 0
    %s17 = scalar_lea.sflag [#allocation6], 1
    %18 = vsyncpa %s17, 0
    %19 = vsyncpa [#allocation9], 0
    %s20 = scalar_lea.sflag [#allocation9], 1
    %21 = vsyncpa %s20, 0
    %22 = vsyncpa [#allocation4], 0
    %s23 = scalar_lea.sflag [#allocation4], 1
    %24 = vsyncpa %s23, 0
    %25 = vsyncpa [#allocation13], 0
    %s26 = scalar_lea.sflag [#allocation13], 1
    %27 = vsyncpa %s26, 0
    loop: start=0, step=1, limit=6
    $region2: #{tpu_custom_call.1} parent=1 // loop_pre_header
      _
    $region3: #{tpu_custom_call.1} parent=1 // loop_header
      %s29 = sphi 0, %s33
      %p30 = scmp.ge.s32.totalorder %s29, 6
      %s36 = sphi 0, %s55
      %s37 = sphi 0, %s51
      %s38 = sphi 0, %s47
      %s39 = sphi 0, %s36
      %s40 = sphi 0, %s37
      %s41 = sphi 0, %s38
      %s42 = sphi 0, %s39
      %s43 = sphi 0, %s40
      %s44 = sphi 0, %s41
      %s62 = sphi 0, %s64
      %s65 = sphi 0, %s62
      %s66 = sphi 0, %s65
      %s82 = sphi 0, %s66
      %s94 = sphi 0, %s96
      %s97 = sphi 0, %s94
      %s98 = sphi 0, %s97
      %s114 = sphi 0, %s98
      %s132 = sphi 0, %s134
      %s135 = sphi 0, %s132
      %s136 = sphi 0, %s135
      %s152 = sphi 0, %s136
      %s172 = sphi 0, %s174
      %s175 = sphi 0, %s172
      %s176 = sphi 0, %s175
      %s192 = sphi 0, %s176
      %s198 = sphi 0, %s200
      %s201 = sphi 0, %s198
      %s202 = sphi 0, %s201
      %s218 = sphi 0, %s202
      %s224 = sphi 0, %s226
      %s227 = sphi 0, %s224
      %s228 = sphi 0, %s227
      %s244 = sphi 0, %s228
      %s254 = sphi 0, %s256
      %s257 = sphi 0, %s254
      %s258 = sphi 0, %s257
      %s274 = sphi 0, %s258
      %s284 = sphi 0, %s286
      %s287 = sphi 0, %s284
      %s288 = sphi 0, %s287
      %s304 = sphi 0, %s288
    $region4: #{tpu_custom_call.1} parent=1 // loop_header_branch
      %32 = sbr.rel (%p30) target = $region8
    $region5: #{tpu_custom_call.1} parent=1 // loop_body
      %s34 = ssub.s32 %s29, 1
      %s35 = ssub.s32 %s29, 2
      %s45 = sadd.s32 1, %s38
      %p46 = scmp.ge.s32.totalorder %s45, 1
      %s47 = scalar_select %p46, 0, %s45
      %s48 = sadd.s32 1, %s37
      %s49 = scalar_select %p46, %s48, %s37
      %p50 = scmp.ge.s32.totalorder %s49, 2
      %s51 = scalar_select %p50, 0, %s49
      %s52 = sadd.s32 1, %s36
      %s53 = scalar_select %p50, %s52, %s36
      %p54 = scmp.ge.s32.totalorder %s53, 2
      %s55 = scalar_select %p54, 0, %s53
      %s56 = ssub.s32 %s36, %s55
      %s57 = ssub.s32 %s37, %s51
      %s58 = sor.u32 %s56, %s57
      %s59 = ssub.s32 %s38, %s47
      %s60 = sor.u32 %s58, %s59
      %p61 = scmp.eq.s32.totalorder %s60, 0
      %s63 = sadd.s32 %s62, 1
      %s64 = scalar_select %p61, %s62, %s63
      %p67 = pneg %p61
      %p68 = scmp.eq.s32.totalorder %s29, 3
      %p69 = por %p67, %p68
      %p70 = scmp.ne.s32.totalorder %s62, %s65
      %p71 = scmp.eq.s32.totalorder %s29, 0
      %p72 = por %p70, %p71
      %p73 = scmp.ne.s32.totalorder %s62, %s65
      %p74 = scmp.eq.s32.totalorder %s34, 3
      %p75 = por %p73, %p74
      %p76 = scmp.ne.s32.totalorder %s65, %s66
      %p77 = scmp.eq.s32.totalorder %s34, 0
      %p78 = por %p76, %p77
      %p79 = scmp.ne.s32.totalorder %s65, %s66
      %p80 = scmp.eq.s32.totalorder %s35, 3
      %p81 = por %p79, %p80
      %p83 = scmp.ne.s32.totalorder %s66, %s82
      %p84 = scmp.eq.s32.totalorder %s35, 0
      %p85 = por %p83, %p84
      %s86 = sadd.s32 %s38, 1
      %s87 = sadd.s32 %s47, 1
      %s88 = ssub.s32 %s36, %s55
      %s89 = ssub.s32 %s37, %s51
      %s90 = sor.u32 %s88, %s89
      %s91 = ssub.s32 %s86, %s87
      %s92 = sor.u32 %s90, %s91
      %p93 = scmp.eq.s32.totalorder %s92, 0
      %s95 = sadd.s32 %s94, 1
      %s96 = scalar_select %p93, %s94, %s95
      %p99 = pneg %p93
      %p100 = scmp.eq.s32.totalorder %s29, 3
      %p101 = por %p99, %p100
      %p102 = scmp.ne.s32.totalorder %s94, %s97
      %p103 = scmp.eq.s32.totalorder %s29, 0
      %p104 = por %p102, %p103
      %p105 = scmp.ne.s32.totalorder %s94, %s97
      %p106 = scmp.eq.s32.totalorder %s34, 3
      %p107 = por %p105, %p106
      %p108 = scmp.ne.s32.totalorder %s97, %s98
      %p109 = scmp.eq.s32.totalorder %s34, 0
      %p110 = por %p108, %p109
      %p111 = scmp.ne.s32.totalorder %s97, %s98
      %p112 = scmp.eq.s32.totalorder %s35, 3
      %p113 = por %p111, %p112
      %p115 = scmp.ne.s32.totalorder %s98, %s114
      %p116 = scmp.eq.s32.totalorder %s35, 0
      %p117 = por %p115, %p116
      %s118 = smul.u32 %s37, 64
      %s119 = ssub.s32 %s118, 1
      %p120 = scmp.gt.s32.totalorder %s119, 0
      %s121 = scalar_select %p120, %s119, 0
      %s122 = smul.u32 %s51, 64
      %s123 = ssub.s32 %s122, 1
      %p124 = scmp.gt.s32.totalorder %s123, 0
      %s125 = scalar_select %p124, %s123, 0
      %s126 = ssub.s32 %s36, %s55
      %s127 = ssub.s32 %s121, %s125
      %s128 = sor.u32 %s126, %s127
      %s129 = ssub.s32 %s38, %s47
      %s130 = sor.u32 %s128, %s129
      %p131 = scmp.eq.s32.totalorder %s130, 0
      %s133 = sadd.s32 %s132, 1
      %s134 = scalar_select %p131, %s132, %s133
      %p137 = pneg %p131
      %p138 = scmp.eq.s32.totalorder %s29, 3
      %p139 = por %p137, %p138
      %p140 = scmp.ne.s32.totalorder %s132, %s135
      %p141 = scmp.eq.s32.totalorder %s29, 0
      %p142 = por %p140, %p141
      %p143 = scmp.ne.s32.totalorder %s132, %s135
      %p144 = scmp.eq.s32.totalorder %s34, 3
      %p145 = por %p143, %p144
      %p146 = scmp.ne.s32.totalorder %s135, %s136
      %p147 = scmp.eq.s32.totalorder %s34, 0
      %p148 = por %p146, %p147
      %p149 = scmp.ne.s32.totalorder %s135, %s136
      %p150 = scmp.eq.s32.totalorder %s35, 3
      %p151 = por %p149, %p150
      %p153 = scmp.ne.s32.totalorder %s136, %s152
      %p154 = scmp.eq.s32.totalorder %s35, 0
      %p155 = por %p153, %p154
      %s156 = smul.u32 %s37, 64
      %s157 = ssub.s32 %s156, 1
      %p158 = scmp.gt.s32.totalorder %s157, 0
      %s159 = scalar_select %p158, %s157, 0
      %s160 = sadd.s32 %s38, 1
      %s161 = smul.u32 %s51, 64
      %s162 = ssub.s32 %s161, 1
      %p163 = scmp.gt.s32.totalorder %s162, 0
      %s164 = scalar_select %p163, %s162, 0
      %s165 = sadd.s32 %s47, 1
      %s166 = ssub.s32 %s36, %s55
      %s167 = ssub.s32 %s159, %s164
      %s168 = sor.u32 %s166, %s167
      %s169 = ssub.s32 %s160, %s165
      %s170 = sor.u32 %s168, %s169
      %p171 = scmp.eq.s32.totalorder %s170, 0
      %s173 = sadd.s32 %s172, 1
      %s174 = scalar_select %p171, %s172, %s173
      %p177 = pneg %p171
      %p178 = scmp.eq.s32.totalorder %s29, 3
      %p179 = por %p177, %p178
      %p180 = scmp.ne.s32.totalorder %s172, %s175
      %p181 = scmp.eq.s32.totalorder %s29, 0
      %p182 = por %p180, %p181
      %p183 = scmp.ne.s32.totalorder %s172, %s175
      %p184 = scmp.eq.s32.totalorder %s34, 3
      %p185 = por %p183, %p184
      %p186 = scmp.ne.s32.totalorder %s175, %s176
      %p187 = scmp.eq.s32.totalorder %s34, 0
      %p188 = por %p186, %p187
      %p189 = scmp.ne.s32.totalorder %s175, %s176
      %p190 = scmp.eq.s32.totalorder %s35, 3
      %p191 = por %p189, %p190
      %p193 = scmp.ne.s32.totalorder %s176, %s192
      %p194 = scmp.eq.s32.totalorder %s35, 0
      %p195 = por %p193, %p194
      %s196 = ssub.s32 %s38, %s47
      %p197 = scmp.eq.s32.totalorder %s196, 0
      %s199 = sadd.s32 %s198, 1
      %s200 = scalar_select %p197, %s198, %s199
      %p203 = pneg %p197
      %p204 = scmp.eq.s32.totalorder %s29, 3
      %p205 = por %p203, %p204
      %p206 = scmp.ne.s32.totalorder %s198, %s201
      %p207 = scmp.eq.s32.totalorder %s29, 0
      %p208 = por %p206, %p207
      %p209 = scmp.ne.s32.totalorder %s198, %s201
      %p210 = scmp.eq.s32.totalorder %s34, 3
      %p211 = por %p209, %p210
      %p212 = scmp.ne.s32.totalorder %s201, %s202
      %p213 = scmp.eq.s32.totalorder %s34, 0
      %p214 = por %p212, %p213
      %p215 = scmp.ne.s32.totalorder %s201, %s202
      %p216 = scmp.eq.s32.totalorder %s35, 3
      %p217 = por %p215, %p216
      %p219 = scmp.ne.s32.totalorder %s202, %s218
      %p220 = scmp.eq.s32.totalorder %s35, 0
      %p221 = por %p219, %p220
      %s222 = ssub.s32 %s38, %s47
      %p223 = scmp.eq.s32.totalorder %s222, 0
      %s225 = sadd.s32 %s224, 1
      %s226 = scalar_select %p223, %s224, %s225
      %p229 = pneg %p223
      %p230 = scmp.eq.s32.totalorder %s29, 3
      %p231 = por %p229, %p230
      %p232 = scmp.ne.s32.totalorder %s224, %s227
      %p233 = scmp.eq.s32.totalorder %s29, 0
      %p234 = por %p232, %p233
      %p235 = scmp.ne.s32.totalorder %s224, %s227
      %p236 = scmp.eq.s32.totalorder %s34, 3
      %p237 = por %p235, %p236
      %p238 = scmp.ne.s32.totalorder %s227, %s228
      %p239 = scmp.eq.s32.totalorder %s34, 0
      %p240 = por %p238, %p239
      %p241 = scmp.ne.s32.totalorder %s227, %s228
      %p242 = scmp.eq.s32.totalorder %s35, 3
      %p243 = por %p241, %p242
      %p245 = scmp.ne.s32.totalorder %s228, %s244
      %p246 = scmp.eq.s32.totalorder %s35, 0
      %p247 = por %p245, %p246
      %s248 = ssub.s32 %s36, %s55
      %s249 = ssub.s32 %s37, %s51
      %s250 = sor.u32 %s248, %s249
      %s251 = ssub.s32 %s38, %s47
      %s252 = sor.u32 %s250, %s251
      %p253 = scmp.eq.s32.totalorder %s252, 0
      %s255 = sadd.s32 %s254, 1
      %s256 = scalar_select %p253, %s254, %s255
      %p259 = pneg %p253
      %p260 = scmp.eq.s32.totalorder %s29, 3
      %p261 = por %p259, %p260
      %p262 = scmp.ne.s32.totalorder %s254, %s257
      %p263 = scmp.eq.s32.totalorder %s29, 0
      %p264 = por %p262, %p263
      %p265 = scmp.ne.s32.totalorder %s254, %s257
      %p266 = scmp.eq.s32.totalorder %s34, 3
      %p267 = por %p265, %p266
      %p268 = scmp.ne.s32.totalorder %s257, %s258
      %p269 = scmp.eq.s32.totalorder %s34, 0
      %p270 = por %p268, %p269
      %p271 = scmp.ne.s32.totalorder %s257, %s258
      %p272 = scmp.eq.s32.totalorder %s35, 3
      %p273 = por %p271, %p272
      %p275 = scmp.ne.s32.totalorder %s258, %s274
      %p276 = scmp.eq.s32.totalorder %s35, 0
      %p277 = por %p275, %p276
      %s278 = ssub.s32 %s36, %s55
      %s279 = ssub.s32 %s37, %s51
      %s280 = sor.u32 %s278, %s279
      %s281 = ssub.s32 %s38, %s47
      %s282 = sor.u32 %s280, %s281
      %p283 = scmp.eq.s32.totalorder %s282, 0
      %s285 = sadd.s32 %s284, 1
      %s286 = scalar_select %p283, %s284, %s285
      %p289 = pneg %p283
      %p290 = scmp.eq.s32.totalorder %s29, 3
      %p291 = por %p289, %p290
      %p292 = scmp.ne.s32.totalorder %s284, %s287
      %p293 = scmp.eq.s32.totalorder %s29, 0
      %p294 = por %p292, %p293
      %p295 = scmp.ne.s32.totalorder %s284, %s287
      %p296 = scmp.eq.s32.totalorder %s34, 3
      %p297 = por %p295, %p296
      %p298 = scmp.ne.s32.totalorder %s287, %s288
      %p299 = scmp.eq.s32.totalorder %s34, 0
      %p300 = por %p298, %p299
      %p301 = scmp.ne.s32.totalorder %s287, %s288
      %p302 = scmp.eq.s32.totalorder %s35, 3
      %p303 = por %p301, %p302
      %p305 = scmp.ne.s32.totalorder %s288, %s304
      %p306 = scmp.eq.s32.totalorder %s35, 0
      %p307 = por %p305, %p306
      %p308 = scmp.le.s32.totalorder 1, %s29
      %p309 = scmp.lt.s32.totalorder %s29, 5
      %p310 = pnand %p308, %p309
      %p311 = pneg %p310
      // Predicated region
      $region9: #{tpu_custom_call.1} parent=5 // pred_check
        _
      $region10: #{tpu_custom_call.1} parent=5 // pred_check_branch
        %313 = sbr.rel (%p310) target = $region12
      $region11: #{tpu_custom_call.1} parent=5 // pred_region
        %s314 = ssub.s32 %s29, 1
        // Predicated region
        $region13: #{tpu_custom_call.1} parent=11 // pred_check
          %p315 = pneg %p214
        $region14: #{tpu_custom_call.1} parent=11 // pred_check_branch
          %317 = sbr.rel (%p315) target = $region16
        $region15: #{tpu_custom_call.1} parent=11 // pred_region
          %p318 = scmp.lt.s32.totalorder %s41, 0
          %s319 = scalar_select %p318, %s41, 0
          %s320 = smul.addr %s319, 4
          %s321 = scalar_lea.vmem %s4, %s320
        $region16: #{tpu_custom_call.1} parent=11 // pred_fallthru
          _
        // Predicated region
        $region17: #{tpu_custom_call.1} parent=11 // pred_check
          %p322 = pneg %p240
        $region18: #{tpu_custom_call.1} parent=11 // pred_check_branch
          %324 = sbr.rel (%p322) target = $region20
        $region19: #{tpu_custom_call.1} parent=11 // pred_region
          %s326 = ssub.s32 64, 64
          %327 = vsyncadd [#allocation9], %s326
          %s328 = smul.addr %s41, 64
          %s329 = scalar_lea.hbm %s5, %s328
          %s331 = sshll.u32 [#allocation10], 4
          %s332 = int_to_ptr.vmem [resolvable:$true] %s331
          %334 = dma.hbm_to_vmem [thread:$0]  %s329, 64, %s332, [#allocation9]
        $region20: #{tpu_custom_call.1} parent=11 // pred_fallthru
          _
      $region12: #{tpu_custom_call.1} parent=5 // pred_fallthru
        _
      %p335 = scmp.lt.s32.totalorder %s29, 4
      // Predicated region
      $region21: #{tpu_custom_call.1} parent=5 // pred_check
        %p336 = pneg %p335
      $region22: #{tpu_custom_call.1} parent=5 // pred_check_branch
        %338 = sbr.rel (%p336) target = $region24
      $region23: #{tpu_custom_call.1} parent=5 // pred_region
        // Predicated region
        $region25: #{tpu_custom_call.1} parent=23 // pred_check
          %p339 = pneg %p72
        $region26: #{tpu_custom_call.1} parent=23 // pred_check_branch
          %341 = sbr.rel (%p339) target = $region28
        $region27: #{tpu_custom_call.1} parent=23 // pred_region
          %s342 = sand.u32 %s62, 1
          %s343 = scalar_lea.sflag [#allocation3], %s342
          %s344 = sand.u32 %s62, 1
          %s345 = smul.addr %s344, 512
          %s346 = scalar_lea.vmem [#allocation2], %s345
          %s347 = smul.u32 64, %s37
          %s349 = ssub.s32 8192, 8192
          %350 = vsyncadd %s343, %s349
          %s351 = smul.addr %s347, 2
          %s352 = sadd.s32 %s38, %s351
          %s353 = smul.addr %s36, 256
          %s354 = sadd.s32 %s352, %s353
          %s355 = smul.addr %s354, 128
          %s356 = scalar_lea.hbm %s0, %s355
          %s357 = sshll.u32 %s346, 4
          %s358 = int_to_ptr.vmem [resolvable:$true] %s357
          %363 = dma.hbm_to_vmem [thread:$0]  %s356, 8192, %s358, %s343, 256, 128, 8
        $region28: #{tpu_custom_call.1} parent=23 // pred_fallthru
          _
        // Predicated region
        $region29: #{tpu_custom_call.1} parent=23 // pred_check
          %p364 = pneg %p104
        $region30: #{tpu_custom_call.1} parent=23 // pred_check_branch
          %366 = sbr.rel (%p364) target = $region32
        $region31: #{tpu_custom_call.1} parent=23 // pred_region
          %s367 = sand.u32 %s29, 1
          %s368 = scalar_lea.sflag [#allocation6], %s367
          %s369 = sand.u32 %s94, 1
          %s370 = smul.addr %s369, 512
          %s371 = scalar_lea.vmem [#allocation5], %s370
          %s372 = sadd.s32 %s38, 1
          %s373 = smul.u32 64, %s37
          %s375 = ssub.s32 8192, 8192
          %376 = vsyncadd %s368, %s375
          %s377 = smul.addr %s373, 2
          %s378 = sadd.s32 %s372, %s377
          %s379 = smul.addr %s36, 256
          %s380 = sadd.s32 %s378, %s379
          %s381 = smul.addr %s380, 128
          %s382 = scalar_lea.hbm %s1, %s381
          %s383 = sshll.u32 %s371, 4
          %s384 = int_to_ptr.vmem [resolvable:$true] %s383
          %389 = dma.hbm_to_vmem [thread:$0]  %s382, 8192, %s384, %s368, 256, 128, 8
        $region32: #{tpu_custom_call.1} parent=23 // pred_fallthru
          _
        // Predicated region
        $region33: #{tpu_custom_call.1} parent=23 // pred_check
          %p390 = pneg %p142
        $region34: #{tpu_custom_call.1} parent=23 // pred_check_branch
          %392 = sbr.rel (%p390) target = $region36
        $region35: #{tpu_custom_call.1} parent=23 // pred_region
          %s393 = sand.u32 %s29, 1
          %s394 = scalar_lea.sflag [#allocation6], %s393
          %s395 = sand.u32 %s132, 1
          %s396 = smul.addr %s395, 8
          %s397 = scalar_lea.vmem [#allocation7], %s396
          %s398 = smul.u32 %s37, 64
          %s399 = ssub.s32 %s398, 1
          %p400 = scmp.gt.s32.totalorder %s399, 0
          %s401 = scalar_select %p400, %s399, 0
          %s403 = ssub.s32 128, 128
          %404 = vsyncadd %s394, %s403
          %s405 = smul.addr %s401, 2
          %s406 = sadd.s32 %s38, %s405
          %s407 = smul.addr %s36, 256
          %s408 = sadd.s32 %s406, %s407
          %s409 = smul.addr %s408, 128
          %s410 = scalar_lea.hbm %s2, %s409
          %s412 = sshll.u32 %s397, 4
          %s413 = int_to_ptr.vmem [resolvable:$true] %s412
          %415 = dma.hbm_to_vmem [thread:$0]  %s410, 128, %s413, %s394
        $region36: #{tpu_custom_call.1} parent=23 // pred_fallthru
          _
        // Predicated region
        $region37: #{tpu_custom_call.1} parent=23 // pred_check
          %p416 = pneg %p182
        $region38: #{tpu_custom_call.1} parent=23 // pred_check_branch
          %418 = sbr.rel (%p416) target = $region40
        $region39: #{tpu_custom_call.1} parent=23 // pred_region
          %s419 = sand.u32 %s29, 1
          %s420 = scalar_lea.sflag [#allocation9], %s419
          %s421 = sand.u32 %s172, 1
          %s422 = smul.addr %s421, 8
          %s423 = scalar_lea.vmem [#allocation8], %s422
          %s424 = smul.u32 %s37, 64
          %s425 = ssub.s32 %s424, 1
          %p426 = scmp.gt.s32.totalorder %s425, 0
          %s427 = scalar_select %p426, %s425, 0
          %s428 = sadd.s32 %s38, 1
          %s430 = ssub.s32 128, 128
          %431 = vsyncadd %s420, %s430
          %s432 = smul.addr %s427, 2
          %s433 = sadd.s32 %s428, %s432
          %s434 = smul.addr %s36, 256
          %s435 = sadd.s32 %s433, %s434
          %s436 = smul.addr %s435, 128
          %s437 = scalar_lea.hbm %s3, %s436
          %s439 = sshll.u32 %s423, 4
          %s440 = int_to_ptr.vmem [resolvable:$true] %s439
          %442 = dma.hbm_to_vmem [thread:$0]  %s437, 128, %s440, %s420
        $region40: #{tpu_custom_call.1} parent=23 // pred_fallthru
          _
      $region24: #{tpu_custom_call.1} parent=5 // pred_fallthru
        _
      %p443 = scmp.le.s32.totalorder 1, %s29
      %p444 = scmp.lt.s32.totalorder %s29, 5
      %p445 = pnand %p443, %p444
      %p446 = pneg %p445
      // Predicated region
      $region41: #{tpu_custom_call.1} parent=5 // pred_check
        _
      $region42: #{tpu_custom_call.1} parent=5 // pred_check_branch
        %448 = sbr.rel (%p445) target = $region44
      $region43: #{tpu_custom_call.1} parent=5 // pred_region
        %s449 = ssub.s32 %s29, 1
        %s450 = sand.u32 %s65, 1
        %s451 = scalar_lea.sflag [#allocation3], %s450
        %s452 = sand.u32 %s65, 1
        %s453 = smul.addr %s452, 512
        %s454 = scalar_lea.vmem [#allocation2], %s453
        // Predicated region
        $region45: #{tpu_custom_call.1} parent=43 // pred_check
          %p455 = pneg %p78
        $region46: #{tpu_custom_call.1} parent=43 // pred_check_branch
          %457 = sbr.rel (%p455) target = $region48
        $region47: #{tpu_custom_call.1} parent=43 // pred_region
          %458 = dma.done %s451, 8192
        $region48: #{tpu_custom_call.1} parent=43 // pred_fallthru
          _
        %s459 = sand.u32 %s34, 1
        %s460 = scalar_lea.sflag [#allocation6], %s459
        %s461 = sand.u32 %s97, 1
        %s462 = smul.addr %s461, 512
        %s463 = scalar_lea.vmem [#allocation5], %s462
        // Predicated region
        $region49: #{tpu_custom_call.1} parent=43 // pred_check
          %p464 = pneg %p110
        $region50: #{tpu_custom_call.1} parent=43 // pred_check_branch
          %466 = sbr.rel (%p464) target = $region52
        $region51: #{tpu_custom_call.1} parent=43 // pred_region
          %467 = dma.done %s460, 8192
        $region52: #{tpu_custom_call.1} parent=43 // pred_fallthru
          _
        %s468 = sand.u32 %s34, 1
        %s469 = scalar_lea.sflag [#allocation6], %s468
        %s470 = sand.u32 %s135, 1
        %s471 = smul.addr %s470, 8
        %s472 = scalar_lea.vmem [#allocation7], %s471
        // Predicated region
        $region53: #{tpu_custom_call.1} parent=43 // pred_check
          %p473 = pneg %p148
        $region54: #{tpu_custom_call.1} parent=43 // pred_check_branch
          %475 = sbr.rel (%p473) target = $region56
        $region55: #{tpu_custom_call.1} parent=43 // pred_region
          %476 = dma.done %s469, 128
        $region56: #{tpu_custom_call.1} parent=43 // pred_fallthru
          _
        %s477 = sand.u32 %s34, 1
        %s478 = scalar_lea.sflag [#allocation9], %s477
        %s479 = sand.u32 %s175, 1
        %s480 = smul.addr %s479, 8
        %s481 = scalar_lea.vmem [#allocation8], %s480
        // Predicated region
        $region57: #{tpu_custom_call.1} parent=43 // pred_check
          %p482 = pneg %p188
        $region58: #{tpu_custom_call.1} parent=43 // pred_check_branch
          %484 = sbr.rel (%p482) target = $region60
        $region59: #{tpu_custom_call.1} parent=43 // pred_region
          %485 = dma.done %s478, 128
        $region60: #{tpu_custom_call.1} parent=43 // pred_fallthru
          _
        // Predicated region
        $region61: #{tpu_custom_call.1} parent=43 // pred_check
          %p486 = pneg %p240
        $region62: #{tpu_custom_call.1} parent=43 // pred_check_branch
          %488 = sbr.rel (%p486) target = $region64
        $region63: #{tpu_custom_call.1} parent=43 // pred_region
          %489 = dma.done [#allocation9], 64
        $region64: #{tpu_custom_call.1} parent=43 // pred_fallthru
          _
        %s490 = sand.u32 %s65, 1
        %s491 = scalar_lea.sflag [#allocation3], %s490
        %s492 = sand.u32 %s65, 1
        %s493 = smul.addr %s492, 512
        %s494 = scalar_lea.vmem [#allocation2], %s493
        %p495 = pneg %p78
        %p496 = pneg %p75
        %s497 = sand.u32 %s34, 1
        %s498 = scalar_lea.sflag [#allocation6], %s497
        %s499 = sand.u32 %s97, 1
        %s500 = smul.addr %s499, 512
        %s501 = scalar_lea.vmem [#allocation5], %s500
        %p502 = pneg %p110
        %p503 = pneg %p107
        %s504 = sand.u32 %s34, 1
        %s505 = scalar_lea.sflag [#allocation6], %s504
        %s506 = sand.u32 %s135, 1
        %s507 = smul.addr %s506, 8
        %s508 = scalar_lea.vmem [#allocation7], %s507
        %p509 = pneg %p148
        %p510 = pneg %p145
        %s511 = sand.u32 %s34, 1
        %s512 = scalar_lea.sflag [#allocation9], %s511
        %s513 = sand.u32 %s175, 1
        %s514 = smul.addr %s513, 8
        %s515 = scalar_lea.vmem [#allocation8], %s514
        %p516 = pneg %p188
        %p517 = pneg %p185
        %p518 = scmp.lt.s32.totalorder %s41, 0
        %s519 = scalar_select %p518, %s41, 0
        %s520 = smul.addr %s519, 4
        %s521 = scalar_lea.vmem %s4, %s520
        %p522 = pneg %p214
        %p523 = pneg %p211
        %p524 = pneg %p240
        %p525 = pneg %p237
        %p526 = pneg %p270
        %p527 = pneg %p267
        %s528 = sand.u32 %s257, 1
        %s529 = scalar_lea.sflag [#allocation4], %s528
        %s530 = sand.u32 %s257, 1
        %s531 = smul.addr %s530, 512
        %s532 = scalar_lea.vmem [#allocation11], %s531
        %p533 = pneg %p300
        %p534 = pneg %p297
        %s535 = sand.u32 %s287, 1
        %s536 = scalar_lea.sflag [#allocation13], %s535
        %s537 = sand.u32 %s287, 1
        %s538 = smul.addr %s537, 512
        %s539 = scalar_lea.vmem [#allocation12], %s538
        %s540 = smul.u32 64, %s40
        %s541 = sadd.s32 %s41, 1
        %s542 = smul.u32 64, %s40
        %s543 = smul.u32 %s40, 64
        %s544 = ssub.s32 %s543, 1
        %p545 = scmp.gt.s32.totalorder %s544, 0
        %s546 = scalar_select %p545, %s544, 0
        %s547 = smul.u32 %s40, 64
        %s548 = ssub.s32 %s547, 1
        %p549 = scmp.gt.s32.totalorder %s548, 0
        %s550 = scalar_select %p549, %s548, 0
        %s551 = sadd.s32 %s41, 1
        %p552 = scmp.lt.s32.totalorder %s41, 0
        %s553 = scalar_select %p552, %s41, 0
        %s554 = smul.addr %s553, 4
        %s555 = scalar_lea.vmem %s4, %s554
        %s556 = smul.u32 64, %s40
        %s557 = smul.u32 64, %s40
        %p558 = scmp.gt.s32.totalorder %s40, 0
        %s559 = scalar_select %p558, 1, 0
        %s560 = scvt.s32.f32 %s559
        %v561 = vld [vmem:[%s454] sm:$0xff]
        %v562 = vld [vmem:[%s454 + $0x8] sm:$0xff]
        %v563 = vld [vmem:[%s454 + $0x10] sm:$0xff]
        %v564 = vld [vmem:[%s454 + $0x18] sm:$0xff]
        %v565 = vld [vmem:[%s454 + $0x20] sm:$0xff]
        %v566 = vld [vmem:[%s454 + $0x28] sm:$0xff]
        %v567 = vld [vmem:[%s454 + $0x30] sm:$0xff]
        %v568 = vld [vmem:[%s454 + $0x38] sm:$0xff]
        %v569 = vld [vmem:[%s454 + $0x40] sm:$0xff]
        %v570 = vld [vmem:[%s454 + $0x48] sm:$0xff]
        %v571 = vld [vmem:[%s454 + $0x50] sm:$0xff]
        %v572 = vld [vmem:[%s454 + $0x58] sm:$0xff]
        %v573 = vld [vmem:[%s454 + $0x60] sm:$0xff]
        %v574 = vld [vmem:[%s454 + $0x68] sm:$0xff]
        %v575 = vld [vmem:[%s454 + $0x70] sm:$0xff]
        %v576 = vld [vmem:[%s454 + $0x78] sm:$0xff]
        %v577 = vld [vmem:[%s454 + $0x80] sm:$0xff]
        %v578 = vld [vmem:[%s454 + $0x88] sm:$0xff]
        %v579 = vld [vmem:[%s454 + $0x90] sm:$0xff]
        %v580 = vld [vmem:[%s454 + $0x98] sm:$0xff]
        %v581 = vld [vmem:[%s454 + $0xa0] sm:$0xff]
        %v582 = vld [vmem:[%s454 + $0xa8] sm:$0xff]
        %v583 = vld [vmem:[%s454 + $0xb0] sm:$0xff]
        %v584 = vld [vmem:[%s454 + $0xb8] sm:$0xff]
        %v585 = vld [vmem:[%s454 + $0xc0] sm:$0xff]
        %v586 = vld [vmem:[%s454 + $0xc8] sm:$0xff]
        %v587 = vld [vmem:[%s454 + $0xd0] sm:$0xff]
        %v588 = vld [vmem:[%s454 + $0xd8] sm:$0xff]
        %v589 = vld [vmem:[%s454 + $0xe0] sm:$0xff]
        %v590 = vld [vmem:[%s454 + $0xe8] sm:$0xff]
        %v591 = vld [vmem:[%s454 + $0xf0] sm:$0xff]
        %v592 = vld [vmem:[%s454 + $0xf8] sm:$0xff]
        %v593 = vld [vmem:[%s454 + $0x100] sm:$0xff]
        %v594 = vld [vmem:[%s454 + $0x108] sm:$0xff]
        %v595 = vld [vmem:[%s454 + $0x110] sm:$0xff]
        %v596 = vld [vmem:[%s454 + $0x118] sm:$0xff]
        %v597 = vld [vmem:[%s454 + $0x120] sm:$0xff]
        %v598 = vld [vmem:[%s454 + $0x128] sm:$0xff]
        %v599 = vld [vmem:[%s454 + $0x130] sm:$0xff]
        %v600 = vld [vmem:[%s454 + $0x138] sm:$0xff]
        %v601 = vld [vmem:[%s454 + $0x140] sm:$0xff]
        %v602 = vld [vmem:[%s454 + $0x148] sm:$0xff]
        %v603 = vld [vmem:[%s454 + $0x150] sm:$0xff]
        %v604 = vld [vmem:[%s454 + $0x158] sm:$0xff]
        %v605 = vld [vmem:[%s454 + $0x160] sm:$0xff]
        %v606 = vld [vmem:[%s454 + $0x168] sm:$0xff]
        %v607 = vld [vmem:[%s454 + $0x170] sm:$0xff]
        %v608 = vld [vmem:[%s454 + $0x178] sm:$0xff]
        %v609 = vld [vmem:[%s454 + $0x180] sm:$0xff]
        %v610 = vld [vmem:[%s454 + $0x188] sm:$0xff]
        %v611 = vld [vmem:[%s454 + $0x190] sm:$0xff]
        %v612 = vld [vmem:[%s454 + $0x198] sm:$0xff]
        %v613 = vld [vmem:[%s454 + $0x1a0] sm:$0xff]
        %v614 = vld [vmem:[%s454 + $0x1a8] sm:$0xff]
        %v615 = vld [vmem:[%s454 + $0x1b0] sm:$0xff]
        %v616 = vld [vmem:[%s454 + $0x1b8] sm:$0xff]
        %v617 = vld [vmem:[%s454 + $0x1c0] sm:$0xff]
        %v618 = vld [vmem:[%s454 + $0x1c8] sm:$0xff]
        %v619 = vld [vmem:[%s454 + $0x1d0] sm:$0xff]
        %v620 = vld [vmem:[%s454 + $0x1d8] sm:$0xff]
        %v621 = vld [vmem:[%s454 + $0x1e0] sm:$0xff]
        %v622 = vld [vmem:[%s454 + $0x1e8] sm:$0xff]
        %v623 = vld [vmem:[%s454 + $0x1f0] sm:$0xff]
        %v624 = vld [vmem:[%s454 + $0x1f8] sm:$0xff]
        %v625 = vld [vmem:[%s463] sm:$0xff]
        %v626 = vld [vmem:[%s463 + $0x8] sm:$0xff]
        %v627 = vld [vmem:[%s463 + $0x10] sm:$0xff]
        %v628 = vld [vmem:[%s463 + $0x18] sm:$0xff]
        %v629 = vld [vmem:[%s463 + $0x20] sm:$0xff]
        %v630 = vld [vmem:[%s463 + $0x28] sm:$0xff]
        %v631 = vld [vmem:[%s463 + $0x30] sm:$0xff]
        %v632 = vld [vmem:[%s463 + $0x38] sm:$0xff]
        %v633 = vld [vmem:[%s463 + $0x40] sm:$0xff]
        %v634 = vld [vmem:[%s463 + $0x48] sm:$0xff]
        %v635 = vld [vmem:[%s463 + $0x50] sm:$0xff]
        %v636 = vld [vmem:[%s463 + $0x58] sm:$0xff]
        %v637 = vld [vmem:[%s463 + $0x60] sm:$0xff]
        %v638 = vld [vmem:[%s463 + $0x68] sm:$0xff]
        %v639 = vld [vmem:[%s463 + $0x70] sm:$0xff]
        %v640 = vld [vmem:[%s463 + $0x78] sm:$0xff]
        %v641 = vld [vmem:[%s463 + $0x80] sm:$0xff]
        %v642 = vld [vmem:[%s463 + $0x88] sm:$0xff]
        %v643 = vld [vmem:[%s463 + $0x90] sm:$0xff]
        %v644 = vld [vmem:[%s463 + $0x98] sm:$0xff]
        %v645 = vld [vmem:[%s463 + $0xa0] sm:$0xff]
        %v646 = vld [vmem:[%s463 + $0xa8] sm:$0xff]
        %v647 = vld [vmem:[%s463 + $0xb0] sm:$0xff]
        %v648 = vld [vmem:[%s463 + $0xb8] sm:$0xff]
        %v649 = vld [vmem:[%s463 + $0xc0] sm:$0xff]
        %v650 = vld [vmem:[%s463 + $0xc8] sm:$0xff]
        %v651 = vld [vmem:[%s463 + $0xd0] sm:$0xff]
        %v652 = vld [vmem:[%s463 + $0xd8] sm:$0xff]
        %v653 = vld [vmem:[%s463 + $0xe0] sm:$0xff]
        %v654 = vld [vmem:[%s463 + $0xe8] sm:$0xff]
        %v655 = vld [vmem:[%s463 + $0xf0] sm:$0xff]
        %v656 = vld [vmem:[%s463 + $0xf8] sm:$0xff]
        %v657 = vld [vmem:[%s463 + $0x100] sm:$0xff]
        %v658 = vld [vmem:[%s463 + $0x108] sm:$0xff]
        %v659 = vld [vmem:[%s463 + $0x110] sm:$0xff]
        %v660 = vld [vmem:[%s463 + $0x118] sm:$0xff]
        %v661 = vld [vmem:[%s463 + $0x120] sm:$0xff]
        %v662 = vld [vmem:[%s463 + $0x128] sm:$0xff]
        %v663 = vld [vmem:[%s463 + $0x130] sm:$0xff]
        %v664 = vld [vmem:[%s463 + $0x138] sm:$0xff]
        %v665 = vld [vmem:[%s463 + $0x140] sm:$0xff]
        %v666 = vld [vmem:[%s463 + $0x148] sm:$0xff]
        %v667 = vld [vmem:[%s463 + $0x150] sm:$0xff]
        %v668 = vld [vmem:[%s463 + $0x158] sm:$0xff]
        %v669 = vld [vmem:[%s463 + $0x160] sm:$0xff]
        %v670 = vld [vmem:[%s463 + $0x168] sm:$0xff]
        %v671 = vld [vmem:[%s463 + $0x170] sm:$0xff]
        %v672 = vld [vmem:[%s463 + $0x178] sm:$0xff]
        %v673 = vld [vmem:[%s463 + $0x180] sm:$0xff]
        %v674 = vld [vmem:[%s463 + $0x188] sm:$0xff]
        %v675 = vld [vmem:[%s463 + $0x190] sm:$0xff]
        %v676 = vld [vmem:[%s463 + $0x198] sm:$0xff]
        %v677 = vld [vmem:[%s463 + $0x1a0] sm:$0xff]
        %v678 = vld [vmem:[%s463 + $0x1a8] sm:$0xff]
        %v679 = vld [vmem:[%s463 + $0x1b0] sm:$0xff]
        %v680 = vld [vmem:[%s463 + $0x1b8] sm:$0xff]
        %v681 = vld [vmem:[%s463 + $0x1c0] sm:$0xff]
        %v682 = vld [vmem:[%s463 + $0x1c8] sm:$0xff]
        %v683 = vld [vmem:[%s463 + $0x1d0] sm:$0xff]
        %v684 = vld [vmem:[%s463 + $0x1d8] sm:$0xff]
        %v685 = vld [vmem:[%s463 + $0x1e0] sm:$0xff]
        %v686 = vld [vmem:[%s463 + $0x1e8] sm:$0xff]
        %v687 = vld [vmem:[%s463 + $0x1f0] sm:$0xff]
        %v688 = vld [vmem:[%s463 + $0x1f8] sm:$0xff]
        %v689 = vld [vmem:[%s472 + $0x6] sm:$0x3]
        %v690 = vstv %s560
        %v691 = vmul.f32 %v689, %v690
        %v692 = vld [vmem:[%s481 + $0x6] sm:$0x3]
        %v693 = vmul.f32 %v692, %v690
        %v694 = vlaneseq
        %v695 = vshrl.u32 %v694, 7
        %v696 = vadd.s32 %v695, 8
        %v697 = vadd.s32 %v695, 16
        %v698 = vadd.s32 %v695, 24
        %v699 = vadd.s32 %v695, 32
        %v700 = vadd.s32 %v695, 40
        %v701 = vadd.s32 %v695, 48
        %v702 = vadd.s32 %v695, 56
        %v703 = vadd.s32 %v695, 64
        %v704 = vadd.s32 %v695, 72
        %v705 = vadd.s32 %v695, 80
        %v706 = vadd.s32 %v695, 88
        %v707 = vadd.s32 %v695, 96
        %v708 = vadd.s32 %v695, 104
        %v709 = vadd.s32 %v695, 112
        %v710 = vadd.s32 %v695, 120
        %v711 = vadd.s32 %v695, 128
        %v712 = vadd.s32 %v695, 136
        %v713 = vadd.s32 %v695, 144
        %v714 = vadd.s32 %v695, 152
        %v715 = vadd.s32 %v695, 160
        %v716 = vadd.s32 %v695, 168
        %v717 = vadd.s32 %v695, 176
        %v718 = vadd.s32 %v695, 184
        %v719 = vadd.s32 %v695, 192
        %v720 = vadd.s32 %v695, 200
        %v721 = vadd.s32 %v695, 208
        %v722 = vadd.s32 %v695, 216
        %v723 = vadd.s32 %v695, 224
        %v724 = vadd.s32 %v695, 232
        %v725 = vadd.s32 %v695, 240
        %v726 = vadd.s32 %v695, 248
        %v727 = vadd.s32 %v695, 256
        %v728 = vadd.s32 %v695, 264
        %v729 = vadd.s32 %v695, 272
        %v730 = vadd.s32 %v695, 280
        %v731 = vadd.s32 %v695, 288
        %v732 = vadd.s32 %v695, 296
        %v733 = vadd.s32 %v695, 304
        %v734 = vadd.s32 %v695, 312
        %v735 = vadd.s32 %v695, 320
        %v736 = vadd.s32 %v695, 328
        %v737 = vadd.s32 %v695, 336
        %v738 = vadd.s32 %v695, 344
        %v739 = vadd.s32 %v695, 352
        %v740 = vadd.s32 %v695, 360
        %v741 = vadd.s32 %v695, 368
        %v742 = vadd.s32 %v695, 376
        %v743 = vadd.s32 %v695, 384
        %v744 = vadd.s32 %v695, 392
        %v745 = vadd.s32 %v695, 400
        %v746 = vadd.s32 %v695, 408
        %v747 = vadd.s32 %v695, 416
        %v748 = vadd.s32 %v695, 424
        %v749 = vadd.s32 %v695, 432
        %v750 = vadd.s32 %v695, 440
        %v751 = vadd.s32 %v695, 448
        %v752 = vadd.s32 %v695, 456
        %v753 = vadd.s32 %v695, 464
        %v754 = vadd.s32 %v695, 472
        %v755 = vadd.s32 %v695, 480
        %v756 = vadd.s32 %v695, 488
        %v757 = vadd.s32 %v695, 496
        %v758 = vadd.s32 %v695, 504
        %vm759 = vcmp.ge.s32.totalorder %v695, 1
        %vm760 = vcmp.ge.s32.totalorder %v696, 1
        %vm761 = vcmp.ge.s32.totalorder %v697, 1
        %vm762 = vcmp.ge.s32.totalorder %v698, 1
        %vm763 = vcmp.ge.s32.totalorder %v699, 1
        %vm764 = vcmp.ge.s32.totalorder %v700, 1
        %vm765 = vcmp.ge.s32.totalorder %v701, 1
        %vm766 = vcmp.ge.s32.totalorder %v702, 1
        %vm767 = vcmp.ge.s32.totalorder %v703, 1
        %vm768 = vcmp.ge.s32.totalorder %v704, 1
        %vm769 = vcmp.ge.s32.totalorder %v705, 1
        %vm770 = vcmp.ge.s32.totalorder %v706, 1
        %vm771 = vcmp.ge.s32.totalorder %v707, 1
        %vm772 = vcmp.ge.s32.totalorder %v708, 1
        %vm773 = vcmp.ge.s32.totalorder %v709, 1
        %vm774 = vcmp.ge.s32.totalorder %v710, 1
        %vm775 = vcmp.ge.s32.totalorder %v711, 1
        %vm776 = vcmp.ge.s32.totalorder %v712, 1
        %vm777 = vcmp.ge.s32.totalorder %v713, 1
        %vm778 = vcmp.ge.s32.totalorder %v714, 1
        %vm779 = vcmp.ge.s32.totalorder %v715, 1
        %vm780 = vcmp.ge.s32.totalorder %v716, 1
        %vm781 = vcmp.ge.s32.totalorder %v717, 1
        %vm782 = vcmp.ge.s32.totalorder %v718, 1
        %vm783 = vcmp.ge.s32.totalorder %v719, 1
        %vm784 = vcmp.ge.s32.totalorder %v720, 1
        %vm785 = vcmp.ge.s32.totalorder %v721, 1
        %vm786 = vcmp.ge.s32.totalorder %v722, 1
        %vm787 = vcmp.ge.s32.totalorder %v723, 1
        %vm788 = vcmp.ge.s32.totalorder %v724, 1
        %vm789 = vcmp.ge.s32.totalorder %v725, 1
        %vm790 = vcmp.ge.s32.totalorder %v726, 1
        %vm791 = vcmp.ge.s32.totalorder %v727, 1
        %vm792 = vcmp.ge.s32.totalorder %v728, 1
        %vm793 = vcmp.ge.s32.totalorder %v729, 1
        %vm794 = vcmp.ge.s32.totalorder %v730, 1
        %vm795 = vcmp.ge.s32.totalorder %v731, 1
        %vm796 = vcmp.ge.s32.totalorder %v732, 1
        %vm797 = vcmp.ge.s32.totalorder %v733, 1
        %vm798 = vcmp.ge.s32.totalorder %v734, 1
        %vm799 = vcmp.ge.s32.totalorder %v735, 1
        %vm800 = vcmp.ge.s32.totalorder %v736, 1
        %vm801 = vcmp.ge.s32.totalorder %v737, 1
        %vm802 = vcmp.ge.s32.totalorder %v738, 1
        %vm803 = vcmp.ge.s32.totalorder %v739, 1
        %vm804 = vcmp.ge.s32.totalorder %v740, 1
        %vm805 = vcmp.ge.s32.totalorder %v741, 1
        %vm806 = vcmp.ge.s32.totalorder %v742, 1
        %vm807 = vcmp.ge.s32.totalorder %v743, 1
        %vm808 = vcmp.ge.s32.totalorder %v744, 1
        %vm809 = vcmp.ge.s32.totalorder %v745, 1
        %vm810 = vcmp.ge.s32.totalorder %v746, 1
        %vm811 = vcmp.ge.s32.totalorder %v747, 1
        %vm812 = vcmp.ge.s32.totalorder %v748, 1
        %vm813 = vcmp.ge.s32.totalorder %v749, 1
        %vm814 = vcmp.ge.s32.totalorder %v750, 1
        %vm815 = vcmp.ge.s32.totalorder %v751, 1
        %vm816 = vcmp.ge.s32.totalorder %v752, 1
        %vm817 = vcmp.ge.s32.totalorder %v753, 1
        %vm818 = vcmp.ge.s32.totalorder %v754, 1
        %vm819 = vcmp.ge.s32.totalorder %v755, 1
        %vm820 = vcmp.ge.s32.totalorder %v756, 1
        %vm821 = vcmp.ge.s32.totalorder %v757, 1
        %vm822 = vcmp.ge.s32.totalorder %v758, 1
        %v824 = vrot.slane %v624, 7
        %vm889 = vcmask 1040384
        %v890 = vrot.slane %v561, 7
        %v891 = vrot.slane %v562, 7
        %v892 = vsel %vm889, %v890, %v891
        %v893 = vrot.slane %v563, 7
        %v894 = vsel %vm889, %v891, %v893
        %v895 = vrot.slane %v564, 7
        %v896 = vsel %vm889, %v893, %v895
        %v897 = vrot.slane %v565, 7
        %v898 = vsel %vm889, %v895, %v897
        %v899 = vrot.slane %v566, 7
        %v900 = vsel %vm889, %v897, %v899
        %v901 = vrot.slane %v567, 7
        %v902 = vsel %vm889, %v899, %v901
        %v903 = vrot.slane %v568, 7
        %v904 = vsel %vm889, %v901, %v903
        %v905 = vrot.slane %v569, 7
        %v906 = vsel %vm889, %v903, %v905
        %v907 = vrot.slane %v570, 7
        %v908 = vsel %vm889, %v905, %v907
        %v909 = vrot.slane %v571, 7
        %v910 = vsel %vm889, %v907, %v909
        %v911 = vrot.slane %v572, 7
        %v912 = vsel %vm889, %v909, %v911
        %v913 = vrot.slane %v573, 7
        %v914 = vsel %vm889, %v911, %v913
        %v915 = vrot.slane %v574, 7
        %v916 = vsel %vm889, %v913, %v915
        %v917 = vrot.slane %v575, 7
        %v918 = vsel %vm889, %v915, %v917
        %v919 = vrot.slane %v576, 7
        %v920 = vsel %vm889, %v917, %v919
        %v921 = vrot.slane %v577, 7
        %v922 = vsel %vm889, %v919, %v921
        %v923 = vrot.slane %v578, 7
        %v924 = vsel %vm889, %v921, %v923
        %v925 = vrot.slane %v579, 7
        %v926 = vsel %vm889, %v923, %v925
        %v927 = vrot.slane %v580, 7
        %v928 = vsel %vm889, %v925, %v927
        %v929 = vrot.slane %v581, 7
        %v930 = vsel %vm889, %v927, %v929
        %v931 = vrot.slane %v582, 7
        %v932 = vsel %vm889, %v929, %v931
        %v933 = vrot.slane %v583, 7
        %v934 = vsel %vm889, %v931, %v933
        %v935 = vrot.slane %v584, 7
        %v936 = vsel %vm889, %v933, %v935
        %v937 = vrot.slane %v585, 7
        %v938 = vsel %vm889, %v935, %v937
        %v939 = vrot.slane %v586, 7
        %v940 = vsel %vm889, %v937, %v939
        %v941 = vrot.slane %v587, 7
        %v942 = vsel %vm889, %v939, %v941
        %v943 = vrot.slane %v588, 7
        %v944 = vsel %vm889, %v941, %v943
        %v945 = vrot.slane %v589, 7
        %v946 = vsel %vm889, %v943, %v945
        %v947 = vrot.slane %v590, 7
        %v948 = vsel %vm889, %v945, %v947
        %v949 = vrot.slane %v591, 7
        %v950 = vsel %vm889, %v947, %v949
        %v951 = vrot.slane %v592, 7
        %v952 = vsel %vm889, %v949, %v951
        %v953 = vrot.slane %v593, 7
        %v954 = vsel %vm889, %v951, %v953
        %v955 = vrot.slane %v594, 7
        %v956 = vsel %vm889, %v953, %v955
        %v957 = vrot.slane %v595, 7
        %v958 = vsel %vm889, %v955, %v957
        %v959 = vrot.slane %v596, 7
        %v960 = vsel %vm889, %v957, %v959
        %v961 = vrot.slane %v597, 7
        %v962 = vsel %vm889, %v959, %v961
        %v963 = vrot.slane %v598, 7
        %v964 = vsel %vm889, %v961, %v963
        %v965 = vrot.slane %v599, 7
        %v966 = vsel %vm889, %v963, %v965
        %v967 = vrot.slane %v600, 7
        %v968 = vsel %vm889, %v965, %v967
        %v969 = vrot.slane %v601, 7
        %v970 = vsel %vm889, %v967, %v969
        %v971 = vrot.slane %v602, 7
        %v972 = vsel %vm889, %v969, %v971
        %v973 = vrot.slane %v603, 7
        %v974 = vsel %vm889, %v971, %v973
        %v975 = vrot.slane %v604, 7
        %v976 = vsel %vm889, %v973, %v975
        %v977 = vrot.slane %v605, 7
        %v978 = vsel %vm889, %v975, %v977
        %v979 = vrot.slane %v606, 7
        %v980 = vsel %vm889, %v977, %v979
        %v981 = vrot.slane %v607, 7
        %v982 = vsel %vm889, %v979, %v981
        %v983 = vrot.slane %v608, 7
        %v984 = vsel %vm889, %v981, %v983
        %v985 = vrot.slane %v609, 7
        %v986 = vsel %vm889, %v983, %v985
        %v987 = vrot.slane %v610, 7
        %v988 = vsel %vm889, %v985, %v987
        %v989 = vrot.slane %v611, 7
        %v990 = vsel %vm889, %v987, %v989
        %v991 = vrot.slane %v612, 7
        %v992 = vsel %vm889, %v989, %v991
        %v993 = vrot.slane %v613, 7
        %v994 = vsel %vm889, %v991, %v993
        %v995 = vrot.slane %v614, 7
        %v996 = vsel %vm889, %v993, %v995
        %v997 = vrot.slane %v615, 7
        %v998 = vsel %vm889, %v995, %v997
        %v999 = vrot.slane %v616, 7
        %v1000 = vsel %vm889, %v997, %v999
        %v1001 = vrot.slane %v617, 7
        %v1002 = vsel %vm889, %v999, %v1001
        %v1003 = vrot.slane %v618, 7
        %v1004 = vsel %vm889, %v1001, %v1003
        %v1005 = vrot.slane %v619, 7
        %v1006 = vsel %vm889, %v1003, %v1005
        %v1007 = vrot.slane %v620, 7
        %v1008 = vsel %vm889, %v1005, %v1007
        %v1009 = vrot.slane %v621, 7
        %v1010 = vsel %vm889, %v1007, %v1009
        %v1011 = vrot.slane %v622, 7
        %v1012 = vsel %vm889, %v1009, %v1011
        %v1013 = vrot.slane %v623, 7
        %v1014 = vsel %vm889, %v1011, %v1013
        %v1015 = vsel %vm889, %v1013, %v824
        %v1080 = vsel %vm889, %v824, %v890
        %v1081 = vlaneseq
        %v1082 = vshrl.u32 %v1081, 7
        %v1083 = vsub.s32 1, %v1082
        %v1084 = vrot.slane %v691, %v1083
        %v1085 = vsel %vm759, %v1080, %v1084
        %v1086 = vsel %vm760, %v892, %v1084
        %v1087 = vsel %vm761, %v894, %v1084
        %v1088 = vsel %vm762, %v896, %v1084
        %v1089 = vsel %vm763, %v898, %v1084
        %v1090 = vsel %vm764, %v900, %v1084
        %v1091 = vsel %vm765, %v902, %v1084
        %v1092 = vsel %vm766, %v904, %v1084
        %v1093 = vsel %vm767, %v906, %v1084
        %v1094 = vsel %vm768, %v908, %v1084
        %v1095 = vsel %vm769, %v910, %v1084
        %v1096 = vsel %vm770, %v912, %v1084
        %v1097 = vsel %vm771, %v914, %v1084
        %v1098 = vsel %vm772, %v916, %v1084
        %v1099 = vsel %vm773, %v918, %v1084
        %v1100 = vsel %vm774, %v920, %v1084
        %v1101 = vsel %vm775, %v922, %v1084
        %v1102 = vsel %vm776, %v924, %v1084
        %v1103 = vsel %vm777, %v926, %v1084
        %v1104 = vsel %vm778, %v928, %v1084
        %v1105 = vsel %vm779, %v930, %v1084
        %v1106 = vsel %vm780, %v932, %v1084
        %v1107 = vsel %vm781, %v934, %v1084
        %v1108 = vsel %vm782, %v936, %v1084
        %v1109 = vsel %vm783, %v938, %v1084
        %v1110 = vsel %vm784, %v940, %v1084
        %v1111 = vsel %vm785, %v942, %v1084
        %v1112 = vsel %vm786, %v944, %v1084
        %v1113 = vsel %vm787, %v946, %v1084
        %v1114 = vsel %vm788, %v948, %v1084
        %v1115 = vsel %vm789, %v950, %v1084
        %v1116 = vsel %vm790, %v952, %v1084
        %v1117 = vsel %vm791, %v954, %v1084
        %v1118 = vsel %vm792, %v956, %v1084
        %v1119 = vsel %vm793, %v958, %v1084
        %v1120 = vsel %vm794, %v960, %v1084
        %v1121 = vsel %vm795, %v962, %v1084
        %v1122 = vsel %vm796, %v964, %v1084
        %v1123 = vsel %vm797, %v966, %v1084
        %v1124 = vsel %vm798, %v968, %v1084
        %v1125 = vsel %vm799, %v970, %v1084
        %v1126 = vsel %vm800, %v972, %v1084
        %v1127 = vsel %vm801, %v974, %v1084
        %v1128 = vsel %vm802, %v976, %v1084
        %v1129 = vsel %vm803, %v978, %v1084
        %v1130 = vsel %vm804, %v980, %v1084
        %v1131 = vsel %vm805, %v982, %v1084
        %v1132 = vsel %vm806, %v984, %v1084
        %v1133 = vsel %vm807, %v986, %v1084
        %v1134 = vsel %vm808, %v988, %v1084
        %v1135 = vsel %vm809, %v990, %v1084
        %v1136 = vsel %vm810, %v992, %v1084
        %v1137 = vsel %vm811, %v994, %v1084
        %v1138 = vsel %vm812, %v996, %v1084
        %v1139 = vsel %vm813, %v998, %v1084
        %v1140 = vsel %vm814, %v1000, %v1084
        %v1141 = vsel %vm815, %v1002, %v1084
        %v1142 = vsel %vm816, %v1004, %v1084
        %v1143 = vsel %vm817, %v1006, %v1084
        %v1144 = vsel %vm818, %v1008, %v1084
        %v1145 = vsel %vm819, %v1010, %v1084
        %v1146 = vsel %vm820, %v1012, %v1084
        %v1147 = vsel %vm821, %v1014, %v1084
        %v1148 = vsel %vm822, %v1015, %v1084
        %vm1149 = vcmp.ge.s32.totalorder %v695, 2
        %vm1150 = vcmp.ge.s32.totalorder %v696, 2
        %vm1151 = vcmp.ge.s32.totalorder %v697, 2
        %vm1152 = vcmp.ge.s32.totalorder %v698, 2
        %vm1153 = vcmp.ge.s32.totalorder %v699, 2
        %vm1154 = vcmp.ge.s32.totalorder %v700, 2
        %vm1155 = vcmp.ge.s32.totalorder %v701, 2
        %vm1156 = vcmp.ge.s32.totalorder %v702, 2
        %vm1157 = vcmp.ge.s32.totalorder %v703, 2
        %vm1158 = vcmp.ge.s32.totalorder %v704, 2
        %vm1159 = vcmp.ge.s32.totalorder %v705, 2
        %vm1160 = vcmp.ge.s32.totalorder %v706, 2
        %vm1161 = vcmp.ge.s32.totalorder %v707, 2
        %vm1162 = vcmp.ge.s32.totalorder %v708, 2
        %vm1163 = vcmp.ge.s32.totalorder %v709, 2
        %vm1164 = vcmp.ge.s32.totalorder %v710, 2
        %vm1165 = vcmp.ge.s32.totalorder %v711, 2
        %vm1166 = vcmp.ge.s32.totalorder %v712, 2
        %vm1167 = vcmp.ge.s32.totalorder %v713, 2
        %vm1168 = vcmp.ge.s32.totalorder %v714, 2
        %vm1169 = vcmp.ge.s32.totalorder %v715, 2
        %vm1170 = vcmp.ge.s32.totalorder %v716, 2
        %vm1171 = vcmp.ge.s32.totalorder %v717, 2
        %vm1172 = vcmp.ge.s32.totalorder %v718, 2
        %vm1173 = vcmp.ge.s32.totalorder %v719, 2
        %vm1174 = vcmp.ge.s32.totalorder %v720, 2
        %vm1175 = vcmp.ge.s32.totalorder %v721, 2
        %vm1176 = vcmp.ge.s32.totalorder %v722, 2
        %vm1177 = vcmp.ge.s32.totalorder %v723, 2
        %vm1178 = vcmp.ge.s32.totalorder %v724, 2
        %vm1179 = vcmp.ge.s32.totalorder %v725, 2
        %vm1180 = vcmp.ge.s32.totalorder %v726, 2
        %vm1181 = vcmp.ge.s32.totalorder %v727, 2
        %vm1182 = vcmp.ge.s32.totalorder %v728, 2
        %vm1183 = vcmp.ge.s32.totalorder %v729, 2
        %vm1184 = vcmp.ge.s32.totalorder %v730, 2
        %vm1185 = vcmp.ge.s32.totalorder %v731, 2
        %vm1186 = vcmp.ge.s32.totalorder %v732, 2
        %vm1187 = vcmp.ge.s32.totalorder %v733, 2
        %vm1188 = vcmp.ge.s32.totalorder %v734, 2
        %vm1189 = vcmp.ge.s32.totalorder %v735, 2
        %vm1190 = vcmp.ge.s32.totalorder %v736, 2
        %vm1191 = vcmp.ge.s32.totalorder %v737, 2
        %vm1192 = vcmp.ge.s32.totalorder %v738, 2
        %vm1193 = vcmp.ge.s32.totalorder %v739, 2
        %vm1194 = vcmp.ge.s32.totalorder %v740, 2
        %vm1195 = vcmp.ge.s32.totalorder %v741, 2
        %vm1196 = vcmp.ge.s32.totalorder %v742, 2
        %vm1197 = vcmp.ge.s32.totalorder %v743, 2
        %vm1198 = vcmp.ge.s32.totalorder %v744, 2
        %vm1199 = vcmp.ge.s32.totalorder %v745, 2
        %vm1200 = vcmp.ge.s32.totalorder %v746, 2
        %vm1201 = vcmp.ge.s32.totalorder %v747, 2
        %vm1202 = vcmp.ge.s32.totalorder %v748, 2
        %vm1203 = vcmp.ge.s32.totalorder %v749, 2
        %vm1204 = vcmp.ge.s32.totalorder %v750, 2
        %vm1205 = vcmp.ge.s32.totalorder %v751, 2
        %vm1206 = vcmp.ge.s32.totalorder %v752, 2
        %vm1207 = vcmp.ge.s32.totalorder %v753, 2
        %vm1208 = vcmp.ge.s32.totalorder %v754, 2
        %vm1209 = vcmp.ge.s32.totalorder %v755, 2
        %vm1210 = vcmp.ge.s32.totalorder %v756, 2
        %vm1211 = vcmp.ge.s32.totalorder %v757, 2
        %vm1212 = vcmp.ge.s32.totalorder %v758, 2
        %v1213 = vrot.slane %v624, 6
        %vm1215 = vcmask 1041408
        %v1216 = vrot.slane %v561, 6
        %v1217 = vrot.slane %v562, 6
        %v1218 = vsel %vm1215, %v1216, %v1217
        %v1219 = vrot.slane %v563, 6
        %v1220 = vsel %vm1215, %v1217, %v1219
        %v1221 = vrot.slane %v564, 6
        %v1222 = vsel %vm1215, %v1219, %v1221
        %v1223 = vrot.slane %v565, 6
        %v1224 = vsel %vm1215, %v1221, %v1223
        %v1225 = vrot.slane %v566, 6
        %v1226 = vsel %vm1215, %v1223, %v1225
        %v1227 = vrot.slane %v567, 6
        %v1228 = vsel %vm1215, %v1225, %v1227
        %v1229 = vrot.slane %v568, 6
        %v1230 = vsel %vm1215, %v1227, %v1229
        %v1231 = vrot.slane %v569, 6
        %v1232 = vsel %vm1215, %v1229, %v1231
        %v1233 = vrot.slane %v570, 6
        %v1234 = vsel %vm1215, %v1231, %v1233
        %v1235 = vrot.slane %v571, 6
        %v1236 = vsel %vm1215, %v1233, %v1235
        %v1237 = vrot.slane %v572, 6
        %v1238 = vsel %vm1215, %v1235, %v1237
        %v1239 = vrot.slane %v573, 6
        %v1240 = vsel %vm1215, %v1237, %v1239
        %v1241 = vrot.slane %v574, 6
        %v1242 = vsel %vm1215, %v1239, %v1241
        %v1243 = vrot.slane %v575, 6
        %v1244 = vsel %vm1215, %v1241, %v1243
        %v1245 = vrot.slane %v576, 6
        %v1246 = vsel %vm1215, %v1243, %v1245
        %v1247 = vrot.slane %v577, 6
        %v1248 = vsel %vm1215, %v1245, %v1247
        %v1249 = vrot.slane %v578, 6
        %v1250 = vsel %vm1215, %v1247, %v1249
        %v1251 = vrot.slane %v579, 6
        %v1252 = vsel %vm1215, %v1249, %v1251
        %v1253 = vrot.slane %v580, 6
        %v1254 = vsel %vm1215, %v1251, %v1253
        %v1255 = vrot.slane %v581, 6
        %v1256 = vsel %vm1215, %v1253, %v1255
        %v1257 = vrot.slane %v582, 6
        %v1258 = vsel %vm1215, %v1255, %v1257
        %v1259 = vrot.slane %v583, 6
        %v1260 = vsel %vm1215, %v1257, %v1259
        %v1261 = vrot.slane %v584, 6
        %v1262 = vsel %vm1215, %v1259, %v1261
        %v1263 = vrot.slane %v585, 6
        %v1264 = vsel %vm1215, %v1261, %v1263
        %v1265 = vrot.slane %v586, 6
        %v1266 = vsel %vm1215, %v1263, %v1265
        %v1267 = vrot.slane %v587, 6
        %v1268 = vsel %vm1215, %v1265, %v1267
        %v1269 = vrot.slane %v588, 6
        %v1270 = vsel %vm1215, %v1267, %v1269
        %v1271 = vrot.slane %v589, 6
        %v1272 = vsel %vm1215, %v1269, %v1271
        %v1273 = vrot.slane %v590, 6
        %v1274 = vsel %vm1215, %v1271, %v1273
        %v1275 = vrot.slane %v591, 6
        %v1276 = vsel %vm1215, %v1273, %v1275
        %v1277 = vrot.slane %v592, 6
        %v1278 = vsel %vm1215, %v1275, %v1277
        %v1279 = vrot.slane %v593, 6
        %v1280 = vsel %vm1215, %v1277, %v1279
        %v1281 = vrot.slane %v594, 6
        %v1282 = vsel %vm1215, %v1279, %v1281
        %v1283 = vrot.slane %v595, 6
        %v1284 = vsel %vm1215, %v1281, %v1283
        %v1285 = vrot.slane %v596, 6
        %v1286 = vsel %vm1215, %v1283, %v1285
        %v1287 = vrot.slane %v597, 6
        %v1288 = vsel %vm1215, %v1285, %v1287
        %v1289 = vrot.slane %v598, 6
        %v1290 = vsel %vm1215, %v1287, %v1289
        %v1291 = vrot.slane %v599, 6
        %v1292 = vsel %vm1215, %v1289, %v1291
        %v1293 = vrot.slane %v600, 6
        %v1294 = vsel %vm1215, %v1291, %v1293
        %v1295 = vrot.slane %v601, 6
        %v1296 = vsel %vm1215, %v1293, %v1295
        %v1297 = vrot.slane %v602, 6
        %v1298 = vsel %vm1215, %v1295, %v1297
        %v1299 = vrot.slane %v603, 6
        %v1300 = vsel %vm1215, %v1297, %v1299
        %v1301 = vrot.slane %v604, 6
        %v1302 = vsel %vm1215, %v1299, %v1301
        %v1303 = vrot.slane %v605, 6
        %v1304 = vsel %vm1215, %v1301, %v1303
        %v1305 = vrot.slane %v606, 6
        %v1306 = vsel %vm1215, %v1303, %v1305
        %v1307 = vrot.slane %v607, 6
        %v1308 = vsel %vm1215, %v1305, %v1307
        %v1309 = vrot.slane %v608, 6
        %v1310 = vsel %vm1215, %v1307, %v1309
        %v1311 = vrot.slane %v609, 6
        %v1312 = vsel %vm1215, %v1309, %v1311
        %v1313 = vrot.slane %v610, 6
        %v1314 = vsel %vm1215, %v1311, %v1313
        %v1315 = vrot.slane %v611, 6
        %v1316 = vsel %vm1215, %v1313, %v1315
        %v1317 = vrot.slane %v612, 6
        %v1318 = vsel %vm1215, %v1315, %v1317
        %v1319 = vrot.slane %v613, 6
        %v1320 = vsel %vm1215, %v1317, %v1319
        %v1321 = vrot.slane %v614, 6
        %v1322 = vsel %vm1215, %v1319, %v1321
        %v1323 = vrot.slane %v615, 6
        %v1324 = vsel %vm1215, %v1321, %v1323
        %v1325 = vrot.slane %v616, 6
        %v1326 = vsel %vm1215, %v1323, %v1325
        %v1327 = vrot.slane %v617, 6
        %v1328 = vsel %vm1215, %v1325, %v1327
        %v1329 = vrot.slane %v618, 6
        %v1330 = vsel %vm1215, %v1327, %v1329
        %v1331 = vrot.slane %v619, 6
        %v1332 = vsel %vm1215, %v1329, %v1331
        %v1333 = vrot.slane %v620, 6
        %v1334 = vsel %vm1215, %v1331, %v1333
        %v1335 = vrot.slane %v621, 6
        %v1336 = vsel %vm1215, %v1333, %v1335
        %v1337 = vrot.slane %v622, 6
        %v1338 = vsel %vm1215, %v1335, %v1337
        %v1339 = vrot.slane %v623, 6
        %v1340 = vsel %vm1215, %v1337, %v1339
        %v1341 = vsel %vm1215, %v1339, %v1213
        %v1406 = vsel %vm1215, %v1213, %v1216
        %v1407 = vlaneseq
        %v1408 = vshrl.u32 %v1407, 7
        %v1409 = vsub.s32 0, %v1408
        %v1410 = vrot.slane %v691, %v1409
        %v1411 = vsel %vm759, %v1084, %v1410
        %v1412 = vsel %vm760, %v1084, %v1410
        %v1413 = vsel %vm761, %v1084, %v1410
        %v1414 = vsel %vm762, %v1084, %v1410
        %v1415 = vsel %vm763, %v1084, %v1410
        %v1416 = vsel %vm764, %v1084, %v1410
        %v1417 = vsel %vm765, %v1084, %v1410
        %v1418 = vsel %vm766, %v1084, %v1410
        %v1419 = vsel %vm767, %v1084, %v1410
        %v1420 = vsel %vm768, %v1084, %v1410
        %v1421 = vsel %vm769, %v1084, %v1410
        %v1422 = vsel %vm770, %v1084, %v1410
        %v1423 = vsel %vm771, %v1084, %v1410
        %v1424 = vsel %vm772, %v1084, %v1410
        %v1425 = vsel %vm773, %v1084, %v1410
        %v1426 = vsel %vm774, %v1084, %v1410
        %v1427 = vsel %vm775, %v1084, %v1410
        %v1428 = vsel %vm776, %v1084, %v1410
        %v1429 = vsel %vm777, %v1084, %v1410
        %v1430 = vsel %vm778, %v1084, %v1410
        %v1431 = vsel %vm779, %v1084, %v1410
        %v1432 = vsel %vm780, %v1084, %v1410
        %v1433 = vsel %vm781, %v1084, %v1410
        %v1434 = vsel %vm782, %v1084, %v1410
        %v1435 = vsel %vm783, %v1084, %v1410
        %v1436 = vsel %vm784, %v1084, %v1410
        %v1437 = vsel %vm785, %v1084, %v1410
        %v1438 = vsel %vm786, %v1084, %v1410
        %v1439 = vsel %vm787, %v1084, %v1410
        %v1440 = vsel %vm788, %v1084, %v1410
        %v1441 = vsel %vm789, %v1084, %v1410
        %v1442 = vsel %vm790, %v1084, %v1410
        %v1443 = vsel %vm791, %v1084, %v1410
        %v1444 = vsel %vm792, %v1084, %v1410
        %v1445 = vsel %vm793, %v1084, %v1410
        %v1446 = vsel %vm794, %v1084, %v1410
        %v1447 = vsel %vm795, %v1084, %v1410
        %v1448 = vsel %vm796, %v1084, %v1410
        %v1449 = vsel %vm797, %v1084, %v1410
        %v1450 = vsel %vm798, %v1084, %v1410
        %v1451 = vsel %vm799, %v1084, %v1410
        %v1452 = vsel %vm800, %v1084, %v1410
        %v1453 = vsel %vm801, %v1084, %v1410
        %v1454 = vsel %vm802, %v1084, %v1410
        %v1455 = vsel %vm803, %v1084, %v1410
        %v1456 = vsel %vm804, %v1084, %v1410
        %v1457 = vsel %vm805, %v1084, %v1410
        %v1458 = vsel %vm806, %v1084, %v1410
        %v1459 = vsel %vm807, %v1084, %v1410
        %v1460 = vsel %vm808, %v1084, %v1410
        %v1461 = vsel %vm809, %v1084, %v1410
        %v1462 = vsel %vm810, %v1084, %v1410
        %v1463 = vsel %vm811, %v1084, %v1410
        %v1464 = vsel %vm812, %v1084, %v1410
        %v1465 = vsel %vm813, %v1084, %v1410
        %v1466 = vsel %vm814, %v1084, %v1410
        %v1467 = vsel %vm815, %v1084, %v1410
        %v1468 = vsel %vm816, %v1084, %v1410
        %v1469 = vsel %vm817, %v1084, %v1410
        %v1470 = vsel %vm818, %v1084, %v1410
        %v1471 = vsel %vm819, %v1084, %v1410
        %v1472 = vsel %vm820, %v1084, %v1410
        %v1473 = vsel %vm821, %v1084, %v1410
        %v1474 = vsel %vm822, %v1084, %v1410
        %v1475 = vsel %vm1149, %v1406, %v1411
        %v1476 = vsel %vm1150, %v1218, %v1412
        %v1477 = vsel %vm1151, %v1220, %v1413
        %v1478 = vsel %vm1152, %v1222, %v1414
        %v1479 = vsel %vm1153, %v1224, %v1415
        %v1480 = vsel %vm1154, %v1226, %v1416
        %v1481 = vsel %vm1155, %v1228, %v1417
        %v1482 = vsel %vm1156, %v1230, %v1418
        %v1483 = vsel %vm1157, %v1232, %v1419
        %v1484 = vsel %vm1158, %v1234, %v1420
        %v1485 = vsel %vm1159, %v1236, %v1421
        %v1486 = vsel %vm1160, %v1238, %v1422
        %v1487 = vsel %vm1161, %v1240, %v1423
        %v1488 = vsel %vm1162, %v1242, %v1424
        %v1489 = vsel %vm1163, %v1244, %v1425
        %v1490 = vsel %vm1164, %v1246, %v1426
        %v1491 = vsel %vm1165, %v1248, %v1427
        %v1492 = vsel %vm1166, %v1250, %v1428
        %v1493 = vsel %vm1167, %v1252, %v1429
        %v1494 = vsel %vm1168, %v1254, %v1430
        %v1495 = vsel %vm1169, %v1256, %v1431
        %v1496 = vsel %vm1170, %v1258, %v1432
        %v1497 = vsel %vm1171, %v1260, %v1433
        %v1498 = vsel %vm1172, %v1262, %v1434
        %v1499 = vsel %vm1173, %v1264, %v1435
        %v1500 = vsel %vm1174, %v1266, %v1436
        %v1501 = vsel %vm1175, %v1268, %v1437
        %v1502 = vsel %vm1176, %v1270, %v1438
        %v1503 = vsel %vm1177, %v1272, %v1439
        %v1504 = vsel %vm1178, %v1274, %v1440
        %v1505 = vsel %vm1179, %v1276, %v1441
        %v1506 = vsel %vm1180, %v1278, %v1442
        %v1507 = vsel %vm1181, %v1280, %v1443
        %v1508 = vsel %vm1182, %v1282, %v1444
        %v1509 = vsel %vm1183, %v1284, %v1445
        %v1510 = vsel %vm1184, %v1286, %v1446
        %v1511 = vsel %vm1185, %v1288, %v1447
        %v1512 = vsel %vm1186, %v1290, %v1448
        %v1513 = vsel %vm1187, %v1292, %v1449
        %v1514 = vsel %vm1188, %v1294, %v1450
        %v1515 = vsel %vm1189, %v1296, %v1451
        %v1516 = vsel %vm1190, %v1298, %v1452
        %v1517 = vsel %vm1191, %v1300, %v1453
        %v1518 = vsel %vm1192, %v1302, %v1454
        %v1519 = vsel %vm1193, %v1304, %v1455
        %v1520 = vsel %vm1194, %v1306, %v1456
        %v1521 = vsel %vm1195, %v1308, %v1457
        %v1522 = vsel %vm1196, %v1310, %v1458
        %v1523 = vsel %vm1197, %v1312, %v1459
        %v1524 = vsel %vm1198, %v1314, %v1460
        %v1525 = vsel %vm1199, %v1316, %v1461
        %v1526 = vsel %vm1200, %v1318, %v1462
        %v1527 = vsel %vm1201, %v1320, %v1463
        %v1528 = vsel %vm1202, %v1322, %v1464
        %v1529 = vsel %vm1203, %v1324, %v1465
        %v1530 = vsel %vm1204, %v1326, %v1466
        %v1531 = vsel %vm1205, %v1328, %v1467
        %v1532 = vsel %vm1206, %v1330, %v1468
        %v1533 = vsel %vm1207, %v1332, %v1469
        %v1534 = vsel %vm1208, %v1334, %v1470
        %v1535 = vsel %vm1209, %v1336, %v1471
        %v1536 = vsel %vm1210, %v1338, %v1472
        %v1537 = vsel %vm1211, %v1340, %v1473
        %v1538 = vsel %vm1212, %v1341, %v1474
        %v1540 = vrot.slane %v688, 7
        %v1605 = vrot.slane %v625, 7
        %v1606 = vrot.slane %v626, 7
        %v1607 = vsel %vm889, %v1605, %v1606
        %v1608 = vrot.slane %v627, 7
        %v1609 = vsel %vm889, %v1606, %v1608
        %v1610 = vrot.slane %v628, 7
        %v1611 = vsel %vm889, %v1608, %v1610
        %v1612 = vrot.slane %v629, 7
        %v1613 = vsel %vm889, %v1610, %v1612
        %v1614 = vrot.slane %v630, 7
        %v1615 = vsel %vm889, %v1612, %v1614
        %v1616 = vrot.slane %v631, 7
        %v1617 = vsel %vm889, %v1614, %v1616
        %v1618 = vrot.slane %v632, 7
        %v1619 = vsel %vm889, %v1616, %v1618
        %v1620 = vrot.slane %v633, 7
        %v1621 = vsel %vm889, %v1618, %v1620
        %v1622 = vrot.slane %v634, 7
        %v1623 = vsel %vm889, %v1620, %v1622
        %v1624 = vrot.slane %v635, 7
        %v1625 = vsel %vm889, %v1622, %v1624
        %v1626 = vrot.slane %v636, 7
        %v1627 = vsel %vm889, %v1624, %v1626
        %v1628 = vrot.slane %v637, 7
        %v1629 = vsel %vm889, %v1626, %v1628
        %v1630 = vrot.slane %v638, 7
        %v1631 = vsel %vm889, %v1628, %v1630
        %v1632 = vrot.slane %v639, 7
        %v1633 = vsel %vm889, %v1630, %v1632
        %v1634 = vrot.slane %v640, 7
        %v1635 = vsel %vm889, %v1632, %v1634
        %v1636 = vrot.slane %v641, 7
        %v1637 = vsel %vm889, %v1634, %v1636
        %v1638 = vrot.slane %v642, 7
        %v1639 = vsel %vm889, %v1636, %v1638
        %v1640 = vrot.slane %v643, 7
        %v1641 = vsel %vm889, %v1638, %v1640
        %v1642 = vrot.slane %v644, 7
        %v1643 = vsel %vm889, %v1640, %v1642
        %v1644 = vrot.slane %v645, 7
        %v1645 = vsel %vm889, %v1642, %v1644
        %v1646 = vrot.slane %v646, 7
        %v1647 = vsel %vm889, %v1644, %v1646
        %v1648 = vrot.slane %v647, 7
        %v1649 = vsel %vm889, %v1646, %v1648
        %v1650 = vrot.slane %v648, 7
        %v1651 = vsel %vm889, %v1648, %v1650
        %v1652 = vrot.slane %v649, 7
        %v1653 = vsel %vm889, %v1650, %v1652
        %v1654 = vrot.slane %v650, 7
        %v1655 = vsel %vm889, %v1652, %v1654
        %v1656 = vrot.slane %v651, 7
        %v1657 = vsel %vm889, %v1654, %v1656
        %v1658 = vrot.slane %v652, 7
        %v1659 = vsel %vm889, %v1656, %v1658
        %v1660 = vrot.slane %v653, 7
        %v1661 = vsel %vm889, %v1658, %v1660
        %v1662 = vrot.slane %v654, 7
        %v1663 = vsel %vm889, %v1660, %v1662
        %v1664 = vrot.slane %v655, 7
        %v1665 = vsel %vm889, %v1662, %v1664
        %v1666 = vrot.slane %v656, 7
        %v1667 = vsel %vm889, %v1664, %v1666
        %v1668 = vrot.slane %v657, 7
        %v1669 = vsel %vm889, %v1666, %v1668
        %v1670 = vrot.slane %v658, 7
        %v1671 = vsel %vm889, %v1668, %v1670
        %v1672 = vrot.slane %v659, 7
        %v1673 = vsel %vm889, %v1670, %v1672
        %v1674 = vrot.slane %v660, 7
        %v1675 = vsel %vm889, %v1672, %v1674
        %v1676 = vrot.slane %v661, 7
        %v1677 = vsel %vm889, %v1674, %v1676
        %v1678 = vrot.slane %v662, 7
        %v1679 = vsel %vm889, %v1676, %v1678
        %v1680 = vrot.slane %v663, 7
        %v1681 = vsel %vm889, %v1678, %v1680
        %v1682 = vrot.slane %v664, 7
        %v1683 = vsel %vm889, %v1680, %v1682
        %v1684 = vrot.slane %v665, 7
        %v1685 = vsel %vm889, %v1682, %v1684
        %v1686 = vrot.slane %v666, 7
        %v1687 = vsel %vm889, %v1684, %v1686
        %v1688 = vrot.slane %v667, 7
        %v1689 = vsel %vm889, %v1686, %v1688
        %v1690 = vrot.slane %v668, 7
        %v1691 = vsel %vm889, %v1688, %v1690
        %v1692 = vrot.slane %v669, 7
        %v1693 = vsel %vm889, %v1690, %v1692
        %v1694 = vrot.slane %v670, 7
        %v1695 = vsel %vm889, %v1692, %v1694
        %v1696 = vrot.slane %v671, 7
        %v1697 = vsel %vm889, %v1694, %v1696
        %v1698 = vrot.slane %v672, 7
        %v1699 = vsel %vm889, %v1696, %v1698
        %v1700 = vrot.slane %v673, 7
        %v1701 = vsel %vm889, %v1698, %v1700
        %v1702 = vrot.slane %v674, 7
        %v1703 = vsel %vm889, %v1700, %v1702
        %v1704 = vrot.slane %v675, 7
        %v1705 = vsel %vm889, %v1702, %v1704
        %v1706 = vrot.slane %v676, 7
        %v1707 = vsel %vm889, %v1704, %v1706
        %v1708 = vrot.slane %v677, 7
        %v1709 = vsel %vm889, %v1706, %v1708
        %v1710 = vrot.slane %v678, 7
        %v1711 = vsel %vm889, %v1708, %v1710
        %v1712 = vrot.slane %v679, 7
        %v1713 = vsel %vm889, %v1710, %v1712
        %v1714 = vrot.slane %v680, 7
        %v1715 = vsel %vm889, %v1712, %v1714
        %v1716 = vrot.slane %v681, 7
        %v1717 = vsel %vm889, %v1714, %v1716
        %v1718 = vrot.slane %v682, 7
        %v1719 = vsel %vm889, %v1716, %v1718
        %v1720 = vrot.slane %v683, 7
        %v1721 = vsel %vm889, %v1718, %v1720
        %v1722 = vrot.slane %v684, 7
        %v1723 = vsel %vm889, %v1720, %v1722
        %v1724 = vrot.slane %v685, 7
        %v1725 = vsel %vm889, %v1722, %v1724
        %v1726 = vrot.slane %v686, 7
        %v1727 = vsel %vm889, %v1724, %v1726
        %v1728 = vrot.slane %v687, 7
        %v1729 = vsel %vm889, %v1726, %v1728
        %v1730 = vsel %vm889, %v1728, %v1540
        %v1795 = vsel %vm889, %v1540, %v1605
        %v1796 = vlaneseq
        %v1797 = vshrl.u32 %v1796, 7
        %v1798 = vsub.s32 1, %v1797
        %v1799 = vrot.slane %v693, %v1798
        %v1800 = vsel %vm759, %v1795, %v1799
        %v1801 = vsel %vm760, %v1607, %v1799
        %v1802 = vsel %vm761, %v1609, %v1799
        %v1803 = vsel %vm762, %v1611, %v1799
        %v1804 = vsel %vm763, %v1613, %v1799
        %v1805 = vsel %vm764, %v1615, %v1799
        %v1806 = vsel %vm765, %v1617, %v1799
        %v1807 = vsel %vm766, %v1619, %v1799
        %v1808 = vsel %vm767, %v1621, %v1799
        %v1809 = vsel %vm768, %v1623, %v1799
        %v1810 = vsel %vm769, %v1625, %v1799
        %v1811 = vsel %vm770, %v1627, %v1799
        %v1812 = vsel %vm771, %v1629, %v1799
        %v1813 = vsel %vm772, %v1631, %v1799
        %v1814 = vsel %vm773, %v1633, %v1799
        %v1815 = vsel %vm774, %v1635, %v1799
        %v1816 = vsel %vm775, %v1637, %v1799
        %v1817 = vsel %vm776, %v1639, %v1799
        %v1818 = vsel %vm777, %v1641, %v1799
        %v1819 = vsel %vm778, %v1643, %v1799
        %v1820 = vsel %vm779, %v1645, %v1799
        %v1821 = vsel %vm780, %v1647, %v1799
        %v1822 = vsel %vm781, %v1649, %v1799
        %v1823 = vsel %vm782, %v1651, %v1799
        %v1824 = vsel %vm783, %v1653, %v1799
        %v1825 = vsel %vm784, %v1655, %v1799
        %v1826 = vsel %vm785, %v1657, %v1799
        %v1827 = vsel %vm786, %v1659, %v1799
        %v1828 = vsel %vm787, %v1661, %v1799
        %v1829 = vsel %vm788, %v1663, %v1799
        %v1830 = vsel %vm789, %v1665, %v1799
        %v1831 = vsel %vm790, %v1667, %v1799
        %v1832 = vsel %vm791, %v1669, %v1799
        %v1833 = vsel %vm792, %v1671, %v1799
        %v1834 = vsel %vm793, %v1673, %v1799
        %v1835 = vsel %vm794, %v1675, %v1799
        %v1836 = vsel %vm795, %v1677, %v1799
        %v1837 = vsel %vm796, %v1679, %v1799
        %v1838 = vsel %vm797, %v1681, %v1799
        %v1839 = vsel %vm798, %v1683, %v1799
        %v1840 = vsel %vm799, %v1685, %v1799
        %v1841 = vsel %vm800, %v1687, %v1799
        %v1842 = vsel %vm801, %v1689, %v1799
        %v1843 = vsel %vm802, %v1691, %v1799
        %v1844 = vsel %vm803, %v1693, %v1799
        %v1845 = vsel %vm804, %v1695, %v1799
        %v1846 = vsel %vm805, %v1697, %v1799
        %v1847 = vsel %vm806, %v1699, %v1799
        %v1848 = vsel %vm807, %v1701, %v1799
        %v1849 = vsel %vm808, %v1703, %v1799
        %v1850 = vsel %vm809, %v1705, %v1799
        %v1851 = vsel %vm810, %v1707, %v1799
        %v1852 = vsel %vm811, %v1709, %v1799
        %v1853 = vsel %vm812, %v1711, %v1799
        %v1854 = vsel %vm813, %v1713, %v1799
        %v1855 = vsel %vm814, %v1715, %v1799
        %v1856 = vsel %vm815, %v1717, %v1799
        %v1857 = vsel %vm816, %v1719, %v1799
        %v1858 = vsel %vm817, %v1721, %v1799
        %v1859 = vsel %vm818, %v1723, %v1799
        %v1860 = vsel %vm819, %v1725, %v1799
        %v1861 = vsel %vm820, %v1727, %v1799
        %v1862 = vsel %vm821, %v1729, %v1799
        %v1863 = vsel %vm822, %v1730, %v1799
        %v1864 = vrot.slane %v688, 6
        %v1866 = vrot.slane %v625, 6
        %v1867 = vrot.slane %v626, 6
        %v1868 = vsel %vm1215, %v1866, %v1867
        %v1869 = vrot.slane %v627, 6
        %v1870 = vsel %vm1215, %v1867, %v1869
        %v1871 = vrot.slane %v628, 6
        %v1872 = vsel %vm1215, %v1869, %v1871
        %v1873 = vrot.slane %v629, 6
        %v1874 = vsel %vm1215, %v1871, %v1873
        %v1875 = vrot.slane %v630, 6
        %v1876 = vsel %vm1215, %v1873, %v1875
        %v1877 = vrot.slane %v631, 6
        %v1878 = vsel %vm1215, %v1875, %v1877
        %v1879 = vrot.slane %v632, 6
        %v1880 = vsel %vm1215, %v1877, %v1879
        %v1881 = vrot.slane %v633, 6
        %v1882 = vsel %vm1215, %v1879, %v1881
        %v1883 = vrot.slane %v634, 6
        %v1884 = vsel %vm1215, %v1881, %v1883
        %v1885 = vrot.slane %v635, 6
        %v1886 = vsel %vm1215, %v1883, %v1885
        %v1887 = vrot.slane %v636, 6
        %v1888 = vsel %vm1215, %v1885, %v1887
        %v1889 = vrot.slane %v637, 6
        %v1890 = vsel %vm1215, %v1887, %v1889
        %v1891 = vrot.slane %v638, 6
        %v1892 = vsel %vm1215, %v1889, %v1891
        %v1893 = vrot.slane %v639, 6
        %v1894 = vsel %vm1215, %v1891, %v1893
        %v1895 = vrot.slane %v640, 6
        %v1896 = vsel %vm1215, %v1893, %v1895
        %v1897 = vrot.slane %v641, 6
        %v1898 = vsel %vm1215, %v1895, %v1897
        %v1899 = vrot.slane %v642, 6
        %v1900 = vsel %vm1215, %v1897, %v1899
        %v1901 = vrot.slane %v643, 6
        %v1902 = vsel %vm1215, %v1899, %v1901
        %v1903 = vrot.slane %v644, 6
        %v1904 = vsel %vm1215, %v1901, %v1903
        %v1905 = vrot.slane %v645, 6
        %v1906 = vsel %vm1215, %v1903, %v1905
        %v1907 = vrot.slane %v646, 6
        %v1908 = vsel %vm1215, %v1905, %v1907
        %v1909 = vrot.slane %v647, 6
        %v1910 = vsel %vm1215, %v1907, %v1909
        %v1911 = vrot.slane %v648, 6
        %v1912 = vsel %vm1215, %v1909, %v1911
        %v1913 = vrot.slane %v649, 6
        %v1914 = vsel %vm1215, %v1911, %v1913
        %v1915 = vrot.slane %v650, 6
        %v1916 = vsel %vm1215, %v1913, %v1915
        %v1917 = vrot.slane %v651, 6
        %v1918 = vsel %vm1215, %v1915, %v1917
        %v1919 = vrot.slane %v652, 6
        %v1920 = vsel %vm1215, %v1917, %v1919
        %v1921 = vrot.slane %v653, 6
        %v1922 = vsel %vm1215, %v1919, %v1921
        %v1923 = vrot.slane %v654, 6
        %v1924 = vsel %vm1215, %v1921, %v1923
        %v1925 = vrot.slane %v655, 6
        %v1926 = vsel %vm1215, %v1923, %v1925
        %v1927 = vrot.slane %v656, 6
        %v1928 = vsel %vm1215, %v1925, %v1927
        %v1929 = vrot.slane %v657, 6
        %v1930 = vsel %vm1215, %v1927, %v1929
        %v1931 = vrot.slane %v658, 6
        %v1932 = vsel %vm1215, %v1929, %v1931
        %v1933 = vrot.slane %v659, 6
        %v1934 = vsel %vm1215, %v1931, %v1933
        %v1935 = vrot.slane %v660, 6
        %v1936 = vsel %vm1215, %v1933, %v1935
        %v1937 = vrot.slane %v661, 6
        %v1938 = vsel %vm1215, %v1935, %v1937
        %v1939 = vrot.slane %v662, 6
        %v1940 = vsel %vm1215, %v1937, %v1939
        %v1941 = vrot.slane %v663, 6
        %v1942 = vsel %vm1215, %v1939, %v1941
        %v1943 = vrot.slane %v664, 6
        %v1944 = vsel %vm1215, %v1941, %v1943
        %v1945 = vrot.slane %v665, 6
        %v1946 = vsel %vm1215, %v1943, %v1945
        %v1947 = vrot.slane %v666, 6
        %v1948 = vsel %vm1215, %v1945, %v1947
        %v1949 = vrot.slane %v667, 6
        %v1950 = vsel %vm1215, %v1947, %v1949
        %v1951 = vrot.slane %v668, 6
        %v1952 = vsel %vm1215, %v1949, %v1951
        %v1953 = vrot.slane %v669, 6
        %v1954 = vsel %vm1215, %v1951, %v1953
        %v1955 = vrot.slane %v670, 6
        %v1956 = vsel %vm1215, %v1953, %v1955
        %v1957 = vrot.slane %v671, 6
        %v1958 = vsel %vm1215, %v1955, %v1957
        %v1959 = vrot.slane %v672, 6
        %v1960 = vsel %vm1215, %v1957, %v1959
        %v1961 = vrot.slane %v673, 6
        %v1962 = vsel %vm1215, %v1959, %v1961
        %v1963 = vrot.slane %v674, 6
        %v1964 = vsel %vm1215, %v1961, %v1963
        %v1965 = vrot.slane %v675, 6
        %v1966 = vsel %vm1215, %v1963, %v1965
        %v1967 = vrot.slane %v676, 6
        %v1968 = vsel %vm1215, %v1965, %v1967
        %v1969 = vrot.slane %v677, 6
        %v1970 = vsel %vm1215, %v1967, %v1969
        %v1971 = vrot.slane %v678, 6
        %v1972 = vsel %vm1215, %v1969, %v1971
        %v1973 = vrot.slane %v679, 6
        %v1974 = vsel %vm1215, %v1971, %v1973
        %v1975 = vrot.slane %v680, 6
        %v1976 = vsel %vm1215, %v1973, %v1975
        %v1977 = vrot.slane %v681, 6
        %v1978 = vsel %vm1215, %v1975, %v1977
        %v1979 = vrot.slane %v682, 6
        %v1980 = vsel %vm1215, %v1977, %v1979
        %v1981 = vrot.slane %v683, 6
        %v1982 = vsel %vm1215, %v1979, %v1981
        %v1983 = vrot.slane %v684, 6
        %v1984 = vsel %vm1215, %v1981, %v1983
        %v1985 = vrot.slane %v685, 6
        %v1986 = vsel %vm1215, %v1983, %v1985
        %v1987 = vrot.slane %v686, 6
        %v1988 = vsel %vm1215, %v1985, %v1987
        %v1989 = vrot.slane %v687, 6
        %v1990 = vsel %vm1215, %v1987, %v1989
        %v1991 = vsel %vm1215, %v1989, %v1864
        %v2056 = vsel %vm1215, %v1864, %v1866
        %v2057 = vlaneseq
        %v2058 = vshrl.u32 %v2057, 7
        %v2059 = vsub.s32 0, %v2058
        %v2060 = vrot.slane %v693, %v2059
        %v2061 = vsel %vm759, %v1799, %v2060
        %v2062 = vsel %vm760, %v1799, %v2060
        %v2063 = vsel %vm761, %v1799, %v2060
        %v2064 = vsel %vm762, %v1799, %v2060
        %v2065 = vsel %vm763, %v1799, %v2060
        %v2066 = vsel %vm764, %v1799, %v2060
        %v2067 = vsel %vm765, %v1799, %v2060
        %v2068 = vsel %vm766, %v1799, %v2060
        %v2069 = vsel %vm767, %v1799, %v2060
        %v2070 = vsel %vm768, %v1799, %v2060
        %v2071 = vsel %vm769, %v1799, %v2060
        %v2072 = vsel %vm770, %v1799, %v2060
        %v2073 = vsel %vm771, %v1799, %v2060
        %v2074 = vsel %vm772, %v1799, %v2060
        %v2075 = vsel %vm773, %v1799, %v2060
        %v2076 = vsel %vm774, %v1799, %v2060
        %v2077 = vsel %vm775, %v1799, %v2060
        %v2078 = vsel %vm776, %v1799, %v2060
        %v2079 = vsel %vm777, %v1799, %v2060
        %v2080 = vsel %vm778, %v1799, %v2060
        %v2081 = vsel %vm779, %v1799, %v2060
        %v2082 = vsel %vm780, %v1799, %v2060
        %v2083 = vsel %vm781, %v1799, %v2060
        %v2084 = vsel %vm782, %v1799, %v2060
        %v2085 = vsel %vm783, %v1799, %v2060
        %v2086 = vsel %vm784, %v1799, %v2060
        %v2087 = vsel %vm785, %v1799, %v2060
        %v2088 = vsel %vm786, %v1799, %v2060
        %v2089 = vsel %vm787, %v1799, %v2060
        %v2090 = vsel %vm788, %v1799, %v2060
        %v2091 = vsel %vm789, %v1799, %v2060
        %v2092 = vsel %vm790, %v1799, %v2060
        %v2093 = vsel %vm791, %v1799, %v2060
        %v2094 = vsel %vm792, %v1799, %v2060
        %v2095 = vsel %vm793, %v1799, %v2060
        %v2096 = vsel %vm794, %v1799, %v2060
        %v2097 = vsel %vm795, %v1799, %v2060
        %v2098 = vsel %vm796, %v1799, %v2060
        %v2099 = vsel %vm797, %v1799, %v2060
        %v2100 = vsel %vm798, %v1799, %v2060
        %v2101 = vsel %vm799, %v1799, %v2060
        %v2102 = vsel %vm800, %v1799, %v2060
        %v2103 = vsel %vm801, %v1799, %v2060
        %v2104 = vsel %vm802, %v1799, %v2060
        %v2105 = vsel %vm803, %v1799, %v2060
        %v2106 = vsel %vm804, %v1799, %v2060
        %v2107 = vsel %vm805, %v1799, %v2060
        %v2108 = vsel %vm806, %v1799, %v2060
        %v2109 = vsel %vm807, %v1799, %v2060
        %v2110 = vsel %vm808, %v1799, %v2060
        %v2111 = vsel %vm809, %v1799, %v2060
        %v2112 = vsel %vm810, %v1799, %v2060
        %v2113 = vsel %vm811, %v1799, %v2060
        %v2114 = vsel %vm812, %v1799, %v2060
        %v2115 = vsel %vm813, %v1799, %v2060
        %v2116 = vsel %vm814, %v1799, %v2060
        %v2117 = vsel %vm815, %v1799, %v2060
        %v2118 = vsel %vm816, %v1799, %v2060
        %v2119 = vsel %vm817, %v1799, %v2060
        %v2120 = vsel %vm818, %v1799, %v2060
        %v2121 = vsel %vm819, %v1799, %v2060
        %v2122 = vsel %vm820, %v1799, %v2060
        %v2123 = vsel %vm821, %v1799, %v2060
        %v2124 = vsel %vm822, %v1799, %v2060
        %v2125 = vsel %vm1149, %v2056, %v2061
        %v2126 = vsel %vm1150, %v1868, %v2062
        %v2127 = vsel %vm1151, %v1870, %v2063
        %v2128 = vsel %vm1152, %v1872, %v2064
        %v2129 = vsel %vm1153, %v1874, %v2065
        %v2130 = vsel %vm1154, %v1876, %v2066
        %v2131 = vsel %vm1155, %v1878, %v2067
        %v2132 = vsel %vm1156, %v1880, %v2068
        %v2133 = vsel %vm1157, %v1882, %v2069
        %v2134 = vsel %vm1158, %v1884, %v2070
        %v2135 = vsel %vm1159, %v1886, %v2071
        %v2136 = vsel %vm1160, %v1888, %v2072
        %v2137 = vsel %vm1161, %v1890, %v2073
        %v2138 = vsel %vm1162, %v1892, %v2074
        %v2139 = vsel %vm1163, %v1894, %v2075
        %v2140 = vsel %vm1164, %v1896, %v2076
        %v2141 = vsel %vm1165, %v1898, %v2077
        %v2142 = vsel %vm1166, %v1900, %v2078
        %v2143 = vsel %vm1167, %v1902, %v2079
        %v2144 = vsel %vm1168, %v1904, %v2080
        %v2145 = vsel %vm1169, %v1906, %v2081
        %v2146 = vsel %vm1170, %v1908, %v2082
        %v2147 = vsel %vm1171, %v1910, %v2083
        %v2148 = vsel %vm1172, %v1912, %v2084
        %v2149 = vsel %vm1173, %v1914, %v2085
        %v2150 = vsel %vm1174, %v1916, %v2086
        %v2151 = vsel %vm1175, %v1918, %v2087
        %v2152 = vsel %vm1176, %v1920, %v2088
        %v2153 = vsel %vm1177, %v1922, %v2089
        %v2154 = vsel %vm1178, %v1924, %v2090
        %v2155 = vsel %vm1179, %v1926, %v2091
        %v2156 = vsel %vm1180, %v1928, %v2092
        %v2157 = vsel %vm1181, %v1930, %v2093
        %v2158 = vsel %vm1182, %v1932, %v2094
        %v2159 = vsel %vm1183, %v1934, %v2095
        %v2160 = vsel %vm1184, %v1936, %v2096
        %v2161 = vsel %vm1185, %v1938, %v2097
        %v2162 = vsel %vm1186, %v1940, %v2098
        %v2163 = vsel %vm1187, %v1942, %v2099
        %v2164 = vsel %vm1188, %v1944, %v2100
        %v2165 = vsel %vm1189, %v1946, %v2101
        %v2166 = vsel %vm1190, %v1948, %v2102
        %v2167 = vsel %vm1191, %v1950, %v2103
        %v2168 = vsel %vm1192, %v1952, %v2104
        %v2169 = vsel %vm1193, %v1954, %v2105
        %v2170 = vsel %vm1194, %v1956, %v2106
        %v2171 = vsel %vm1195, %v1958, %v2107
        %v2172 = vsel %vm1196, %v1960, %v2108
        %v2173 = vsel %vm1197, %v1962, %v2109
        %v2174 = vsel %vm1198, %v1964, %v2110
        %v2175 = vsel %vm1199, %v1966, %v2111
        %v2176 = vsel %vm1200, %v1968, %v2112
        %v2177 = vsel %vm1201, %v1970, %v2113
        %v2178 = vsel %vm1202, %v1972, %v2114
        %v2179 = vsel %vm1203, %v1974, %v2115
        %v2180 = vsel %vm1204, %v1976, %v2116
        %v2181 = vsel %vm1205, %v1978, %v2117
        %v2182 = vsel %vm1206, %v1980, %v2118
        %v2183 = vsel %vm1207, %v1982, %v2119
        %v2184 = vsel %vm1208, %v1984, %v2120
        %v2185 = vsel %vm1209, %v1986, %v2121
        %v2186 = vsel %vm1210, %v1988, %v2122
        %v2187 = vsel %vm1211, %v1990, %v2123
        %v2188 = vsel %vm1212, %v1991, %v2124
        %v2189 = vld [vmem:[%s555] sm:$0x1]
        %v2190 = vld [vmem:[%s555 + $0x1] sm:$0x1]
        %v2191 = vld [vmem:[%s555 + $0x2] sm:$0x1]
        %v2192 = vld [vmem:[#allocation10] sm:$0x1]
        %v2193 = vlaneseq
        %v2194 = vshrl.u32 %v2193, 7
        %v2195 = vsub.s32 0, %v2194
        %v2196 = vrot.slane %v2189, %v2195
        %v2197 = vmul.f32 %v1475, %v2196
        %v2198 = vmul.f32 %v1476, %v2196
        %v2199 = vmul.f32 %v1477, %v2196
        %v2200 = vmul.f32 %v1478, %v2196
        %v2201 = vmul.f32 %v1479, %v2196
        %v2202 = vmul.f32 %v1480, %v2196
        %v2203 = vmul.f32 %v1481, %v2196
        %v2204 = vmul.f32 %v1482, %v2196
        %v2205 = vmul.f32 %v1483, %v2196
        %v2206 = vmul.f32 %v1484, %v2196
        %v2207 = vmul.f32 %v1485, %v2196
        %v2208 = vmul.f32 %v1486, %v2196
        %v2209 = vmul.f32 %v1487, %v2196
        %v2210 = vmul.f32 %v1488, %v2196
        %v2211 = vmul.f32 %v1489, %v2196
        %v2212 = vmul.f32 %v1490, %v2196
        %v2213 = vmul.f32 %v1491, %v2196
        %v2214 = vmul.f32 %v1492, %v2196
        %v2215 = vmul.f32 %v1493, %v2196
        %v2216 = vmul.f32 %v1494, %v2196
        %v2217 = vmul.f32 %v1495, %v2196
        %v2218 = vmul.f32 %v1496, %v2196
        %v2219 = vmul.f32 %v1497, %v2196
        %v2220 = vmul.f32 %v1498, %v2196
        %v2221 = vmul.f32 %v1499, %v2196
        %v2222 = vmul.f32 %v1500, %v2196
        %v2223 = vmul.f32 %v1501, %v2196
        %v2224 = vmul.f32 %v1502, %v2196
        %v2225 = vmul.f32 %v1503, %v2196
        %v2226 = vmul.f32 %v1504, %v2196
        %v2227 = vmul.f32 %v1505, %v2196
        %v2228 = vmul.f32 %v1506, %v2196
        %v2229 = vmul.f32 %v1507, %v2196
        %v2230 = vmul.f32 %v1508, %v2196
        %v2231 = vmul.f32 %v1509, %v2196
        %v2232 = vmul.f32 %v1510, %v2196
        %v2233 = vmul.f32 %v1511, %v2196
        %v2234 = vmul.f32 %v1512, %v2196
        %v2235 = vmul.f32 %v1513, %v2196
        %v2236 = vmul.f32 %v1514, %v2196
        %v2237 = vmul.f32 %v1515, %v2196
        %v2238 = vmul.f32 %v1516, %v2196
        %v2239 = vmul.f32 %v1517, %v2196
        %v2240 = vmul.f32 %v1518, %v2196
        %v2241 = vmul.f32 %v1519, %v2196
        %v2242 = vmul.f32 %v1520, %v2196
        %v2243 = vmul.f32 %v1521, %v2196
        %v2244 = vmul.f32 %v1522, %v2196
        %v2245 = vmul.f32 %v1523, %v2196
        %v2246 = vmul.f32 %v1524, %v2196
        %v2247 = vmul.f32 %v1525, %v2196
        %v2248 = vmul.f32 %v1526, %v2196
        %v2249 = vmul.f32 %v1527, %v2196
        %v2250 = vmul.f32 %v1528, %v2196
        %v2251 = vmul.f32 %v1529, %v2196
        %v2252 = vmul.f32 %v1530, %v2196
        %v2253 = vmul.f32 %v1531, %v2196
        %v2254 = vmul.f32 %v1532, %v2196
        %v2255 = vmul.f32 %v1533, %v2196
        %v2256 = vmul.f32 %v1534, %v2196
        %v2257 = vmul.f32 %v1535, %v2196
        %v2258 = vmul.f32 %v1536, %v2196
        %v2259 = vmul.f32 %v1537, %v2196
        %v2260 = vmul.f32 %v1538, %v2196
        %v2261 = vlaneseq
        %v2262 = vshrl.u32 %v2261, 7
        %v2263 = vsub.s32 0, %v2262
        %v2264 = vrot.slane %v2190, %v2263
        %v2265 = vmul.f32 %v1085, %v2264
        %v2266 = vmul.f32 %v1086, %v2264
        %v2267 = vmul.f32 %v1087, %v2264
        %v2268 = vmul.f32 %v1088, %v2264
        %v2269 = vmul.f32 %v1089, %v2264
        %v2270 = vmul.f32 %v1090, %v2264
        %v2271 = vmul.f32 %v1091, %v2264
        %v2272 = vmul.f32 %v1092, %v2264
        %v2273 = vmul.f32 %v1093, %v2264
        %v2274 = vmul.f32 %v1094, %v2264
        %v2275 = vmul.f32 %v1095, %v2264
        %v2276 = vmul.f32 %v1096, %v2264
        %v2277 = vmul.f32 %v1097, %v2264
        %v2278 = vmul.f32 %v1098, %v2264
        %v2279 = vmul.f32 %v1099, %v2264
        %v2280 = vmul.f32 %v1100, %v2264
        %v2281 = vmul.f32 %v1101, %v2264
        %v2282 = vmul.f32 %v1102, %v2264
        %v2283 = vmul.f32 %v1103, %v2264
        %v2284 = vmul.f32 %v1104, %v2264
        %v2285 = vmul.f32 %v1105, %v2264
        %v2286 = vmul.f32 %v1106, %v2264
        %v2287 = vmul.f32 %v1107, %v2264
        %v2288 = vmul.f32 %v1108, %v2264
        %v2289 = vmul.f32 %v1109, %v2264
        %v2290 = vmul.f32 %v1110, %v2264
        %v2291 = vmul.f32 %v1111, %v2264
        %v2292 = vmul.f32 %v1112, %v2264
        %v2293 = vmul.f32 %v1113, %v2264
        %v2294 = vmul.f32 %v1114, %v2264
        %v2295 = vmul.f32 %v1115, %v2264
        %v2296 = vmul.f32 %v1116, %v2264
        %v2297 = vmul.f32 %v1117, %v2264
        %v2298 = vmul.f32 %v1118, %v2264
        %v2299 = vmul.f32 %v1119, %v2264
        %v2300 = vmul.f32 %v1120, %v2264
        %v2301 = vmul.f32 %v1121, %v2264
        %v2302 = vmul.f32 %v1122, %v2264
        %v2303 = vmul.f32 %v1123, %v2264
        %v2304 = vmul.f32 %v1124, %v2264
        %v2305 = vmul.f32 %v1125, %v2264
        %v2306 = vmul.f32 %v1126, %v2264
        %v2307 = vmul.f32 %v1127, %v2264
        %v2308 = vmul.f32 %v1128, %v2264
        %v2309 = vmul.f32 %v1129, %v2264
        %v2310 = vmul.f32 %v1130, %v2264
        %v2311 = vmul.f32 %v1131, %v2264
        %v2312 = vmul.f32 %v1132, %v2264
        %v2313 = vmul.f32 %v1133, %v2264
        %v2314 = vmul.f32 %v1134, %v2264
        %v2315 = vmul.f32 %v1135, %v2264
        %v2316 = vmul.f32 %v1136, %v2264
        %v2317 = vmul.f32 %v1137, %v2264
        %v2318 = vmul.f32 %v1138, %v2264
        %v2319 = vmul.f32 %v1139, %v2264
        %v2320 = vmul.f32 %v1140, %v2264
        %v2321 = vmul.f32 %v1141, %v2264
        %v2322 = vmul.f32 %v1142, %v2264
        %v2323 = vmul.f32 %v1143, %v2264
        %v2324 = vmul.f32 %v1144, %v2264
        %v2325 = vmul.f32 %v1145, %v2264
        %v2326 = vmul.f32 %v1146, %v2264
        %v2327 = vmul.f32 %v1147, %v2264
        %v2328 = vmul.f32 %v1148, %v2264
        %v2329 = vadd.f32 %v2197, %v2265
        %v2330 = vadd.f32 %v2198, %v2266
        %v2331 = vadd.f32 %v2199, %v2267
        %v2332 = vadd.f32 %v2200, %v2268
        %v2333 = vadd.f32 %v2201, %v2269
        %v2334 = vadd.f32 %v2202, %v2270
        %v2335 = vadd.f32 %v2203, %v2271
        %v2336 = vadd.f32 %v2204, %v2272
        %v2337 = vadd.f32 %v2205, %v2273
        %v2338 = vadd.f32 %v2206, %v2274
        %v2339 = vadd.f32 %v2207, %v2275
        %v2340 = vadd.f32 %v2208, %v2276
        %v2341 = vadd.f32 %v2209, %v2277
        %v2342 = vadd.f32 %v2210, %v2278
        %v2343 = vadd.f32 %v2211, %v2279
        %v2344 = vadd.f32 %v2212, %v2280
        %v2345 = vadd.f32 %v2213, %v2281
        %v2346 = vadd.f32 %v2214, %v2282
        %v2347 = vadd.f32 %v2215, %v2283
        %v2348 = vadd.f32 %v2216, %v2284
        %v2349 = vadd.f32 %v2217, %v2285
        %v2350 = vadd.f32 %v2218, %v2286
        %v2351 = vadd.f32 %v2219, %v2287
        %v2352 = vadd.f32 %v2220, %v2288
        %v2353 = vadd.f32 %v2221, %v2289
        %v2354 = vadd.f32 %v2222, %v2290
        %v2355 = vadd.f32 %v2223, %v2291
        %v2356 = vadd.f32 %v2224, %v2292
        %v2357 = vadd.f32 %v2225, %v2293
        %v2358 = vadd.f32 %v2226, %v2294
        %v2359 = vadd.f32 %v2227, %v2295
        %v2360 = vadd.f32 %v2228, %v2296
        %v2361 = vadd.f32 %v2229, %v2297
        %v2362 = vadd.f32 %v2230, %v2298
        %v2363 = vadd.f32 %v2231, %v2299
        %v2364 = vadd.f32 %v2232, %v2300
        %v2365 = vadd.f32 %v2233, %v2301
        %v2366 = vadd.f32 %v2234, %v2302
        %v2367 = vadd.f32 %v2235, %v2303
        %v2368 = vadd.f32 %v2236, %v2304
        %v2369 = vadd.f32 %v2237, %v2305
        %v2370 = vadd.f32 %v2238, %v2306
        %v2371 = vadd.f32 %v2239, %v2307
        %v2372 = vadd.f32 %v2240, %v2308
        %v2373 = vadd.f32 %v2241, %v2309
        %v2374 = vadd.f32 %v2242, %v2310
        %v2375 = vadd.f32 %v2243, %v2311
        %v2376 = vadd.f32 %v2244, %v2312
        %v2377 = vadd.f32 %v2245, %v2313
        %v2378 = vadd.f32 %v2246, %v2314
        %v2379 = vadd.f32 %v2247, %v2315
        %v2380 = vadd.f32 %v2248, %v2316
        %v2381 = vadd.f32 %v2249, %v2317
        %v2382 = vadd.f32 %v2250, %v2318
        %v2383 = vadd.f32 %v2251, %v2319
        %v2384 = vadd.f32 %v2252, %v2320
        %v2385 = vadd.f32 %v2253, %v2321
        %v2386 = vadd.f32 %v2254, %v2322
        %v2387 = vadd.f32 %v2255, %v2323
        %v2388 = vadd.f32 %v2256, %v2324
        %v2389 = vadd.f32 %v2257, %v2325
        %v2390 = vadd.f32 %v2258, %v2326
        %v2391 = vadd.f32 %v2259, %v2327
        %v2392 = vadd.f32 %v2260, %v2328
        %v2393 = vlaneseq
        %v2394 = vshrl.u32 %v2393, 7
        %v2395 = vsub.s32 0, %v2394
        %v2396 = vrot.slane %v2191, %v2395
        %v2397 = vmul.f32 %v561, %v2396
        %v2398 = vmul.f32 %v562, %v2396
        %v2399 = vmul.f32 %v563, %v2396
        %v2400 = vmul.f32 %v564, %v2396
        %v2401 = vmul.f32 %v565, %v2396
        %v2402 = vmul.f32 %v566, %v2396
        %v2403 = vmul.f32 %v567, %v2396
        %v2404 = vmul.f32 %v568, %v2396
        %v2405 = vmul.f32 %v569, %v2396
        %v2406 = vmul.f32 %v570, %v2396
        %v2407 = vmul.f32 %v571, %v2396
        %v2408 = vmul.f32 %v572, %v2396
        %v2409 = vmul.f32 %v573, %v2396
        %v2410 = vmul.f32 %v574, %v2396
        %v2411 = vmul.f32 %v575, %v2396
        %v2412 = vmul.f32 %v576, %v2396
        %v2413 = vmul.f32 %v577, %v2396
        %v2414 = vmul.f32 %v578, %v2396
        %v2415 = vmul.f32 %v579, %v2396
        %v2416 = vmul.f32 %v580, %v2396
        %v2417 = vmul.f32 %v581, %v2396
        %v2418 = vmul.f32 %v582, %v2396
        %v2419 = vmul.f32 %v583, %v2396
        %v2420 = vmul.f32 %v584, %v2396
        %v2421 = vmul.f32 %v585, %v2396
        %v2422 = vmul.f32 %v586, %v2396
        %v2423 = vmul.f32 %v587, %v2396
        %v2424 = vmul.f32 %v588, %v2396
        %v2425 = vmul.f32 %v589, %v2396
        %v2426 = vmul.f32 %v590, %v2396
        %v2427 = vmul.f32 %v591, %v2396
        %v2428 = vmul.f32 %v592, %v2396
        %v2429 = vmul.f32 %v593, %v2396
        %v2430 = vmul.f32 %v594, %v2396
        %v2431 = vmul.f32 %v595, %v2396
        %v2432 = vmul.f32 %v596, %v2396
        %v2433 = vmul.f32 %v597, %v2396
        %v2434 = vmul.f32 %v598, %v2396
        %v2435 = vmul.f32 %v599, %v2396
        %v2436 = vmul.f32 %v600, %v2396
        %v2437 = vmul.f32 %v601, %v2396
        %v2438 = vmul.f32 %v602, %v2396
        %v2439 = vmul.f32 %v603, %v2396
        %v2440 = vmul.f32 %v604, %v2396
        %v2441 = vmul.f32 %v605, %v2396
        %v2442 = vmul.f32 %v606, %v2396
        %v2443 = vmul.f32 %v607, %v2396
        %v2444 = vmul.f32 %v608, %v2396
        %v2445 = vmul.f32 %v609, %v2396
        %v2446 = vmul.f32 %v610, %v2396
        %v2447 = vmul.f32 %v611, %v2396
        %v2448 = vmul.f32 %v612, %v2396
        %v2449 = vmul.f32 %v613, %v2396
        %v2450 = vmul.f32 %v614, %v2396
        %v2451 = vmul.f32 %v615, %v2396
        %v2452 = vmul.f32 %v616, %v2396
        %v2453 = vmul.f32 %v617, %v2396
        %v2454 = vmul.f32 %v618, %v2396
        %v2455 = vmul.f32 %v619, %v2396
        %v2456 = vmul.f32 %v620, %v2396
        %v2457 = vmul.f32 %v621, %v2396
        %v2458 = vmul.f32 %v622, %v2396
        %v2459 = vmul.f32 %v623, %v2396
        %v2460 = vmul.f32 %v624, %v2396
        %v2461 = vadd.f32 %v2329, %v2397
        %v2462 = vadd.f32 %v2330, %v2398
        %v2463 = vadd.f32 %v2331, %v2399
        %v2464 = vadd.f32 %v2332, %v2400
        %v2465 = vadd.f32 %v2333, %v2401
        %v2466 = vadd.f32 %v2334, %v2402
        %v2467 = vadd.f32 %v2335, %v2403
        %v2468 = vadd.f32 %v2336, %v2404
        %v2469 = vadd.f32 %v2337, %v2405
        %v2470 = vadd.f32 %v2338, %v2406
        %v2471 = vadd.f32 %v2339, %v2407
        %v2472 = vadd.f32 %v2340, %v2408
        %v2473 = vadd.f32 %v2341, %v2409
        %v2474 = vadd.f32 %v2342, %v2410
        %v2475 = vadd.f32 %v2343, %v2411
        %v2476 = vadd.f32 %v2344, %v2412
        %v2477 = vadd.f32 %v2345, %v2413
        %v2478 = vadd.f32 %v2346, %v2414
        %v2479 = vadd.f32 %v2347, %v2415
        %v2480 = vadd.f32 %v2348, %v2416
        %v2481 = vadd.f32 %v2349, %v2417
        %v2482 = vadd.f32 %v2350, %v2418
        %v2483 = vadd.f32 %v2351, %v2419
        %v2484 = vadd.f32 %v2352, %v2420
        %v2485 = vadd.f32 %v2353, %v2421
        %v2486 = vadd.f32 %v2354, %v2422
        %v2487 = vadd.f32 %v2355, %v2423
        %v2488 = vadd.f32 %v2356, %v2424
        %v2489 = vadd.f32 %v2357, %v2425
        %v2490 = vadd.f32 %v2358, %v2426
        %v2491 = vadd.f32 %v2359, %v2427
        %v2492 = vadd.f32 %v2360, %v2428
        %v2493 = vadd.f32 %v2361, %v2429
        %v2494 = vadd.f32 %v2362, %v2430
        %v2495 = vadd.f32 %v2363, %v2431
        %v2496 = vadd.f32 %v2364, %v2432
        %v2497 = vadd.f32 %v2365, %v2433
        %v2498 = vadd.f32 %v2366, %v2434
        %v2499 = vadd.f32 %v2367, %v2435
        %v2500 = vadd.f32 %v2368, %v2436
        %v2501 = vadd.f32 %v2369, %v2437
        %v2502 = vadd.f32 %v2370, %v2438
        %v2503 = vadd.f32 %v2371, %v2439
        %v2504 = vadd.f32 %v2372, %v2440
        %v2505 = vadd.f32 %v2373, %v2441
        %v2506 = vadd.f32 %v2374, %v2442
        %v2507 = vadd.f32 %v2375, %v2443
        %v2508 = vadd.f32 %v2376, %v2444
        %v2509 = vadd.f32 %v2377, %v2445
        %v2510 = vadd.f32 %v2378, %v2446
        %v2511 = vadd.f32 %v2379, %v2447
        %v2512 = vadd.f32 %v2380, %v2448
        %v2513 = vadd.f32 %v2381, %v2449
        %v2514 = vadd.f32 %v2382, %v2450
        %v2515 = vadd.f32 %v2383, %v2451
        %v2516 = vadd.f32 %v2384, %v2452
        %v2517 = vadd.f32 %v2385, %v2453
        %v2518 = vadd.f32 %v2386, %v2454
        %v2519 = vadd.f32 %v2387, %v2455
        %v2520 = vadd.f32 %v2388, %v2456
        %v2521 = vadd.f32 %v2389, %v2457
        %v2522 = vadd.f32 %v2390, %v2458
        %v2523 = vadd.f32 %v2391, %v2459
        %v2524 = vadd.f32 %v2392, %v2460
        %v2525 = vlaneseq
        %v2526 = vshrl.u32 %v2525, 7
        %v2527 = vsub.s32 0, %v2526
        %v2528 = vrot.slane %v2192, %v2527
        %v2529 = vadd.f32 %v2461, %v2528
        %v2530 = vadd.f32 %v2462, %v2528
        %v2531 = vadd.f32 %v2463, %v2528
        %v2532 = vadd.f32 %v2464, %v2528
        %v2533 = vadd.f32 %v2465, %v2528
        %v2534 = vadd.f32 %v2466, %v2528
        %v2535 = vadd.f32 %v2467, %v2528
        %v2536 = vadd.f32 %v2468, %v2528
        %v2537 = vadd.f32 %v2469, %v2528
        %v2538 = vadd.f32 %v2470, %v2528
        %v2539 = vadd.f32 %v2471, %v2528
        %v2540 = vadd.f32 %v2472, %v2528
        %v2541 = vadd.f32 %v2473, %v2528
        %v2542 = vadd.f32 %v2474, %v2528
        %v2543 = vadd.f32 %v2475, %v2528
        %v2544 = vadd.f32 %v2476, %v2528
        %v2545 = vadd.f32 %v2477, %v2528
        %v2546 = vadd.f32 %v2478, %v2528
        %v2547 = vadd.f32 %v2479, %v2528
        %v2548 = vadd.f32 %v2480, %v2528
        %v2549 = vadd.f32 %v2481, %v2528
        %v2550 = vadd.f32 %v2482, %v2528
        %v2551 = vadd.f32 %v2483, %v2528
        %v2552 = vadd.f32 %v2484, %v2528
        %v2553 = vadd.f32 %v2485, %v2528
        %v2554 = vadd.f32 %v2486, %v2528
        %v2555 = vadd.f32 %v2487, %v2528
        %v2556 = vadd.f32 %v2488, %v2528
        %v2557 = vadd.f32 %v2489, %v2528
        %v2558 = vadd.f32 %v2490, %v2528
        %v2559 = vadd.f32 %v2491, %v2528
        %v2560 = vadd.f32 %v2492, %v2528
        %v2561 = vadd.f32 %v2493, %v2528
        %v2562 = vadd.f32 %v2494, %v2528
        %v2563 = vadd.f32 %v2495, %v2528
        %v2564 = vadd.f32 %v2496, %v2528
        %v2565 = vadd.f32 %v2497, %v2528
        %v2566 = vadd.f32 %v2498, %v2528
        %v2567 = vadd.f32 %v2499, %v2528
        %v2568 = vadd.f32 %v2500, %v2528
        %v2569 = vadd.f32 %v2501, %v2528
        %v2570 = vadd.f32 %v2502, %v2528
        %v2571 = vadd.f32 %v2503, %v2528
        %v2572 = vadd.f32 %v2504, %v2528
        %v2573 = vadd.f32 %v2505, %v2528
        %v2574 = vadd.f32 %v2506, %v2528
        %v2575 = vadd.f32 %v2507, %v2528
        %v2576 = vadd.f32 %v2508, %v2528
        %v2577 = vadd.f32 %v2509, %v2528
        %v2578 = vadd.f32 %v2510, %v2528
        %v2579 = vadd.f32 %v2511, %v2528
        %v2580 = vadd.f32 %v2512, %v2528
        %v2581 = vadd.f32 %v2513, %v2528
        %v2582 = vadd.f32 %v2514, %v2528
        %v2583 = vadd.f32 %v2515, %v2528
        %v2584 = vadd.f32 %v2516, %v2528
        %v2585 = vadd.f32 %v2517, %v2528
        %v2586 = vadd.f32 %v2518, %v2528
        %v2587 = vadd.f32 %v2519, %v2528
        %v2588 = vadd.f32 %v2520, %v2528
        %v2589 = vadd.f32 %v2521, %v2528
        %v2590 = vadd.f32 %v2522, %v2528
        %v2591 = vadd.f32 %v2523, %v2528
        %v2592 = vadd.f32 %v2524, %v2528
        %s2593 = scalar_lea.vmem %s555, 4
        %v2594 = vld [vmem:[%s2593] sm:$0x1]
        %v2595 = vld [vmem:[%s2593 + $0x1] sm:$0x1]
        %v2596 = vld [vmem:[%s2593 + $0x2] sm:$0x1]
        %v2597 = vld [vmem:[#allocation10 + $0x1] sm:$0x1]
        %v2598 = vlaneseq
        %v2599 = vshrl.u32 %v2598, 7
        %v2600 = vsub.s32 0, %v2599
        %v2601 = vrot.slane %v2594, %v2600
        %v2602 = vmul.f32 %v1475, %v2601
        %v2603 = vmul.f32 %v1476, %v2601
        %v2604 = vmul.f32 %v1477, %v2601
        %v2605 = vmul.f32 %v1478, %v2601
        %v2606 = vmul.f32 %v1479, %v2601
        %v2607 = vmul.f32 %v1480, %v2601
        %v2608 = vmul.f32 %v1481, %v2601
        %v2609 = vmul.f32 %v1482, %v2601
        %v2610 = vmul.f32 %v1483, %v2601
        %v2611 = vmul.f32 %v1484, %v2601
        %v2612 = vmul.f32 %v1485, %v2601
        %v2613 = vmul.f32 %v1486, %v2601
        %v2614 = vmul.f32 %v1487, %v2601
        %v2615 = vmul.f32 %v1488, %v2601
        %v2616 = vmul.f32 %v1489, %v2601
        %v2617 = vmul.f32 %v1490, %v2601
        %v2618 = vmul.f32 %v1491, %v2601
        %v2619 = vmul.f32 %v1492, %v2601
        %v2620 = vmul.f32 %v1493, %v2601
        %v2621 = vmul.f32 %v1494, %v2601
        %v2622 = vmul.f32 %v1495, %v2601
        %v2623 = vmul.f32 %v1496, %v2601
        %v2624 = vmul.f32 %v1497, %v2601
        %v2625 = vmul.f32 %v1498, %v2601
        %v2626 = vmul.f32 %v1499, %v2601
        %v2627 = vmul.f32 %v1500, %v2601
        %v2628 = vmul.f32 %v1501, %v2601
        %v2629 = vmul.f32 %v1502, %v2601
        %v2630 = vmul.f32 %v1503, %v2601
        %v2631 = vmul.f32 %v1504, %v2601
        %v2632 = vmul.f32 %v1505, %v2601
        %v2633 = vmul.f32 %v1506, %v2601
        %v2634 = vmul.f32 %v1507, %v2601
        %v2635 = vmul.f32 %v1508, %v2601
        %v2636 = vmul.f32 %v1509, %v2601
        %v2637 = vmul.f32 %v1510, %v2601
        %v2638 = vmul.f32 %v1511, %v2601
        %v2639 = vmul.f32 %v1512, %v2601
        %v2640 = vmul.f32 %v1513, %v2601
        %v2641 = vmul.f32 %v1514, %v2601
        %v2642 = vmul.f32 %v1515, %v2601
        %v2643 = vmul.f32 %v1516, %v2601
        %v2644 = vmul.f32 %v1517, %v2601
        %v2645 = vmul.f32 %v1518, %v2601
        %v2646 = vmul.f32 %v1519, %v2601
        %v2647 = vmul.f32 %v1520, %v2601
        %v2648 = vmul.f32 %v1521, %v2601
        %v2649 = vmul.f32 %v1522, %v2601
        %v2650 = vmul.f32 %v1523, %v2601
        %v2651 = vmul.f32 %v1524, %v2601
        %v2652 = vmul.f32 %v1525, %v2601
        %v2653 = vmul.f32 %v1526, %v2601
        %v2654 = vmul.f32 %v1527, %v2601
        %v2655 = vmul.f32 %v1528, %v2601
        %v2656 = vmul.f32 %v1529, %v2601
        %v2657 = vmul.f32 %v1530, %v2601
        %v2658 = vmul.f32 %v1531, %v2601
        %v2659 = vmul.f32 %v1532, %v2601
        %v2660 = vmul.f32 %v1533, %v2601
        %v2661 = vmul.f32 %v1534, %v2601
        %v2662 = vmul.f32 %v1535, %v2601
        %v2663 = vmul.f32 %v1536, %v2601
        %v2664 = vmul.f32 %v1537, %v2601
        %v2665 = vmul.f32 %v1538, %v2601
        %v2666 = vlaneseq
        %v2667 = vshrl.u32 %v2666, 7
        %v2668 = vsub.s32 0, %v2667
        %v2669 = vrot.slane %v2595, %v2668
        %v2670 = vmul.f32 %v1085, %v2669
        %v2671 = vmul.f32 %v1086, %v2669
        %v2672 = vmul.f32 %v1087, %v2669
        %v2673 = vmul.f32 %v1088, %v2669
        %v2674 = vmul.f32 %v1089, %v2669
        %v2675 = vmul.f32 %v1090, %v2669
        %v2676 = vmul.f32 %v1091, %v2669
        %v2677 = vmul.f32 %v1092, %v2669
        %v2678 = vmul.f32 %v1093, %v2669
        %v2679 = vmul.f32 %v1094, %v2669
        %v2680 = vmul.f32 %v1095, %v2669
        %v2681 = vmul.f32 %v1096, %v2669
        %v2682 = vmul.f32 %v1097, %v2669
        %v2683 = vmul.f32 %v1098, %v2669
        %v2684 = vmul.f32 %v1099, %v2669
        %v2685 = vmul.f32 %v1100, %v2669
        %v2686 = vmul.f32 %v1101, %v2669
        %v2687 = vmul.f32 %v1102, %v2669
        %v2688 = vmul.f32 %v1103, %v2669
        %v2689 = vmul.f32 %v1104, %v2669
        %v2690 = vmul.f32 %v1105, %v2669
        %v2691 = vmul.f32 %v1106, %v2669
        %v2692 = vmul.f32 %v1107, %v2669
        %v2693 = vmul.f32 %v1108, %v2669
        %v2694 = vmul.f32 %v1109, %v2669
        %v2695 = vmul.f32 %v1110, %v2669
        %v2696 = vmul.f32 %v1111, %v2669
        %v2697 = vmul.f32 %v1112, %v2669
        %v2698 = vmul.f32 %v1113, %v2669
        %v2699 = vmul.f32 %v1114, %v2669
        %v2700 = vmul.f32 %v1115, %v2669
        %v2701 = vmul.f32 %v1116, %v2669
        %v2702 = vmul.f32 %v1117, %v2669
        %v2703 = vmul.f32 %v1118, %v2669
        %v2704 = vmul.f32 %v1119, %v2669
        %v2705 = vmul.f32 %v1120, %v2669
        %v2706 = vmul.f32 %v1121, %v2669
        %v2707 = vmul.f32 %v1122, %v2669
        %v2708 = vmul.f32 %v1123, %v2669
        %v2709 = vmul.f32 %v1124, %v2669
        %v2710 = vmul.f32 %v1125, %v2669
        %v2711 = vmul.f32 %v1126, %v2669
        %v2712 = vmul.f32 %v1127, %v2669
        %v2713 = vmul.f32 %v1128, %v2669
        %v2714 = vmul.f32 %v1129, %v2669
        %v2715 = vmul.f32 %v1130, %v2669
        %v2716 = vmul.f32 %v1131, %v2669
        %v2717 = vmul.f32 %v1132, %v2669
        %v2718 = vmul.f32 %v1133, %v2669
        %v2719 = vmul.f32 %v1134, %v2669
        %v2720 = vmul.f32 %v1135, %v2669
        %v2721 = vmul.f32 %v1136, %v2669
        %v2722 = vmul.f32 %v1137, %v2669
        %v2723 = vmul.f32 %v1138, %v2669
        %v2724 = vmul.f32 %v1139, %v2669
        %v2725 = vmul.f32 %v1140, %v2669
        %v2726 = vmul.f32 %v1141, %v2669
        %v2727 = vmul.f32 %v1142, %v2669
        %v2728 = vmul.f32 %v1143, %v2669
        %v2729 = vmul.f32 %v1144, %v2669
        %v2730 = vmul.f32 %v1145, %v2669
        %v2731 = vmul.f32 %v1146, %v2669
        %v2732 = vmul.f32 %v1147, %v2669
        %v2733 = vmul.f32 %v1148, %v2669
        %v2734 = vadd.f32 %v2602, %v2670
        %v2735 = vadd.f32 %v2603, %v2671
        %v2736 = vadd.f32 %v2604, %v2672
        %v2737 = vadd.f32 %v2605, %v2673
        %v2738 = vadd.f32 %v2606, %v2674
        %v2739 = vadd.f32 %v2607, %v2675
        %v2740 = vadd.f32 %v2608, %v2676
        %v2741 = vadd.f32 %v2609, %v2677
        %v2742 = vadd.f32 %v2610, %v2678
        %v2743 = vadd.f32 %v2611, %v2679
        %v2744 = vadd.f32 %v2612, %v2680
        %v2745 = vadd.f32 %v2613, %v2681
        %v2746 = vadd.f32 %v2614, %v2682
        %v2747 = vadd.f32 %v2615, %v2683
        %v2748 = vadd.f32 %v2616, %v2684
        %v2749 = vadd.f32 %v2617, %v2685
        %v2750 = vadd.f32 %v2618, %v2686
        %v2751 = vadd.f32 %v2619, %v2687
        %v2752 = vadd.f32 %v2620, %v2688
        %v2753 = vadd.f32 %v2621, %v2689
        %v2754 = vadd.f32 %v2622, %v2690
        %v2755 = vadd.f32 %v2623, %v2691
        %v2756 = vadd.f32 %v2624, %v2692
        %v2757 = vadd.f32 %v2625, %v2693
        %v2758 = vadd.f32 %v2626, %v2694
        %v2759 = vadd.f32 %v2627, %v2695
        %v2760 = vadd.f32 %v2628, %v2696
        %v2761 = vadd.f32 %v2629, %v2697
        %v2762 = vadd.f32 %v2630, %v2698
        %v2763 = vadd.f32 %v2631, %v2699
        %v2764 = vadd.f32 %v2632, %v2700
        %v2765 = vadd.f32 %v2633, %v2701
        %v2766 = vadd.f32 %v2634, %v2702
        %v2767 = vadd.f32 %v2635, %v2703
        %v2768 = vadd.f32 %v2636, %v2704
        %v2769 = vadd.f32 %v2637, %v2705
        %v2770 = vadd.f32 %v2638, %v2706
        %v2771 = vadd.f32 %v2639, %v2707
        %v2772 = vadd.f32 %v2640, %v2708
        %v2773 = vadd.f32 %v2641, %v2709
        %v2774 = vadd.f32 %v2642, %v2710
        %v2775 = vadd.f32 %v2643, %v2711
        %v2776 = vadd.f32 %v2644, %v2712
        %v2777 = vadd.f32 %v2645, %v2713
        %v2778 = vadd.f32 %v2646, %v2714
        %v2779 = vadd.f32 %v2647, %v2715
        %v2780 = vadd.f32 %v2648, %v2716
        %v2781 = vadd.f32 %v2649, %v2717
        %v2782 = vadd.f32 %v2650, %v2718
        %v2783 = vadd.f32 %v2651, %v2719
        %v2784 = vadd.f32 %v2652, %v2720
        %v2785 = vadd.f32 %v2653, %v2721
        %v2786 = vadd.f32 %v2654, %v2722
        %v2787 = vadd.f32 %v2655, %v2723
        %v2788 = vadd.f32 %v2656, %v2724
        %v2789 = vadd.f32 %v2657, %v2725
        %v2790 = vadd.f32 %v2658, %v2726
        %v2791 = vadd.f32 %v2659, %v2727
        %v2792 = vadd.f32 %v2660, %v2728
        %v2793 = vadd.f32 %v2661, %v2729
        %v2794 = vadd.f32 %v2662, %v2730
        %v2795 = vadd.f32 %v2663, %v2731
        %v2796 = vadd.f32 %v2664, %v2732
        %v2797 = vadd.f32 %v2665, %v2733
        %v2798 = vlaneseq
        %v2799 = vshrl.u32 %v2798, 7
        %v2800 = vsub.s32 0, %v2799
        %v2801 = vrot.slane %v2596, %v2800
        %v2802 = vmul.f32 %v561, %v2801
        %v2803 = vmul.f32 %v562, %v2801
        %v2804 = vmul.f32 %v563, %v2801
        %v2805 = vmul.f32 %v564, %v2801
        %v2806 = vmul.f32 %v565, %v2801
        %v2807 = vmul.f32 %v566, %v2801
        %v2808 = vmul.f32 %v567, %v2801
        %v2809 = vmul.f32 %v568, %v2801
        %v2810 = vmul.f32 %v569, %v2801
        %v2811 = vmul.f32 %v570, %v2801
        %v2812 = vmul.f32 %v571, %v2801
        %v2813 = vmul.f32 %v572, %v2801
        %v2814 = vmul.f32 %v573, %v2801
        %v2815 = vmul.f32 %v574, %v2801
        %v2816 = vmul.f32 %v575, %v2801
        %v2817 = vmul.f32 %v576, %v2801
        %v2818 = vmul.f32 %v577, %v2801
        %v2819 = vmul.f32 %v578, %v2801
        %v2820 = vmul.f32 %v579, %v2801
        %v2821 = vmul.f32 %v580, %v2801
        %v2822 = vmul.f32 %v581, %v2801
        %v2823 = vmul.f32 %v582, %v2801
        %v2824 = vmul.f32 %v583, %v2801
        %v2825 = vmul.f32 %v584, %v2801
        %v2826 = vmul.f32 %v585, %v2801
        %v2827 = vmul.f32 %v586, %v2801
        %v2828 = vmul.f32 %v587, %v2801
        %v2829 = vmul.f32 %v588, %v2801
        %v2830 = vmul.f32 %v589, %v2801
        %v2831 = vmul.f32 %v590, %v2801
        %v2832 = vmul.f32 %v591, %v2801
        %v2833 = vmul.f32 %v592, %v2801
        %v2834 = vmul.f32 %v593, %v2801
        %v2835 = vmul.f32 %v594, %v2801
        %v2836 = vmul.f32 %v595, %v2801
        %v2837 = vmul.f32 %v596, %v2801
        %v2838 = vmul.f32 %v597, %v2801
        %v2839 = vmul.f32 %v598, %v2801
        %v2840 = vmul.f32 %v599, %v2801
        %v2841 = vmul.f32 %v600, %v2801
        %v2842 = vmul.f32 %v601, %v2801
        %v2843 = vmul.f32 %v602, %v2801
        %v2844 = vmul.f32 %v603, %v2801
        %v2845 = vmul.f32 %v604, %v2801
        %v2846 = vmul.f32 %v605, %v2801
        %v2847 = vmul.f32 %v606, %v2801
        %v2848 = vmul.f32 %v607, %v2801
        %v2849 = vmul.f32 %v608, %v2801
        %v2850 = vmul.f32 %v609, %v2801
        %v2851 = vmul.f32 %v610, %v2801
        %v2852 = vmul.f32 %v611, %v2801
        %v2853 = vmul.f32 %v612, %v2801
        %v2854 = vmul.f32 %v613, %v2801
        %v2855 = vmul.f32 %v614, %v2801
        %v2856 = vmul.f32 %v615, %v2801
        %v2857 = vmul.f32 %v616, %v2801
        %v2858 = vmul.f32 %v617, %v2801
        %v2859 = vmul.f32 %v618, %v2801
        %v2860 = vmul.f32 %v619, %v2801
        %v2861 = vmul.f32 %v620, %v2801
        %v2862 = vmul.f32 %v621, %v2801
        %v2863 = vmul.f32 %v622, %v2801
        %v2864 = vmul.f32 %v623, %v2801
        %v2865 = vmul.f32 %v624, %v2801
        %v2866 = vadd.f32 %v2734, %v2802
        %v2867 = vadd.f32 %v2735, %v2803
        %v2868 = vadd.f32 %v2736, %v2804
        %v2869 = vadd.f32 %v2737, %v2805
        %v2870 = vadd.f32 %v2738, %v2806
        %v2871 = vadd.f32 %v2739, %v2807
        %v2872 = vadd.f32 %v2740, %v2808
        %v2873 = vadd.f32 %v2741, %v2809
        %v2874 = vadd.f32 %v2742, %v2810
        %v2875 = vadd.f32 %v2743, %v2811
        %v2876 = vadd.f32 %v2744, %v2812
        %v2877 = vadd.f32 %v2745, %v2813
        %v2878 = vadd.f32 %v2746, %v2814
        %v2879 = vadd.f32 %v2747, %v2815
        %v2880 = vadd.f32 %v2748, %v2816
        %v2881 = vadd.f32 %v2749, %v2817
        %v2882 = vadd.f32 %v2750, %v2818
        %v2883 = vadd.f32 %v2751, %v2819
        %v2884 = vadd.f32 %v2752, %v2820
        %v2885 = vadd.f32 %v2753, %v2821
        %v2886 = vadd.f32 %v2754, %v2822
        %v2887 = vadd.f32 %v2755, %v2823
        %v2888 = vadd.f32 %v2756, %v2824
        %v2889 = vadd.f32 %v2757, %v2825
        %v2890 = vadd.f32 %v2758, %v2826
        %v2891 = vadd.f32 %v2759, %v2827
        %v2892 = vadd.f32 %v2760, %v2828
        %v2893 = vadd.f32 %v2761, %v2829
        %v2894 = vadd.f32 %v2762, %v2830
        %v2895 = vadd.f32 %v2763, %v2831
        %v2896 = vadd.f32 %v2764, %v2832
        %v2897 = vadd.f32 %v2765, %v2833
        %v2898 = vadd.f32 %v2766, %v2834
        %v2899 = vadd.f32 %v2767, %v2835
        %v2900 = vadd.f32 %v2768, %v2836
        %v2901 = vadd.f32 %v2769, %v2837
        %v2902 = vadd.f32 %v2770, %v2838
        %v2903 = vadd.f32 %v2771, %v2839
        %v2904 = vadd.f32 %v2772, %v2840
        %v2905 = vadd.f32 %v2773, %v2841
        %v2906 = vadd.f32 %v2774, %v2842
        %v2907 = vadd.f32 %v2775, %v2843
        %v2908 = vadd.f32 %v2776, %v2844
        %v2909 = vadd.f32 %v2777, %v2845
        %v2910 = vadd.f32 %v2778, %v2846
        %v2911 = vadd.f32 %v2779, %v2847
        %v2912 = vadd.f32 %v2780, %v2848
        %v2913 = vadd.f32 %v2781, %v2849
        %v2914 = vadd.f32 %v2782, %v2850
        %v2915 = vadd.f32 %v2783, %v2851
        %v2916 = vadd.f32 %v2784, %v2852
        %v2917 = vadd.f32 %v2785, %v2853
        %v2918 = vadd.f32 %v2786, %v2854
        %v2919 = vadd.f32 %v2787, %v2855
        %v2920 = vadd.f32 %v2788, %v2856
        %v2921 = vadd.f32 %v2789, %v2857
        %v2922 = vadd.f32 %v2790, %v2858
        %v2923 = vadd.f32 %v2791, %v2859
        %v2924 = vadd.f32 %v2792, %v2860
        %v2925 = vadd.f32 %v2793, %v2861
        %v2926 = vadd.f32 %v2794, %v2862
        %v2927 = vadd.f32 %v2795, %v2863
        %v2928 = vadd.f32 %v2796, %v2864
        %v2929 = vadd.f32 %v2797, %v2865
        %v2930 = vlaneseq
        %v2931 = vshrl.u32 %v2930, 7
        %v2932 = vsub.s32 0, %v2931
        %v2933 = vrot.slane %v2597, %v2932
        %v2934 = vadd.f32 %v2866, %v2933
        %v2935 = vadd.f32 %v2867, %v2933
        %v2936 = vadd.f32 %v2868, %v2933
        %v2937 = vadd.f32 %v2869, %v2933
        %v2938 = vadd.f32 %v2870, %v2933
        %v2939 = vadd.f32 %v2871, %v2933
        %v2940 = vadd.f32 %v2872, %v2933
        %v2941 = vadd.f32 %v2873, %v2933
        %v2942 = vadd.f32 %v2874, %v2933
        %v2943 = vadd.f32 %v2875, %v2933
        %v2944 = vadd.f32 %v2876, %v2933
        %v2945 = vadd.f32 %v2877, %v2933
        %v2946 = vadd.f32 %v2878, %v2933
        %v2947 = vadd.f32 %v2879, %v2933
        %v2948 = vadd.f32 %v2880, %v2933
        %v2949 = vadd.f32 %v2881, %v2933
        %v2950 = vadd.f32 %v2882, %v2933
        %v2951 = vadd.f32 %v2883, %v2933
        %v2952 = vadd.f32 %v2884, %v2933
        %v2953 = vadd.f32 %v2885, %v2933
        %v2954 = vadd.f32 %v2886, %v2933
        %v2955 = vadd.f32 %v2887, %v2933
        %v2956 = vadd.f32 %v2888, %v2933
        %v2957 = vadd.f32 %v2889, %v2933
        %v2958 = vadd.f32 %v2890, %v2933
        %v2959 = vadd.f32 %v2891, %v2933
        %v2960 = vadd.f32 %v2892, %v2933
        %v2961 = vadd.f32 %v2893, %v2933
        %v2962 = vadd.f32 %v2894, %v2933
        %v2963 = vadd.f32 %v2895, %v2933
        %v2964 = vadd.f32 %v2896, %v2933
        %v2965 = vadd.f32 %v2897, %v2933
        %v2966 = vadd.f32 %v2898, %v2933
        %v2967 = vadd.f32 %v2899, %v2933
        %v2968 = vadd.f32 %v2900, %v2933
        %v2969 = vadd.f32 %v2901, %v2933
        %v2970 = vadd.f32 %v2902, %v2933
        %v2971 = vadd.f32 %v2903, %v2933
        %v2972 = vadd.f32 %v2904, %v2933
        %v2973 = vadd.f32 %v2905, %v2933
        %v2974 = vadd.f32 %v2906, %v2933
        %v2975 = vadd.f32 %v2907, %v2933
        %v2976 = vadd.f32 %v2908, %v2933
        %v2977 = vadd.f32 %v2909, %v2933
        %v2978 = vadd.f32 %v2910, %v2933
        %v2979 = vadd.f32 %v2911, %v2933
        %v2980 = vadd.f32 %v2912, %v2933
        %v2981 = vadd.f32 %v2913, %v2933
        %v2982 = vadd.f32 %v2914, %v2933
        %v2983 = vadd.f32 %v2915, %v2933
        %v2984 = vadd.f32 %v2916, %v2933
        %v2985 = vadd.f32 %v2917, %v2933
        %v2986 = vadd.f32 %v2918, %v2933
        %v2987 = vadd.f32 %v2919, %v2933
        %v2988 = vadd.f32 %v2920, %v2933
        %v2989 = vadd.f32 %v2921, %v2933
        %v2990 = vadd.f32 %v2922, %v2933
        %v2991 = vadd.f32 %v2923, %v2933
        %v2992 = vadd.f32 %v2924, %v2933
        %v2993 = vadd.f32 %v2925, %v2933
        %v2994 = vadd.f32 %v2926, %v2933
        %v2995 = vadd.f32 %v2927, %v2933
        %v2996 = vadd.f32 %v2928, %v2933
        %v2997 = vadd.f32 %v2929, %v2933
        %s2998 = scalar_lea.vmem %s555, 8
        %v2999 = vld [vmem:[%s2998] sm:$0x1]
        %v3000 = vld [vmem:[%s2998 + $0x1] sm:$0x1]
        %v3001 = vld [vmem:[%s2998 + $0x2] sm:$0x1]
        %v3002 = vld [vmem:[#allocation10 + $0x2] sm:$0x1]
        %v3003 = vlaneseq
        %v3004 = vshrl.u32 %v3003, 7
        %v3005 = vsub.s32 0, %v3004
        %v3006 = vrot.slane %v2999, %v3005
        %v3007 = vmul.f32 %v2125, %v3006
        %v3008 = vmul.f32 %v2126, %v3006
        %v3009 = vmul.f32 %v2127, %v3006
        %v3010 = vmul.f32 %v2128, %v3006
        %v3011 = vmul.f32 %v2129, %v3006
        %v3012 = vmul.f32 %v2130, %v3006
        %v3013 = vmul.f32 %v2131, %v3006
        %v3014 = vmul.f32 %v2132, %v3006
        %v3015 = vmul.f32 %v2133, %v3006
        %v3016 = vmul.f32 %v2134, %v3006
        %v3017 = vmul.f32 %v2135, %v3006
        %v3018 = vmul.f32 %v2136, %v3006
        %v3019 = vmul.f32 %v2137, %v3006
        %v3020 = vmul.f32 %v2138, %v3006
        %v3021 = vmul.f32 %v2139, %v3006
        %v3022 = vmul.f32 %v2140, %v3006
        %v3023 = vmul.f32 %v2141, %v3006
        %v3024 = vmul.f32 %v2142, %v3006
        %v3025 = vmul.f32 %v2143, %v3006
        %v3026 = vmul.f32 %v2144, %v3006
        %v3027 = vmul.f32 %v2145, %v3006
        %v3028 = vmul.f32 %v2146, %v3006
        %v3029 = vmul.f32 %v2147, %v3006
        %v3030 = vmul.f32 %v2148, %v3006
        %v3031 = vmul.f32 %v2149, %v3006
        %v3032 = vmul.f32 %v2150, %v3006
        %v3033 = vmul.f32 %v2151, %v3006
        %v3034 = vmul.f32 %v2152, %v3006
        %v3035 = vmul.f32 %v2153, %v3006
        %v3036 = vmul.f32 %v2154, %v3006
        %v3037 = vmul.f32 %v2155, %v3006
        %v3038 = vmul.f32 %v2156, %v3006
        %v3039 = vmul.f32 %v2157, %v3006
        %v3040 = vmul.f32 %v2158, %v3006
        %v3041 = vmul.f32 %v2159, %v3006
        %v3042 = vmul.f32 %v2160, %v3006
        %v3043 = vmul.f32 %v2161, %v3006
        %v3044 = vmul.f32 %v2162, %v3006
        %v3045 = vmul.f32 %v2163, %v3006
        %v3046 = vmul.f32 %v2164, %v3006
        %v3047 = vmul.f32 %v2165, %v3006
        %v3048 = vmul.f32 %v2166, %v3006
        %v3049 = vmul.f32 %v2167, %v3006
        %v3050 = vmul.f32 %v2168, %v3006
        %v3051 = vmul.f32 %v2169, %v3006
        %v3052 = vmul.f32 %v2170, %v3006
        %v3053 = vmul.f32 %v2171, %v3006
        %v3054 = vmul.f32 %v2172, %v3006
        %v3055 = vmul.f32 %v2173, %v3006
        %v3056 = vmul.f32 %v2174, %v3006
        %v3057 = vmul.f32 %v2175, %v3006
        %v3058 = vmul.f32 %v2176, %v3006
        %v3059 = vmul.f32 %v2177, %v3006
        %v3060 = vmul.f32 %v2178, %v3006
        %v3061 = vmul.f32 %v2179, %v3006
        %v3062 = vmul.f32 %v2180, %v3006
        %v3063 = vmul.f32 %v2181, %v3006
        %v3064 = vmul.f32 %v2182, %v3006
        %v3065 = vmul.f32 %v2183, %v3006
        %v3066 = vmul.f32 %v2184, %v3006
        %v3067 = vmul.f32 %v2185, %v3006
        %v3068 = vmul.f32 %v2186, %v3006
        %v3069 = vmul.f32 %v2187, %v3006
        %v3070 = vmul.f32 %v2188, %v3006
        %v3071 = vlaneseq
        %v3072 = vshrl.u32 %v3071, 7
        %v3073 = vsub.s32 0, %v3072
        %v3074 = vrot.slane %v3000, %v3073
        %v3075 = vmul.f32 %v1800, %v3074
        %v3076 = vmul.f32 %v1801, %v3074
        %v3077 = vmul.f32 %v1802, %v3074
        %v3078 = vmul.f32 %v1803, %v3074
        %v3079 = vmul.f32 %v1804, %v3074
        %v3080 = vmul.f32 %v1805, %v3074
        %v3081 = vmul.f32 %v1806, %v3074
        %v3082 = vmul.f32 %v1807, %v3074
        %v3083 = vmul.f32 %v1808, %v3074
        %v3084 = vmul.f32 %v1809, %v3074
        %v3085 = vmul.f32 %v1810, %v3074
        %v3086 = vmul.f32 %v1811, %v3074
        %v3087 = vmul.f32 %v1812, %v3074
        %v3088 = vmul.f32 %v1813, %v3074
        %v3089 = vmul.f32 %v1814, %v3074
        %v3090 = vmul.f32 %v1815, %v3074
        %v3091 = vmul.f32 %v1816, %v3074
        %v3092 = vmul.f32 %v1817, %v3074
        %v3093 = vmul.f32 %v1818, %v3074
        %v3094 = vmul.f32 %v1819, %v3074
        %v3095 = vmul.f32 %v1820, %v3074
        %v3096 = vmul.f32 %v1821, %v3074
        %v3097 = vmul.f32 %v1822, %v3074
        %v3098 = vmul.f32 %v1823, %v3074
        %v3099 = vmul.f32 %v1824, %v3074
        %v3100 = vmul.f32 %v1825, %v3074
        %v3101 = vmul.f32 %v1826, %v3074
        %v3102 = vmul.f32 %v1827, %v3074
        %v3103 = vmul.f32 %v1828, %v3074
        %v3104 = vmul.f32 %v1829, %v3074
        %v3105 = vmul.f32 %v1830, %v3074
        %v3106 = vmul.f32 %v1831, %v3074
        %v3107 = vmul.f32 %v1832, %v3074
        %v3108 = vmul.f32 %v1833, %v3074
        %v3109 = vmul.f32 %v1834, %v3074
        %v3110 = vmul.f32 %v1835, %v3074
        %v3111 = vmul.f32 %v1836, %v3074
        %v3112 = vmul.f32 %v1837, %v3074
        %v3113 = vmul.f32 %v1838, %v3074
        %v3114 = vmul.f32 %v1839, %v3074
        %v3115 = vmul.f32 %v1840, %v3074
        %v3116 = vmul.f32 %v1841, %v3074
        %v3117 = vmul.f32 %v1842, %v3074
        %v3118 = vmul.f32 %v1843, %v3074
        %v3119 = vmul.f32 %v1844, %v3074
        %v3120 = vmul.f32 %v1845, %v3074
        %v3121 = vmul.f32 %v1846, %v3074
        %v3122 = vmul.f32 %v1847, %v3074
        %v3123 = vmul.f32 %v1848, %v3074
        %v3124 = vmul.f32 %v1849, %v3074
        %v3125 = vmul.f32 %v1850, %v3074
        %v3126 = vmul.f32 %v1851, %v3074
        %v3127 = vmul.f32 %v1852, %v3074
        %v3128 = vmul.f32 %v1853, %v3074
        %v3129 = vmul.f32 %v1854, %v3074
        %v3130 = vmul.f32 %v1855, %v3074
        %v3131 = vmul.f32 %v1856, %v3074
        %v3132 = vmul.f32 %v1857, %v3074
        %v3133 = vmul.f32 %v1858, %v3074
        %v3134 = vmul.f32 %v1859, %v3074
        %v3135 = vmul.f32 %v1860, %v3074
        %v3136 = vmul.f32 %v1861, %v3074
        %v3137 = vmul.f32 %v1862, %v3074
        %v3138 = vmul.f32 %v1863, %v3074
        %v3139 = vadd.f32 %v3007, %v3075
        %v3140 = vadd.f32 %v3008, %v3076
        %v3141 = vadd.f32 %v3009, %v3077
        %v3142 = vadd.f32 %v3010, %v3078
        %v3143 = vadd.f32 %v3011, %v3079
        %v3144 = vadd.f32 %v3012, %v3080
        %v3145 = vadd.f32 %v3013, %v3081
        %v3146 = vadd.f32 %v3014, %v3082
        %v3147 = vadd.f32 %v3015, %v3083
        %v3148 = vadd.f32 %v3016, %v3084
        %v3149 = vadd.f32 %v3017, %v3085
        %v3150 = vadd.f32 %v3018, %v3086
        %v3151 = vadd.f32 %v3019, %v3087
        %v3152 = vadd.f32 %v3020, %v3088
        %v3153 = vadd.f32 %v3021, %v3089
        %v3154 = vadd.f32 %v3022, %v3090
        %v3155 = vadd.f32 %v3023, %v3091
        %v3156 = vadd.f32 %v3024, %v3092
        %v3157 = vadd.f32 %v3025, %v3093
        %v3158 = vadd.f32 %v3026, %v3094
        %v3159 = vadd.f32 %v3027, %v3095
        %v3160 = vadd.f32 %v3028, %v3096
        %v3161 = vadd.f32 %v3029, %v3097
        %v3162 = vadd.f32 %v3030, %v3098
        %v3163 = vadd.f32 %v3031, %v3099
        %v3164 = vadd.f32 %v3032, %v3100
        %v3165 = vadd.f32 %v3033, %v3101
        %v3166 = vadd.f32 %v3034, %v3102
        %v3167 = vadd.f32 %v3035, %v3103
        %v3168 = vadd.f32 %v3036, %v3104
        %v3169 = vadd.f32 %v3037, %v3105
        %v3170 = vadd.f32 %v3038, %v3106
        %v3171 = vadd.f32 %v3039, %v3107
        %v3172 = vadd.f32 %v3040, %v3108
        %v3173 = vadd.f32 %v3041, %v3109
        %v3174 = vadd.f32 %v3042, %v3110
        %v3175 = vadd.f32 %v3043, %v3111
        %v3176 = vadd.f32 %v3044, %v3112
        %v3177 = vadd.f32 %v3045, %v3113
        %v3178 = vadd.f32 %v3046, %v3114
        %v3179 = vadd.f32 %v3047, %v3115
        %v3180 = vadd.f32 %v3048, %v3116
        %v3181 = vadd.f32 %v3049, %v3117
        %v3182 = vadd.f32 %v3050, %v3118
        %v3183 = vadd.f32 %v3051, %v3119
        %v3184 = vadd.f32 %v3052, %v3120
        %v3185 = vadd.f32 %v3053, %v3121
        %v3186 = vadd.f32 %v3054, %v3122
        %v3187 = vadd.f32 %v3055, %v3123
        %v3188 = vadd.f32 %v3056, %v3124
        %v3189 = vadd.f32 %v3057, %v3125
        %v3190 = vadd.f32 %v3058, %v3126
        %v3191 = vadd.f32 %v3059, %v3127
        %v3192 = vadd.f32 %v3060, %v3128
        %v3193 = vadd.f32 %v3061, %v3129
        %v3194 = vadd.f32 %v3062, %v3130
        %v3195 = vadd.f32 %v3063, %v3131
        %v3196 = vadd.f32 %v3064, %v3132
        %v3197 = vadd.f32 %v3065, %v3133
        %v3198 = vadd.f32 %v3066, %v3134
        %v3199 = vadd.f32 %v3067, %v3135
        %v3200 = vadd.f32 %v3068, %v3136
        %v3201 = vadd.f32 %v3069, %v3137
        %v3202 = vadd.f32 %v3070, %v3138
        %v3203 = vlaneseq
        %v3204 = vshrl.u32 %v3203, 7
        %v3205 = vsub.s32 0, %v3204
        %v3206 = vrot.slane %v3001, %v3205
        %v3207 = vmul.f32 %v625, %v3206
        %v3208 = vmul.f32 %v626, %v3206
        %v3209 = vmul.f32 %v627, %v3206
        %v3210 = vmul.f32 %v628, %v3206
        %v3211 = vmul.f32 %v629, %v3206
        %v3212 = vmul.f32 %v630, %v3206
        %v3213 = vmul.f32 %v631, %v3206
        %v3214 = vmul.f32 %v632, %v3206
        %v3215 = vmul.f32 %v633, %v3206
        %v3216 = vmul.f32 %v634, %v3206
        %v3217 = vmul.f32 %v635, %v3206
        %v3218 = vmul.f32 %v636, %v3206
        %v3219 = vmul.f32 %v637, %v3206
        %v3220 = vmul.f32 %v638, %v3206
        %v3221 = vmul.f32 %v639, %v3206
        %v3222 = vmul.f32 %v640, %v3206
        %v3223 = vmul.f32 %v641, %v3206
        %v3224 = vmul.f32 %v642, %v3206
        %v3225 = vmul.f32 %v643, %v3206
        %v3226 = vmul.f32 %v644, %v3206
        %v3227 = vmul.f32 %v645, %v3206
        %v3228 = vmul.f32 %v646, %v3206
        %v3229 = vmul.f32 %v647, %v3206
        %v3230 = vmul.f32 %v648, %v3206
        %v3231 = vmul.f32 %v649, %v3206
        %v3232 = vmul.f32 %v650, %v3206
        %v3233 = vmul.f32 %v651, %v3206
        %v3234 = vmul.f32 %v652, %v3206
        %v3235 = vmul.f32 %v653, %v3206
        %v3236 = vmul.f32 %v654, %v3206
        %v3237 = vmul.f32 %v655, %v3206
        %v3238 = vmul.f32 %v656, %v3206
        %v3239 = vmul.f32 %v657, %v3206
        %v3240 = vmul.f32 %v658, %v3206
        %v3241 = vmul.f32 %v659, %v3206
        %v3242 = vmul.f32 %v660, %v3206
        %v3243 = vmul.f32 %v661, %v3206
        %v3244 = vmul.f32 %v662, %v3206
        %v3245 = vmul.f32 %v663, %v3206
        %v3246 = vmul.f32 %v664, %v3206
        %v3247 = vmul.f32 %v665, %v3206
        %v3248 = vmul.f32 %v666, %v3206
        %v3249 = vmul.f32 %v667, %v3206
        %v3250 = vmul.f32 %v668, %v3206
        %v3251 = vmul.f32 %v669, %v3206
        %v3252 = vmul.f32 %v670, %v3206
        %v3253 = vmul.f32 %v671, %v3206
        %v3254 = vmul.f32 %v672, %v3206
        %v3255 = vmul.f32 %v673, %v3206
        %v3256 = vmul.f32 %v674, %v3206
        %v3257 = vmul.f32 %v675, %v3206
        %v3258 = vmul.f32 %v676, %v3206
        %v3259 = vmul.f32 %v677, %v3206
        %v3260 = vmul.f32 %v678, %v3206
        %v3261 = vmul.f32 %v679, %v3206
        %v3262 = vmul.f32 %v680, %v3206
        %v3263 = vmul.f32 %v681, %v3206
        %v3264 = vmul.f32 %v682, %v3206
        %v3265 = vmul.f32 %v683, %v3206
        %v3266 = vmul.f32 %v684, %v3206
        %v3267 = vmul.f32 %v685, %v3206
        %v3268 = vmul.f32 %v686, %v3206
        %v3269 = vmul.f32 %v687, %v3206
        %v3270 = vmul.f32 %v688, %v3206
        %v3271 = vadd.f32 %v3139, %v3207
        %v3272 = vadd.f32 %v3140, %v3208
        %v3273 = vadd.f32 %v3141, %v3209
        %v3274 = vadd.f32 %v3142, %v3210
        %v3275 = vadd.f32 %v3143, %v3211
        %v3276 = vadd.f32 %v3144, %v3212
        %v3277 = vadd.f32 %v3145, %v3213
        %v3278 = vadd.f32 %v3146, %v3214
        %v3279 = vadd.f32 %v3147, %v3215
        %v3280 = vadd.f32 %v3148, %v3216
        %v3281 = vadd.f32 %v3149, %v3217
        %v3282 = vadd.f32 %v3150, %v3218
        %v3283 = vadd.f32 %v3151, %v3219
        %v3284 = vadd.f32 %v3152, %v3220
        %v3285 = vadd.f32 %v3153, %v3221
        %v3286 = vadd.f32 %v3154, %v3222
        %v3287 = vadd.f32 %v3155, %v3223
        %v3288 = vadd.f32 %v3156, %v3224
        %v3289 = vadd.f32 %v3157, %v3225
        %v3290 = vadd.f32 %v3158, %v3226
        %v3291 = vadd.f32 %v3159, %v3227
        %v3292 = vadd.f32 %v3160, %v3228
        %v3293 = vadd.f32 %v3161, %v3229
        %v3294 = vadd.f32 %v3162, %v3230
        %v3295 = vadd.f32 %v3163, %v3231
        %v3296 = vadd.f32 %v3164, %v3232
        %v3297 = vadd.f32 %v3165, %v3233
        %v3298 = vadd.f32 %v3166, %v3234
        %v3299 = vadd.f32 %v3167, %v3235
        %v3300 = vadd.f32 %v3168, %v3236
        %v3301 = vadd.f32 %v3169, %v3237
        %v3302 = vadd.f32 %v3170, %v3238
        %v3303 = vadd.f32 %v3171, %v3239
        %v3304 = vadd.f32 %v3172, %v3240
        %v3305 = vadd.f32 %v3173, %v3241
        %v3306 = vadd.f32 %v3174, %v3242
        %v3307 = vadd.f32 %v3175, %v3243
        %v3308 = vadd.f32 %v3176, %v3244
        %v3309 = vadd.f32 %v3177, %v3245
        %v3310 = vadd.f32 %v3178, %v3246
        %v3311 = vadd.f32 %v3179, %v3247
        %v3312 = vadd.f32 %v3180, %v3248
        %v3313 = vadd.f32 %v3181, %v3249
        %v3314 = vadd.f32 %v3182, %v3250
        %v3315 = vadd.f32 %v3183, %v3251
        %v3316 = vadd.f32 %v3184, %v3252
        %v3317 = vadd.f32 %v3185, %v3253
        %v3318 = vadd.f32 %v3186, %v3254
        %v3319 = vadd.f32 %v3187, %v3255
        %v3320 = vadd.f32 %v3188, %v3256
        %v3321 = vadd.f32 %v3189, %v3257
        %v3322 = vadd.f32 %v3190, %v3258
        %v3323 = vadd.f32 %v3191, %v3259
        %v3324 = vadd.f32 %v3192, %v3260
        %v3325 = vadd.f32 %v3193, %v3261
        %v3326 = vadd.f32 %v3194, %v3262
        %v3327 = vadd.f32 %v3195, %v3263
        %v3328 = vadd.f32 %v3196, %v3264
        %v3329 = vadd.f32 %v3197, %v3265
        %v3330 = vadd.f32 %v3198, %v3266
        %v3331 = vadd.f32 %v3199, %v3267
        %v3332 = vadd.f32 %v3200, %v3268
        %v3333 = vadd.f32 %v3201, %v3269
        %v3334 = vadd.f32 %v3202, %v3270
        %v3335 = vlaneseq
        %v3336 = vshrl.u32 %v3335, 7
        %v3337 = vsub.s32 0, %v3336
        %v3338 = vrot.slane %v3002, %v3337
        %v3339 = vadd.f32 %v3271, %v3338
        %v3340 = vadd.f32 %v3272, %v3338
        %v3341 = vadd.f32 %v3273, %v3338
        %v3342 = vadd.f32 %v3274, %v3338
        %v3343 = vadd.f32 %v3275, %v3338
        %v3344 = vadd.f32 %v3276, %v3338
        %v3345 = vadd.f32 %v3277, %v3338
        %v3346 = vadd.f32 %v3278, %v3338
        %v3347 = vadd.f32 %v3279, %v3338
        %v3348 = vadd.f32 %v3280, %v3338
        %v3349 = vadd.f32 %v3281, %v3338
        %v3350 = vadd.f32 %v3282, %v3338
        %v3351 = vadd.f32 %v3283, %v3338
        %v3352 = vadd.f32 %v3284, %v3338
        %v3353 = vadd.f32 %v3285, %v3338
        %v3354 = vadd.f32 %v3286, %v3338
        %v3355 = vadd.f32 %v3287, %v3338
        %v3356 = vadd.f32 %v3288, %v3338
        %v3357 = vadd.f32 %v3289, %v3338
        %v3358 = vadd.f32 %v3290, %v3338
        %v3359 = vadd.f32 %v3291, %v3338
        %v3360 = vadd.f32 %v3292, %v3338
        %v3361 = vadd.f32 %v3293, %v3338
        %v3362 = vadd.f32 %v3294, %v3338
        %v3363 = vadd.f32 %v3295, %v3338
        %v3364 = vadd.f32 %v3296, %v3338
        %v3365 = vadd.f32 %v3297, %v3338
        %v3366 = vadd.f32 %v3298, %v3338
        %v3367 = vadd.f32 %v3299, %v3338
        %v3368 = vadd.f32 %v3300, %v3338
        %v3369 = vadd.f32 %v3301, %v3338
        %v3370 = vadd.f32 %v3302, %v3338
        %v3371 = vadd.f32 %v3303, %v3338
        %v3372 = vadd.f32 %v3304, %v3338
        %v3373 = vadd.f32 %v3305, %v3338
        %v3374 = vadd.f32 %v3306, %v3338
        %v3375 = vadd.f32 %v3307, %v3338
        %v3376 = vadd.f32 %v3308, %v3338
        %v3377 = vadd.f32 %v3309, %v3338
        %v3378 = vadd.f32 %v3310, %v3338
        %v3379 = vadd.f32 %v3311, %v3338
        %v3380 = vadd.f32 %v3312, %v3338
        %v3381 = vadd.f32 %v3313, %v3338
        %v3382 = vadd.f32 %v3314, %v3338
        %v3383 = vadd.f32 %v3315, %v3338
        %v3384 = vadd.f32 %v3316, %v3338
        %v3385 = vadd.f32 %v3317, %v3338
        %v3386 = vadd.f32 %v3318, %v3338
        %v3387 = vadd.f32 %v3319, %v3338
        %v3388 = vadd.f32 %v3320, %v3338
        %v3389 = vadd.f32 %v3321, %v3338
        %v3390 = vadd.f32 %v3322, %v3338
        %v3391 = vadd.f32 %v3323, %v3338
        %v3392 = vadd.f32 %v3324, %v3338
        %v3393 = vadd.f32 %v3325, %v3338
        %v3394 = vadd.f32 %v3326, %v3338
        %v3395 = vadd.f32 %v3327, %v3338
        %v3396 = vadd.f32 %v3328, %v3338
        %v3397 = vadd.f32 %v3329, %v3338
        %v3398 = vadd.f32 %v3330, %v3338
        %v3399 = vadd.f32 %v3331, %v3338
        %v3400 = vadd.f32 %v3332, %v3338
        %v3401 = vadd.f32 %v3333, %v3338
        %v3402 = vadd.f32 %v3334, %v3338
        %s3403 = scalar_lea.vmem %s555, 12
        %v3404 = vld [vmem:[%s3403] sm:$0x1]
        %v3405 = vld [vmem:[%s3403 + $0x1] sm:$0x1]
        %v3406 = vld [vmem:[%s3403 + $0x2] sm:$0x1]
        %v3407 = vld [vmem:[#allocation10 + $0x3] sm:$0x1]
        %v3408 = vlaneseq
        %v3409 = vshrl.u32 %v3408, 7
        %v3410 = vsub.s32 0, %v3409
        %v3411 = vrot.slane %v3404, %v3410
        %v3412 = vmul.f32 %v2125, %v3411
        %v3413 = vmul.f32 %v2126, %v3411
        %v3414 = vmul.f32 %v2127, %v3411
        %v3415 = vmul.f32 %v2128, %v3411
        %v3416 = vmul.f32 %v2129, %v3411
        %v3417 = vmul.f32 %v2130, %v3411
        %v3418 = vmul.f32 %v2131, %v3411
        %v3419 = vmul.f32 %v2132, %v3411
        %v3420 = vmul.f32 %v2133, %v3411
        %v3421 = vmul.f32 %v2134, %v3411
        %v3422 = vmul.f32 %v2135, %v3411
        %v3423 = vmul.f32 %v2136, %v3411
        %v3424 = vmul.f32 %v2137, %v3411
        %v3425 = vmul.f32 %v2138, %v3411
        %v3426 = vmul.f32 %v2139, %v3411
        %v3427 = vmul.f32 %v2140, %v3411
        %v3428 = vmul.f32 %v2141, %v3411
        %v3429 = vmul.f32 %v2142, %v3411
        %v3430 = vmul.f32 %v2143, %v3411
        %v3431 = vmul.f32 %v2144, %v3411
        %v3432 = vmul.f32 %v2145, %v3411
        %v3433 = vmul.f32 %v2146, %v3411
        %v3434 = vmul.f32 %v2147, %v3411
        %v3435 = vmul.f32 %v2148, %v3411
        %v3436 = vmul.f32 %v2149, %v3411
        %v3437 = vmul.f32 %v2150, %v3411
        %v3438 = vmul.f32 %v2151, %v3411
        %v3439 = vmul.f32 %v2152, %v3411
        %v3440 = vmul.f32 %v2153, %v3411
        %v3441 = vmul.f32 %v2154, %v3411
        %v3442 = vmul.f32 %v2155, %v3411
        %v3443 = vmul.f32 %v2156, %v3411
        %v3444 = vmul.f32 %v2157, %v3411
        %v3445 = vmul.f32 %v2158, %v3411
        %v3446 = vmul.f32 %v2159, %v3411
        %v3447 = vmul.f32 %v2160, %v3411
        %v3448 = vmul.f32 %v2161, %v3411
        %v3449 = vmul.f32 %v2162, %v3411
        %v3450 = vmul.f32 %v2163, %v3411
        %v3451 = vmul.f32 %v2164, %v3411
        %v3452 = vmul.f32 %v2165, %v3411
        %v3453 = vmul.f32 %v2166, %v3411
        %v3454 = vmul.f32 %v2167, %v3411
        %v3455 = vmul.f32 %v2168, %v3411
        %v3456 = vmul.f32 %v2169, %v3411
        %v3457 = vmul.f32 %v2170, %v3411
        %v3458 = vmul.f32 %v2171, %v3411
        %v3459 = vmul.f32 %v2172, %v3411
        %v3460 = vmul.f32 %v2173, %v3411
        %v3461 = vmul.f32 %v2174, %v3411
        %v3462 = vmul.f32 %v2175, %v3411
        %v3463 = vmul.f32 %v2176, %v3411
        %v3464 = vmul.f32 %v2177, %v3411
        %v3465 = vmul.f32 %v2178, %v3411
        %v3466 = vmul.f32 %v2179, %v3411
        %v3467 = vmul.f32 %v2180, %v3411
        %v3468 = vmul.f32 %v2181, %v3411
        %v3469 = vmul.f32 %v2182, %v3411
        %v3470 = vmul.f32 %v2183, %v3411
        %v3471 = vmul.f32 %v2184, %v3411
        %v3472 = vmul.f32 %v2185, %v3411
        %v3473 = vmul.f32 %v2186, %v3411
        %v3474 = vmul.f32 %v2187, %v3411
        %v3475 = vmul.f32 %v2188, %v3411
        %v3476 = vlaneseq
        %v3477 = vshrl.u32 %v3476, 7
        %v3478 = vsub.s32 0, %v3477
        %v3479 = vrot.slane %v3405, %v3478
        %v3480 = vmul.f32 %v1800, %v3479
        %v3481 = vmul.f32 %v1801, %v3479
        %v3482 = vmul.f32 %v1802, %v3479
        %v3483 = vmul.f32 %v1803, %v3479
        %v3484 = vmul.f32 %v1804, %v3479
        %v3485 = vmul.f32 %v1805, %v3479
        %v3486 = vmul.f32 %v1806, %v3479
        %v3487 = vmul.f32 %v1807, %v3479
        %v3488 = vmul.f32 %v1808, %v3479
        %v3489 = vmul.f32 %v1809, %v3479
        %v3490 = vmul.f32 %v1810, %v3479
        %v3491 = vmul.f32 %v1811, %v3479
        %v3492 = vmul.f32 %v1812, %v3479
        %v3493 = vmul.f32 %v1813, %v3479
        %v3494 = vmul.f32 %v1814, %v3479
        %v3495 = vmul.f32 %v1815, %v3479
        %v3496 = vmul.f32 %v1816, %v3479
        %v3497 = vmul.f32 %v1817, %v3479
        %v3498 = vmul.f32 %v1818, %v3479
        %v3499 = vmul.f32 %v1819, %v3479
        %v3500 = vmul.f32 %v1820, %v3479
        %v3501 = vmul.f32 %v1821, %v3479
        %v3502 = vmul.f32 %v1822, %v3479
        %v3503 = vmul.f32 %v1823, %v3479
        %v3504 = vmul.f32 %v1824, %v3479
        %v3505 = vmul.f32 %v1825, %v3479
        %v3506 = vmul.f32 %v1826, %v3479
        %v3507 = vmul.f32 %v1827, %v3479
        %v3508 = vmul.f32 %v1828, %v3479
        %v3509 = vmul.f32 %v1829, %v3479
        %v3510 = vmul.f32 %v1830, %v3479
        %v3511 = vmul.f32 %v1831, %v3479
        %v3512 = vmul.f32 %v1832, %v3479
        %v3513 = vmul.f32 %v1833, %v3479
        %v3514 = vmul.f32 %v1834, %v3479
        %v3515 = vmul.f32 %v1835, %v3479
        %v3516 = vmul.f32 %v1836, %v3479
        %v3517 = vmul.f32 %v1837, %v3479
        %v3518 = vmul.f32 %v1838, %v3479
        %v3519 = vmul.f32 %v1839, %v3479
        %v3520 = vmul.f32 %v1840, %v3479
        %v3521 = vmul.f32 %v1841, %v3479
        %v3522 = vmul.f32 %v1842, %v3479
        %v3523 = vmul.f32 %v1843, %v3479
        %v3524 = vmul.f32 %v1844, %v3479
        %v3525 = vmul.f32 %v1845, %v3479
        %v3526 = vmul.f32 %v1846, %v3479
        %v3527 = vmul.f32 %v1847, %v3479
        %v3528 = vmul.f32 %v1848, %v3479
        %v3529 = vmul.f32 %v1849, %v3479
        %v3530 = vmul.f32 %v1850, %v3479
        %v3531 = vmul.f32 %v1851, %v3479
        %v3532 = vmul.f32 %v1852, %v3479
        %v3533 = vmul.f32 %v1853, %v3479
        %v3534 = vmul.f32 %v1854, %v3479
        %v3535 = vmul.f32 %v1855, %v3479
        %v3536 = vmul.f32 %v1856, %v3479
        %v3537 = vmul.f32 %v1857, %v3479
        %v3538 = vmul.f32 %v1858, %v3479
        %v3539 = vmul.f32 %v1859, %v3479
        %v3540 = vmul.f32 %v1860, %v3479
        %v3541 = vmul.f32 %v1861, %v3479
        %v3542 = vmul.f32 %v1862, %v3479
        %v3543 = vmul.f32 %v1863, %v3479
        %v3544 = vadd.f32 %v3412, %v3480
        %v3545 = vadd.f32 %v3413, %v3481
        %v3546 = vadd.f32 %v3414, %v3482
        %v3547 = vadd.f32 %v3415, %v3483
        %v3548 = vadd.f32 %v3416, %v3484
        %v3549 = vadd.f32 %v3417, %v3485
        %v3550 = vadd.f32 %v3418, %v3486
        %v3551 = vadd.f32 %v3419, %v3487
        %v3552 = vadd.f32 %v3420, %v3488
        %v3553 = vadd.f32 %v3421, %v3489
        %v3554 = vadd.f32 %v3422, %v3490
        %v3555 = vadd.f32 %v3423, %v3491
        %v3556 = vadd.f32 %v3424, %v3492
        %v3557 = vadd.f32 %v3425, %v3493
        %v3558 = vadd.f32 %v3426, %v3494
        %v3559 = vadd.f32 %v3427, %v3495
        %v3560 = vadd.f32 %v3428, %v3496
        %v3561 = vadd.f32 %v3429, %v3497
        %v3562 = vadd.f32 %v3430, %v3498
        %v3563 = vadd.f32 %v3431, %v3499
        %v3564 = vadd.f32 %v3432, %v3500
        %v3565 = vadd.f32 %v3433, %v3501
        %v3566 = vadd.f32 %v3434, %v3502
        %v3567 = vadd.f32 %v3435, %v3503
        %v3568 = vadd.f32 %v3436, %v3504
        %v3569 = vadd.f32 %v3437, %v3505
        %v3570 = vadd.f32 %v3438, %v3506
        %v3571 = vadd.f32 %v3439, %v3507
        %v3572 = vadd.f32 %v3440, %v3508
        %v3573 = vadd.f32 %v3441, %v3509
        %v3574 = vadd.f32 %v3442, %v3510
        %v3575 = vadd.f32 %v3443, %v3511
        %v3576 = vadd.f32 %v3444, %v3512
        %v3577 = vadd.f32 %v3445, %v3513
        %v3578 = vadd.f32 %v3446, %v3514
        %v3579 = vadd.f32 %v3447, %v3515
        %v3580 = vadd.f32 %v3448, %v3516
        %v3581 = vadd.f32 %v3449, %v3517
        %v3582 = vadd.f32 %v3450, %v3518
        %v3583 = vadd.f32 %v3451, %v3519
        %v3584 = vadd.f32 %v3452, %v3520
        %v3585 = vadd.f32 %v3453, %v3521
        %v3586 = vadd.f32 %v3454, %v3522
        %v3587 = vadd.f32 %v3455, %v3523
        %v3588 = vadd.f32 %v3456, %v3524
        %v3589 = vadd.f32 %v3457, %v3525
        %v3590 = vadd.f32 %v3458, %v3526
        %v3591 = vadd.f32 %v3459, %v3527
        %v3592 = vadd.f32 %v3460, %v3528
        %v3593 = vadd.f32 %v3461, %v3529
        %v3594 = vadd.f32 %v3462, %v3530
        %v3595 = vadd.f32 %v3463, %v3531
        %v3596 = vadd.f32 %v3464, %v3532
        %v3597 = vadd.f32 %v3465, %v3533
        %v3598 = vadd.f32 %v3466, %v3534
        %v3599 = vadd.f32 %v3467, %v3535
        %v3600 = vadd.f32 %v3468, %v3536
        %v3601 = vadd.f32 %v3469, %v3537
        %v3602 = vadd.f32 %v3470, %v3538
        %v3603 = vadd.f32 %v3471, %v3539
        %v3604 = vadd.f32 %v3472, %v3540
        %v3605 = vadd.f32 %v3473, %v3541
        %v3606 = vadd.f32 %v3474, %v3542
        %v3607 = vadd.f32 %v3475, %v3543
        %v3608 = vlaneseq
        %v3609 = vshrl.u32 %v3608, 7
        %v3610 = vsub.s32 0, %v3609
        %v3611 = vrot.slane %v3406, %v3610
        %v3612 = vmul.f32 %v625, %v3611
        %v3613 = vmul.f32 %v626, %v3611
        %v3614 = vmul.f32 %v627, %v3611
        %v3615 = vmul.f32 %v628, %v3611
        %v3616 = vmul.f32 %v629, %v3611
        %v3617 = vmul.f32 %v630, %v3611
        %v3618 = vmul.f32 %v631, %v3611
        %v3619 = vmul.f32 %v632, %v3611
        %v3620 = vmul.f32 %v633, %v3611
        %v3621 = vmul.f32 %v634, %v3611
        %v3622 = vmul.f32 %v635, %v3611
        %v3623 = vmul.f32 %v636, %v3611
        %v3624 = vmul.f32 %v637, %v3611
        %v3625 = vmul.f32 %v638, %v3611
        %v3626 = vmul.f32 %v639, %v3611
        %v3627 = vmul.f32 %v640, %v3611
        %v3628 = vmul.f32 %v641, %v3611
        %v3629 = vmul.f32 %v642, %v3611
        %v3630 = vmul.f32 %v643, %v3611
        %v3631 = vmul.f32 %v644, %v3611
        %v3632 = vmul.f32 %v645, %v3611
        %v3633 = vmul.f32 %v646, %v3611
        %v3634 = vmul.f32 %v647, %v3611
        %v3635 = vmul.f32 %v648, %v3611
        %v3636 = vmul.f32 %v649, %v3611
        %v3637 = vmul.f32 %v650, %v3611
        %v3638 = vmul.f32 %v651, %v3611
        %v3639 = vmul.f32 %v652, %v3611
        %v3640 = vmul.f32 %v653, %v3611
        %v3641 = vmul.f32 %v654, %v3611
        %v3642 = vmul.f32 %v655, %v3611
        %v3643 = vmul.f32 %v656, %v3611
        %v3644 = vmul.f32 %v657, %v3611
        %v3645 = vmul.f32 %v658, %v3611
        %v3646 = vmul.f32 %v659, %v3611
        %v3647 = vmul.f32 %v660, %v3611
        %v3648 = vmul.f32 %v661, %v3611
        %v3649 = vmul.f32 %v662, %v3611
        %v3650 = vmul.f32 %v663, %v3611
        %v3651 = vmul.f32 %v664, %v3611
        %v3652 = vmul.f32 %v665, %v3611
        %v3653 = vmul.f32 %v666, %v3611
        %v3654 = vmul.f32 %v667, %v3611
        %v3655 = vmul.f32 %v668, %v3611
        %v3656 = vmul.f32 %v669, %v3611
        %v3657 = vmul.f32 %v670, %v3611
        %v3658 = vmul.f32 %v671, %v3611
        %v3659 = vmul.f32 %v672, %v3611
        %v3660 = vmul.f32 %v673, %v3611
        %v3661 = vmul.f32 %v674, %v3611
        %v3662 = vmul.f32 %v675, %v3611
        %v3663 = vmul.f32 %v676, %v3611
        %v3664 = vmul.f32 %v677, %v3611
        %v3665 = vmul.f32 %v678, %v3611
        %v3666 = vmul.f32 %v679, %v3611
        %v3667 = vmul.f32 %v680, %v3611
        %v3668 = vmul.f32 %v681, %v3611
        %v3669 = vmul.f32 %v682, %v3611
        %v3670 = vmul.f32 %v683, %v3611
        %v3671 = vmul.f32 %v684, %v3611
        %v3672 = vmul.f32 %v685, %v3611
        %v3673 = vmul.f32 %v686, %v3611
        %v3674 = vmul.f32 %v687, %v3611
        %v3675 = vmul.f32 %v688, %v3611
        %v3676 = vadd.f32 %v3544, %v3612
        %v3677 = vadd.f32 %v3545, %v3613
        %v3678 = vadd.f32 %v3546, %v3614
        %v3679 = vadd.f32 %v3547, %v3615
        %v3680 = vadd.f32 %v3548, %v3616
        %v3681 = vadd.f32 %v3549, %v3617
        %v3682 = vadd.f32 %v3550, %v3618
        %v3683 = vadd.f32 %v3551, %v3619
        %v3684 = vadd.f32 %v3552, %v3620
        %v3685 = vadd.f32 %v3553, %v3621
        %v3686 = vadd.f32 %v3554, %v3622
        %v3687 = vadd.f32 %v3555, %v3623
        %v3688 = vadd.f32 %v3556, %v3624
        %v3689 = vadd.f32 %v3557, %v3625
        %v3690 = vadd.f32 %v3558, %v3626
        %v3691 = vadd.f32 %v3559, %v3627
        %v3692 = vadd.f32 %v3560, %v3628
        %v3693 = vadd.f32 %v3561, %v3629
        %v3694 = vadd.f32 %v3562, %v3630
        %v3695 = vadd.f32 %v3563, %v3631
        %v3696 = vadd.f32 %v3564, %v3632
        %v3697 = vadd.f32 %v3565, %v3633
        %v3698 = vadd.f32 %v3566, %v3634
        %v3699 = vadd.f32 %v3567, %v3635
        %v3700 = vadd.f32 %v3568, %v3636
        %v3701 = vadd.f32 %v3569, %v3637
        %v3702 = vadd.f32 %v3570, %v3638
        %v3703 = vadd.f32 %v3571, %v3639
        %v3704 = vadd.f32 %v3572, %v3640
        %v3705 = vadd.f32 %v3573, %v3641
        %v3706 = vadd.f32 %v3574, %v3642
        %v3707 = vadd.f32 %v3575, %v3643
        %v3708 = vadd.f32 %v3576, %v3644
        %v3709 = vadd.f32 %v3577, %v3645
        %v3710 = vadd.f32 %v3578, %v3646
        %v3711 = vadd.f32 %v3579, %v3647
        %v3712 = vadd.f32 %v3580, %v3648
        %v3713 = vadd.f32 %v3581, %v3649
        %v3714 = vadd.f32 %v3582, %v3650
        %v3715 = vadd.f32 %v3583, %v3651
        %v3716 = vadd.f32 %v3584, %v3652
        %v3717 = vadd.f32 %v3585, %v3653
        %v3718 = vadd.f32 %v3586, %v3654
        %v3719 = vadd.f32 %v3587, %v3655
        %v3720 = vadd.f32 %v3588, %v3656
        %v3721 = vadd.f32 %v3589, %v3657
        %v3722 = vadd.f32 %v3590, %v3658
        %v3723 = vadd.f32 %v3591, %v3659
        %v3724 = vadd.f32 %v3592, %v3660
        %v3725 = vadd.f32 %v3593, %v3661
        %v3726 = vadd.f32 %v3594, %v3662
        %v3727 = vadd.f32 %v3595, %v3663
        %v3728 = vadd.f32 %v3596, %v3664
        %v3729 = vadd.f32 %v3597, %v3665
        %v3730 = vadd.f32 %v3598, %v3666
        %v3731 = vadd.f32 %v3599, %v3667
        %v3732 = vadd.f32 %v3600, %v3668
        %v3733 = vadd.f32 %v3601, %v3669
        %v3734 = vadd.f32 %v3602, %v3670
        %v3735 = vadd.f32 %v3603, %v3671
        %v3736 = vadd.f32 %v3604, %v3672
        %v3737 = vadd.f32 %v3605, %v3673
        %v3738 = vadd.f32 %v3606, %v3674
        %v3739 = vadd.f32 %v3607, %v3675
        %v3740 = vlaneseq
        %v3741 = vshrl.u32 %v3740, 7
        %v3742 = vsub.s32 0, %v3741
        %v3743 = vrot.slane %v3407, %v3742
        %v3744 = vadd.f32 %v3676, %v3743
        %v3745 = vadd.f32 %v3677, %v3743
        %v3746 = vadd.f32 %v3678, %v3743
        %v3747 = vadd.f32 %v3679, %v3743
        %v3748 = vadd.f32 %v3680, %v3743
        %v3749 = vadd.f32 %v3681, %v3743
        %v3750 = vadd.f32 %v3682, %v3743
        %v3751 = vadd.f32 %v3683, %v3743
        %v3752 = vadd.f32 %v3684, %v3743
        %v3753 = vadd.f32 %v3685, %v3743
        %v3754 = vadd.f32 %v3686, %v3743
        %v3755 = vadd.f32 %v3687, %v3743
        %v3756 = vadd.f32 %v3688, %v3743
        %v3757 = vadd.f32 %v3689, %v3743
        %v3758 = vadd.f32 %v3690, %v3743
        %v3759 = vadd.f32 %v3691, %v3743
        %v3760 = vadd.f32 %v3692, %v3743
        %v3761 = vadd.f32 %v3693, %v3743
        %v3762 = vadd.f32 %v3694, %v3743
        %v3763 = vadd.f32 %v3695, %v3743
        %v3764 = vadd.f32 %v3696, %v3743
        %v3765 = vadd.f32 %v3697, %v3743
        %v3766 = vadd.f32 %v3698, %v3743
        %v3767 = vadd.f32 %v3699, %v3743
        %v3768 = vadd.f32 %v3700, %v3743
        %v3769 = vadd.f32 %v3701, %v3743
        %v3770 = vadd.f32 %v3702, %v3743
        %v3771 = vadd.f32 %v3703, %v3743
        %v3772 = vadd.f32 %v3704, %v3743
        %v3773 = vadd.f32 %v3705, %v3743
        %v3774 = vadd.f32 %v3706, %v3743
        %v3775 = vadd.f32 %v3707, %v3743
        %v3776 = vadd.f32 %v3708, %v3743
        %v3777 = vadd.f32 %v3709, %v3743
        %v3778 = vadd.f32 %v3710, %v3743
        %v3779 = vadd.f32 %v3711, %v3743
        %v3780 = vadd.f32 %v3712, %v3743
        %v3781 = vadd.f32 %v3713, %v3743
        %v3782 = vadd.f32 %v3714, %v3743
        %v3783 = vadd.f32 %v3715, %v3743
        %v3784 = vadd.f32 %v3716, %v3743
        %v3785 = vadd.f32 %v3717, %v3743
        %v3786 = vadd.f32 %v3718, %v3743
        %v3787 = vadd.f32 %v3719, %v3743
        %v3788 = vadd.f32 %v3720, %v3743
        %v3789 = vadd.f32 %v3721, %v3743
        %v3790 = vadd.f32 %v3722, %v3743
        %v3791 = vadd.f32 %v3723, %v3743
        %v3792 = vadd.f32 %v3724, %v3743
        %v3793 = vadd.f32 %v3725, %v3743
        %v3794 = vadd.f32 %v3726, %v3743
        %v3795 = vadd.f32 %v3727, %v3743
        %v3796 = vadd.f32 %v3728, %v3743
        %v3797 = vadd.f32 %v3729, %v3743
        %v3798 = vadd.f32 %v3730, %v3743
        %v3799 = vadd.f32 %v3731, %v3743
        %v3800 = vadd.f32 %v3732, %v3743
        %v3801 = vadd.f32 %v3733, %v3743
        %v3802 = vadd.f32 %v3734, %v3743
        %v3803 = vadd.f32 %v3735, %v3743
        %v3804 = vadd.f32 %v3736, %v3743
        %v3805 = vadd.f32 %v3737, %v3743
        %v3806 = vadd.f32 %v3738, %v3743
        %v3807 = vadd.f32 %v3739, %v3743
        %v3808 = vxor.u32 %v3339, 2147483648
        %v3809 = vxor.u32 %v3340, 2147483648
        %v3810 = vxor.u32 %v3341, 2147483648
        %v3811 = vxor.u32 %v3342, 2147483648
        %v3812 = vxor.u32 %v3343, 2147483648
        %v3813 = vxor.u32 %v3344, 2147483648
        %v3814 = vxor.u32 %v3345, 2147483648
        %v3815 = vxor.u32 %v3346, 2147483648
        %v3816 = vxor.u32 %v3347, 2147483648
        %v3817 = vxor.u32 %v3348, 2147483648
        %v3818 = vxor.u32 %v3349, 2147483648
        %v3819 = vxor.u32 %v3350, 2147483648
        %v3820 = vxor.u32 %v3351, 2147483648
        %v3821 = vxor.u32 %v3352, 2147483648
        %v3822 = vxor.u32 %v3353, 2147483648
        %v3823 = vxor.u32 %v3354, 2147483648
        %v3824 = vxor.u32 %v3355, 2147483648
        %v3825 = vxor.u32 %v3356, 2147483648
        %v3826 = vxor.u32 %v3357, 2147483648
        %v3827 = vxor.u32 %v3358, 2147483648
        %v3828 = vxor.u32 %v3359, 2147483648
        %v3829 = vxor.u32 %v3360, 2147483648
        %v3830 = vxor.u32 %v3361, 2147483648
        %v3831 = vxor.u32 %v3362, 2147483648
        %v3832 = vxor.u32 %v3363, 2147483648
        %v3833 = vxor.u32 %v3364, 2147483648
        %v3834 = vxor.u32 %v3365, 2147483648
        %v3835 = vxor.u32 %v3366, 2147483648
        %v3836 = vxor.u32 %v3367, 2147483648
        %v3837 = vxor.u32 %v3368, 2147483648
        %v3838 = vxor.u32 %v3369, 2147483648
        %v3839 = vxor.u32 %v3370, 2147483648
        %v3840 = vxor.u32 %v3371, 2147483648
        %v3841 = vxor.u32 %v3372, 2147483648
        %v3842 = vxor.u32 %v3373, 2147483648
        %v3843 = vxor.u32 %v3374, 2147483648
        %v3844 = vxor.u32 %v3375, 2147483648
        %v3845 = vxor.u32 %v3376, 2147483648
        %v3846 = vxor.u32 %v3377, 2147483648
        %v3847 = vxor.u32 %v3378, 2147483648
        %v3848 = vxor.u32 %v3379, 2147483648
        %v3849 = vxor.u32 %v3380, 2147483648
        %v3850 = vxor.u32 %v3381, 2147483648
        %v3851 = vxor.u32 %v3382, 2147483648
        %v3852 = vxor.u32 %v3383, 2147483648
        %v3853 = vxor.u32 %v3384, 2147483648
        %v3854 = vxor.u32 %v3385, 2147483648
        %v3855 = vxor.u32 %v3386, 2147483648
        %v3856 = vxor.u32 %v3387, 2147483648
        %v3857 = vxor.u32 %v3388, 2147483648
        %v3858 = vxor.u32 %v3389, 2147483648
        %v3859 = vxor.u32 %v3390, 2147483648
        %v3860 = vxor.u32 %v3391, 2147483648
        %v3861 = vxor.u32 %v3392, 2147483648
        %v3862 = vxor.u32 %v3393, 2147483648
        %v3863 = vxor.u32 %v3394, 2147483648
        %v3864 = vxor.u32 %v3395, 2147483648
        %v3865 = vxor.u32 %v3396, 2147483648
        %v3866 = vxor.u32 %v3397, 2147483648
        %v3867 = vxor.u32 %v3398, 2147483648
        %v3868 = vxor.u32 %v3399, 2147483648
        %v3869 = vxor.u32 %v3400, 2147483648
        %v3870 = vxor.u32 %v3401, 2147483648
        %v3871 = vxor.u32 %v3402, 2147483648
        %v3872 = vmul.f32 %v3808, 1.442695
        %v3873 = vpow.pop %v3872
        %v3874 = vmul.f32 %v3809, 1.442695
        %v3875 = vpow.pop %v3874
        %v3876 = vmul.f32 %v3810, 1.442695
        %v3877 = vpow.pop %v3876
        %v3878 = vmul.f32 %v3811, 1.442695
        %v3879 = vpow.pop %v3878
        %v3880 = vmul.f32 %v3812, 1.442695
        %v3881 = vpow.pop %v3880
        %v3882 = vmul.f32 %v3813, 1.442695
        %v3883 = vpow.pop %v3882
        %v3884 = vmul.f32 %v3814, 1.442695
        %v3885 = vpow.pop %v3884
        %v3886 = vmul.f32 %v3815, 1.442695
        %v3887 = vpow.pop %v3886
        %v3888 = vmul.f32 %v3816, 1.442695
        %v3889 = vpow.pop %v3888
        %v3890 = vmul.f32 %v3817, 1.442695
        %v3891 = vpow.pop %v3890
        %v3892 = vmul.f32 %v3818, 1.442695
        %v3893 = vpow.pop %v3892
        %v3894 = vmul.f32 %v3819, 1.442695
        %v3895 = vpow.pop %v3894
        %v3896 = vmul.f32 %v3820, 1.442695
        %v3897 = vpow.pop %v3896
        %v3898 = vmul.f32 %v3821, 1.442695
        %v3899 = vpow.pop %v3898
        %v3900 = vmul.f32 %v3822, 1.442695
        %v3901 = vpow.pop %v3900
        %v3902 = vmul.f32 %v3823, 1.442695
        %v3903 = vpow.pop %v3902
        %v3904 = vmul.f32 %v3824, 1.442695
        %v3905 = vpow.pop %v3904
        %v3906 = vmul.f32 %v3825, 1.442695
        %v3907 = vpow.pop %v3906
        %v3908 = vmul.f32 %v3826, 1.442695
        %v3909 = vpow.pop %v3908
        %v3910 = vmul.f32 %v3827, 1.442695
        %v3911 = vpow.pop %v3910
        %v3912 = vmul.f32 %v3828, 1.442695
        %v3913 = vpow.pop %v3912
        %v3914 = vmul.f32 %v3829, 1.442695
        %v3915 = vpow.pop %v3914
        %v3916 = vmul.f32 %v3830, 1.442695
        %v3917 = vpow.pop %v3916
        %v3918 = vmul.f32 %v3831, 1.442695
        %v3919 = vpow.pop %v3918
        %v3920 = vmul.f32 %v3832, 1.442695
        %v3921 = vpow.pop %v3920
        %v3922 = vmul.f32 %v3833, 1.442695
        %v3923 = vpow.pop %v3922
        %v3924 = vmul.f32 %v3834, 1.442695
        %v3925 = vpow.pop %v3924
        %v3926 = vmul.f32 %v3835, 1.442695
        %v3927 = vpow.pop %v3926
        %v3928 = vmul.f32 %v3836, 1.442695
        %v3929 = vpow.pop %v3928
        %v3930 = vmul.f32 %v3837, 1.442695
        %v3931 = vpow.pop %v3930
        %v3932 = vmul.f32 %v3838, 1.442695
        %v3933 = vpow.pop %v3932
        %v3934 = vmul.f32 %v3839, 1.442695
        %v3935 = vpow.pop %v3934
        %v3936 = vmul.f32 %v3840, 1.442695
        %v3937 = vpow.pop %v3936
        %v3938 = vmul.f32 %v3841, 1.442695
        %v3939 = vpow.pop %v3938
        %v3940 = vmul.f32 %v3842, 1.442695
        %v3941 = vpow.pop %v3940
        %v3942 = vmul.f32 %v3843, 1.442695
        %v3943 = vpow.pop %v3942
        %v3944 = vmul.f32 %v3844, 1.442695
        %v3945 = vpow.pop %v3944
        %v3946 = vmul.f32 %v3845, 1.442695
        %v3947 = vpow.pop %v3946
        %v3948 = vmul.f32 %v3846, 1.442695
        %v3949 = vpow.pop %v3948
        %v3950 = vmul.f32 %v3847, 1.442695
        %v3951 = vpow.pop %v3950
        %v3952 = vmul.f32 %v3848, 1.442695
        %v3953 = vpow.pop %v3952
        %v3954 = vmul.f32 %v3849, 1.442695
        %v3955 = vpow.pop %v3954
        %v3956 = vmul.f32 %v3850, 1.442695
        %v3957 = vpow.pop %v3956
        %v3958 = vmul.f32 %v3851, 1.442695
        %v3959 = vpow.pop %v3958
        %v3960 = vmul.f32 %v3852, 1.442695
        %v3961 = vpow.pop %v3960
        %v3962 = vmul.f32 %v3853, 1.442695
        %v3963 = vpow.pop %v3962
        %v3964 = vmul.f32 %v3854, 1.442695
        %v3965 = vpow.pop %v3964
        %v3966 = vmul.f32 %v3855, 1.442695
        %v3967 = vpow.pop %v3966
        %v3968 = vmul.f32 %v3856, 1.442695
        %v3969 = vpow.pop %v3968
        %v3970 = vmul.f32 %v3857, 1.442695
        %v3971 = vpow.pop %v3970
        %v3972 = vmul.f32 %v3858, 1.442695
        %v3973 = vpow.pop %v3972
        %v3974 = vmul.f32 %v3859, 1.442695
        %v3975 = vpow.pop %v3974
        %v3976 = vmul.f32 %v3860, 1.442695
        %v3977 = vpow.pop %v3976
        %v3978 = vmul.f32 %v3861, 1.442695
        %v3979 = vpow.pop %v3978
        %v3980 = vmul.f32 %v3862, 1.442695
        %v3981 = vpow.pop %v3980
        %v3982 = vmul.f32 %v3863, 1.442695
        %v3983 = vpow.pop %v3982
        %v3984 = vmul.f32 %v3864, 1.442695
        %v3985 = vpow.pop %v3984
        %v3986 = vmul.f32 %v3865, 1.442695
        %v3987 = vpow.pop %v3986
        %v3988 = vmul.f32 %v3866, 1.442695
        %v3989 = vpow.pop %v3988
        %v3990 = vmul.f32 %v3867, 1.442695
        %v3991 = vpow.pop %v3990
        %v3992 = vmul.f32 %v3868, 1.442695
        %v3993 = vpow.pop %v3992
        %v3994 = vmul.f32 %v3869, 1.442695
        %v3995 = vpow.pop %v3994
        %v3996 = vmul.f32 %v3870, 1.442695
        %v3997 = vpow.pop %v3996
        %v3998 = vmul.f32 %v3871, 1.442695
        %v3999 = vpow.pop %v3998
        %v4000 = vadd.f32 %v3873, 1.0
        %v4001 = vadd.f32 %v3875, 1.0
        %v4002 = vadd.f32 %v3877, 1.0
        %v4003 = vadd.f32 %v3879, 1.0
        %v4004 = vadd.f32 %v3881, 1.0
        %v4005 = vadd.f32 %v3883, 1.0
        %v4006 = vadd.f32 %v3885, 1.0
        %v4007 = vadd.f32 %v3887, 1.0
        %v4008 = vadd.f32 %v3889, 1.0
        %v4009 = vadd.f32 %v3891, 1.0
        %v4010 = vadd.f32 %v3893, 1.0
        %v4011 = vadd.f32 %v3895, 1.0
        %v4012 = vadd.f32 %v3897, 1.0
        %v4013 = vadd.f32 %v3899, 1.0
        %v4014 = vadd.f32 %v3901, 1.0
        %v4015 = vadd.f32 %v3903, 1.0
        %v4016 = vadd.f32 %v3905, 1.0
        %v4017 = vadd.f32 %v3907, 1.0
        %v4018 = vadd.f32 %v3909, 1.0
        %v4019 = vadd.f32 %v3911, 1.0
        %v4020 = vadd.f32 %v3913, 1.0
        %v4021 = vadd.f32 %v3915, 1.0
        %v4022 = vadd.f32 %v3917, 1.0
        %v4023 = vadd.f32 %v3919, 1.0
        %v4024 = vadd.f32 %v3921, 1.0
        %v4025 = vadd.f32 %v3923, 1.0
        %v4026 = vadd.f32 %v3925, 1.0
        %v4027 = vadd.f32 %v3927, 1.0
        %v4028 = vadd.f32 %v3929, 1.0
        %v4029 = vadd.f32 %v3931, 1.0
        %v4030 = vadd.f32 %v3933, 1.0
        %v4031 = vadd.f32 %v3935, 1.0
        %v4032 = vadd.f32 %v3937, 1.0
        %v4033 = vadd.f32 %v3939, 1.0
        %v4034 = vadd.f32 %v3941, 1.0
        %v4035 = vadd.f32 %v3943, 1.0
        %v4036 = vadd.f32 %v3945, 1.0
        %v4037 = vadd.f32 %v3947, 1.0
        %v4038 = vadd.f32 %v3949, 1.0
        %v4039 = vadd.f32 %v3951, 1.0
        %v4040 = vadd.f32 %v3953, 1.0
        %v4041 = vadd.f32 %v3955, 1.0
        %v4042 = vadd.f32 %v3957, 1.0
        %v4043 = vadd.f32 %v3959, 1.0
        %v4044 = vadd.f32 %v3961, 1.0
        %v4045 = vadd.f32 %v3963, 1.0
        %v4046 = vadd.f32 %v3965, 1.0
        %v4047 = vadd.f32 %v3967, 1.0
        %v4048 = vadd.f32 %v3969, 1.0
        %v4049 = vadd.f32 %v3971, 1.0
        %v4050 = vadd.f32 %v3973, 1.0
        %v4051 = vadd.f32 %v3975, 1.0
        %v4052 = vadd.f32 %v3977, 1.0
        %v4053 = vadd.f32 %v3979, 1.0
        %v4054 = vadd.f32 %v3981, 1.0
        %v4055 = vadd.f32 %v3983, 1.0
        %v4056 = vadd.f32 %v3985, 1.0
        %v4057 = vadd.f32 %v3987, 1.0
        %v4058 = vadd.f32 %v3989, 1.0
        %v4059 = vadd.f32 %v3991, 1.0
        %v4060 = vadd.f32 %v3993, 1.0
        %v4061 = vadd.f32 %v3995, 1.0
        %v4062 = vadd.f32 %v3997, 1.0
        %v4063 = vadd.f32 %v3999, 1.0
        %v4064 = vrcp.pop %v4000
        %v4065 = vmul.f32 1.0, %v4064
        %v4066 = vrcp.pop %v4001
        %v4067 = vmul.f32 1.0, %v4066
        %v4068 = vrcp.pop %v4002
        %v4069 = vmul.f32 1.0, %v4068
        %v4070 = vrcp.pop %v4003
        %v4071 = vmul.f32 1.0, %v4070
        %v4072 = vrcp.pop %v4004
        %v4073 = vmul.f32 1.0, %v4072
        %v4074 = vrcp.pop %v4005
        %v4075 = vmul.f32 1.0, %v4074
        %v4076 = vrcp.pop %v4006
        %v4077 = vmul.f32 1.0, %v4076
        %v4078 = vrcp.pop %v4007
        %v4079 = vmul.f32 1.0, %v4078
        %v4080 = vrcp.pop %v4008
        %v4081 = vmul.f32 1.0, %v4080
        %v4082 = vrcp.pop %v4009
        %v4083 = vmul.f32 1.0, %v4082
        %v4084 = vrcp.pop %v4010
        %v4085 = vmul.f32 1.0, %v4084
        %v4086 = vrcp.pop %v4011
        %v4087 = vmul.f32 1.0, %v4086
        %v4088 = vrcp.pop %v4012
        %v4089 = vmul.f32 1.0, %v4088
        %v4090 = vrcp.pop %v4013
        %v4091 = vmul.f32 1.0, %v4090
        %v4092 = vrcp.pop %v4014
        %v4093 = vmul.f32 1.0, %v4092
        %v4094 = vrcp.pop %v4015
        %v4095 = vmul.f32 1.0, %v4094
        %v4096 = vrcp.pop %v4016
        %v4097 = vmul.f32 1.0, %v4096
        %v4098 = vrcp.pop %v4017
        %v4099 = vmul.f32 1.0, %v4098
        %v4100 = vrcp.pop %v4018
        %v4101 = vmul.f32 1.0, %v4100
        %v4102 = vrcp.pop %v4019
        %v4103 = vmul.f32 1.0, %v4102
        %v4104 = vrcp.pop %v4020
        %v4105 = vmul.f32 1.0, %v4104
        %v4106 = vrcp.pop %v4021
        %v4107 = vmul.f32 1.0, %v4106
        %v4108 = vrcp.pop %v4022
        %v4109 = vmul.f32 1.0, %v4108
        %v4110 = vrcp.pop %v4023
        %v4111 = vmul.f32 1.0, %v4110
        %v4112 = vrcp.pop %v4024
        %v4113 = vmul.f32 1.0, %v4112
        %v4114 = vrcp.pop %v4025
        %v4115 = vmul.f32 1.0, %v4114
        %v4116 = vrcp.pop %v4026
        %v4117 = vmul.f32 1.0, %v4116
        %v4118 = vrcp.pop %v4027
        %v4119 = vmul.f32 1.0, %v4118
        %v4120 = vrcp.pop %v4028
        %v4121 = vmul.f32 1.0, %v4120
        %v4122 = vrcp.pop %v4029
        %v4123 = vmul.f32 1.0, %v4122
        %v4124 = vrcp.pop %v4030
        %v4125 = vmul.f32 1.0, %v4124
        %v4126 = vrcp.pop %v4031
        %v4127 = vmul.f32 1.0, %v4126
        %v4128 = vrcp.pop %v4032
        %v4129 = vmul.f32 1.0, %v4128
        %v4130 = vrcp.pop %v4033
        %v4131 = vmul.f32 1.0, %v4130
        %v4132 = vrcp.pop %v4034
        %v4133 = vmul.f32 1.0, %v4132
        %v4134 = vrcp.pop %v4035
        %v4135 = vmul.f32 1.0, %v4134
        %v4136 = vrcp.pop %v4036
        %v4137 = vmul.f32 1.0, %v4136
        %v4138 = vrcp.pop %v4037
        %v4139 = vmul.f32 1.0, %v4138
        %v4140 = vrcp.pop %v4038
        %v4141 = vmul.f32 1.0, %v4140
        %v4142 = vrcp.pop %v4039
        %v4143 = vmul.f32 1.0, %v4142
        %v4144 = vrcp.pop %v4040
        %v4145 = vmul.f32 1.0, %v4144
        %v4146 = vrcp.pop %v4041
        %v4147 = vmul.f32 1.0, %v4146
        %v4148 = vrcp.pop %v4042
        %v4149 = vmul.f32 1.0, %v4148
        %v4150 = vrcp.pop %v4043
        %v4151 = vmul.f32 1.0, %v4150
        %v4152 = vrcp.pop %v4044
        %v4153 = vmul.f32 1.0, %v4152
        %v4154 = vrcp.pop %v4045
        %v4155 = vmul.f32 1.0, %v4154
        %v4156 = vrcp.pop %v4046
        %v4157 = vmul.f32 1.0, %v4156
        %v4158 = vrcp.pop %v4047
        %v4159 = vmul.f32 1.0, %v4158
        %v4160 = vrcp.pop %v4048
        %v4161 = vmul.f32 1.0, %v4160
        %v4162 = vrcp.pop %v4049
        %v4163 = vmul.f32 1.0, %v4162
        %v4164 = vrcp.pop %v4050
        %v4165 = vmul.f32 1.0, %v4164
        %v4166 = vrcp.pop %v4051
        %v4167 = vmul.f32 1.0, %v4166
        %v4168 = vrcp.pop %v4052
        %v4169 = vmul.f32 1.0, %v4168
        %v4170 = vrcp.pop %v4053
        %v4171 = vmul.f32 1.0, %v4170
        %v4172 = vrcp.pop %v4054
        %v4173 = vmul.f32 1.0, %v4172
        %v4174 = vrcp.pop %v4055
        %v4175 = vmul.f32 1.0, %v4174
        %v4176 = vrcp.pop %v4056
        %v4177 = vmul.f32 1.0, %v4176
        %v4178 = vrcp.pop %v4057
        %v4179 = vmul.f32 1.0, %v4178
        %v4180 = vrcp.pop %v4058
        %v4181 = vmul.f32 1.0, %v4180
        %v4182 = vrcp.pop %v4059
        %v4183 = vmul.f32 1.0, %v4182
        %v4184 = vrcp.pop %v4060
        %v4185 = vmul.f32 1.0, %v4184
        %v4186 = vrcp.pop %v4061
        %v4187 = vmul.f32 1.0, %v4186
        %v4188 = vrcp.pop %v4062
        %v4189 = vmul.f32 1.0, %v4188
        %v4190 = vrcp.pop %v4063
        %v4191 = vmul.f32 1.0, %v4190
        %v4192 = vmul.f32 %v2529, %v4065
        %v4193 = vmul.f32 %v2530, %v4067
        %v4194 = vmul.f32 %v2531, %v4069
        %v4195 = vmul.f32 %v2532, %v4071
        %v4196 = vmul.f32 %v2533, %v4073
        %v4197 = vmul.f32 %v2534, %v4075
        %v4198 = vmul.f32 %v2535, %v4077
        %v4199 = vmul.f32 %v2536, %v4079
        %v4200 = vmul.f32 %v2537, %v4081
        %v4201 = vmul.f32 %v2538, %v4083
        %v4202 = vmul.f32 %v2539, %v4085
        %v4203 = vmul.f32 %v2540, %v4087
        %v4204 = vmul.f32 %v2541, %v4089
        %v4205 = vmul.f32 %v2542, %v4091
        %v4206 = vmul.f32 %v2543, %v4093
        %v4207 = vmul.f32 %v2544, %v4095
        %v4208 = vmul.f32 %v2545, %v4097
        %v4209 = vmul.f32 %v2546, %v4099
        %v4210 = vmul.f32 %v2547, %v4101
        %v4211 = vmul.f32 %v2548, %v4103
        %v4212 = vmul.f32 %v2549, %v4105
        %v4213 = vmul.f32 %v2550, %v4107
        %v4214 = vmul.f32 %v2551, %v4109
        %v4215 = vmul.f32 %v2552, %v4111
        %v4216 = vmul.f32 %v2553, %v4113
        %v4217 = vmul.f32 %v2554, %v4115
        %v4218 = vmul.f32 %v2555, %v4117
        %v4219 = vmul.f32 %v2556, %v4119
        %v4220 = vmul.f32 %v2557, %v4121
        %v4221 = vmul.f32 %v2558, %v4123
        %v4222 = vmul.f32 %v2559, %v4125
        %v4223 = vmul.f32 %v2560, %v4127
        %v4224 = vmul.f32 %v2561, %v4129
        %v4225 = vmul.f32 %v2562, %v4131
        %v4226 = vmul.f32 %v2563, %v4133
        %v4227 = vmul.f32 %v2564, %v4135
        %v4228 = vmul.f32 %v2565, %v4137
        %v4229 = vmul.f32 %v2566, %v4139
        %v4230 = vmul.f32 %v2567, %v4141
        %v4231 = vmul.f32 %v2568, %v4143
        %v4232 = vmul.f32 %v2569, %v4145
        %v4233 = vmul.f32 %v2570, %v4147
        %v4234 = vmul.f32 %v2571, %v4149
        %v4235 = vmul.f32 %v2572, %v4151
        %v4236 = vmul.f32 %v2573, %v4153
        %v4237 = vmul.f32 %v2574, %v4155
        %v4238 = vmul.f32 %v2575, %v4157
        %v4239 = vmul.f32 %v2576, %v4159
        %v4240 = vmul.f32 %v2577, %v4161
        %v4241 = vmul.f32 %v2578, %v4163
        %v4242 = vmul.f32 %v2579, %v4165
        %v4243 = vmul.f32 %v2580, %v4167
        %v4244 = vmul.f32 %v2581, %v4169
        %v4245 = vmul.f32 %v2582, %v4171
        %v4246 = vmul.f32 %v2583, %v4173
        %v4247 = vmul.f32 %v2584, %v4175
        %v4248 = vmul.f32 %v2585, %v4177
        %v4249 = vmul.f32 %v2586, %v4179
        %v4250 = vmul.f32 %v2587, %v4181
        %v4251 = vmul.f32 %v2588, %v4183
        %v4252 = vmul.f32 %v2589, %v4185
        %v4253 = vmul.f32 %v2590, %v4187
        %v4254 = vmul.f32 %v2591, %v4189
        %v4255 = vmul.f32 %v2592, %v4191
        %4256 = vst [vmem:[%s532] sm:$0xff] %v4192
        %4257 = vst [vmem:[%s532 + $0x8] sm:$0xff] %v4193
        %4258 = vst [vmem:[%s532 + $0x10] sm:$0xff] %v4194
        %4259 = vst [vmem:[%s532 + $0x18] sm:$0xff] %v4195
        %4260 = vst [vmem:[%s532 + $0x20] sm:$0xff] %v4196
        %4261 = vst [vmem:[%s532 + $0x28] sm:$0xff] %v4197
        %4262 = vst [vmem:[%s532 + $0x30] sm:$0xff] %v4198
        %4263 = vst [vmem:[%s532 + $0x38] sm:$0xff] %v4199
        %4264 = vst [vmem:[%s532 + $0x40] sm:$0xff] %v4200
        %4265 = vst [vmem:[%s532 + $0x48] sm:$0xff] %v4201
        %4266 = vst [vmem:[%s532 + $0x50] sm:$0xff] %v4202
        %4267 = vst [vmem:[%s532 + $0x58] sm:$0xff] %v4203
        %4268 = vst [vmem:[%s532 + $0x60] sm:$0xff] %v4204
        %4269 = vst [vmem:[%s532 + $0x68] sm:$0xff] %v4205
        %4270 = vst [vmem:[%s532 + $0x70] sm:$0xff] %v4206
        %4271 = vst [vmem:[%s532 + $0x78] sm:$0xff] %v4207
        %4272 = vst [vmem:[%s532 + $0x80] sm:$0xff] %v4208
        %4273 = vst [vmem:[%s532 + $0x88] sm:$0xff] %v4209
        %4274 = vst [vmem:[%s532 + $0x90] sm:$0xff] %v4210
        %4275 = vst [vmem:[%s532 + $0x98] sm:$0xff] %v4211
        %4276 = vst [vmem:[%s532 + $0xa0] sm:$0xff] %v4212
        %4277 = vst [vmem:[%s532 + $0xa8] sm:$0xff] %v4213
        %4278 = vst [vmem:[%s532 + $0xb0] sm:$0xff] %v4214
        %4279 = vst [vmem:[%s532 + $0xb8] sm:$0xff] %v4215
        %4280 = vst [vmem:[%s532 + $0xc0] sm:$0xff] %v4216
        %4281 = vst [vmem:[%s532 + $0xc8] sm:$0xff] %v4217
        %4282 = vst [vmem:[%s532 + $0xd0] sm:$0xff] %v4218
        %4283 = vst [vmem:[%s532 + $0xd8] sm:$0xff] %v4219
        %4284 = vst [vmem:[%s532 + $0xe0] sm:$0xff] %v4220
        %4285 = vst [vmem:[%s532 + $0xe8] sm:$0xff] %v4221
        %4286 = vst [vmem:[%s532 + $0xf0] sm:$0xff] %v4222
        %4287 = vst [vmem:[%s532 + $0xf8] sm:$0xff] %v4223
        %4288 = vst [vmem:[%s532 + $0x100] sm:$0xff] %v4224
        %4289 = vst [vmem:[%s532 + $0x108] sm:$0xff] %v4225
        %4290 = vst [vmem:[%s532 + $0x110] sm:$0xff] %v4226
        %4291 = vst [vmem:[%s532 + $0x118] sm:$0xff] %v4227
        %4292 = vst [vmem:[%s532 + $0x120] sm:$0xff] %v4228
        %4293 = vst [vmem:[%s532 + $0x128] sm:$0xff] %v4229
        %4294 = vst [vmem:[%s532 + $0x130] sm:$0xff] %v4230
        %4295 = vst [vmem:[%s532 + $0x138] sm:$0xff] %v4231
        %4296 = vst [vmem:[%s532 + $0x140] sm:$0xff] %v4232
        %4297 = vst [vmem:[%s532 + $0x148] sm:$0xff] %v4233
        %4298 = vst [vmem:[%s532 + $0x150] sm:$0xff] %v4234
        %4299 = vst [vmem:[%s532 + $0x158] sm:$0xff] %v4235
        %4300 = vst [vmem:[%s532 + $0x160] sm:$0xff] %v4236
        %4301 = vst [vmem:[%s532 + $0x168] sm:$0xff] %v4237
        %4302 = vst [vmem:[%s532 + $0x170] sm:$0xff] %v4238
        %4303 = vst [vmem:[%s532 + $0x178] sm:$0xff] %v4239
        %4304 = vst [vmem:[%s532 + $0x180] sm:$0xff] %v4240
        %4305 = vst [vmem:[%s532 + $0x188] sm:$0xff] %v4241
        %4306 = vst [vmem:[%s532 + $0x190] sm:$0xff] %v4242
        %4307 = vst [vmem:[%s532 + $0x198] sm:$0xff] %v4243
        %4308 = vst [vmem:[%s532 + $0x1a0] sm:$0xff] %v4244
        %4309 = vst [vmem:[%s532 + $0x1a8] sm:$0xff] %v4245
        %4310 = vst [vmem:[%s532 + $0x1b0] sm:$0xff] %v4246
        %4311 = vst [vmem:[%s532 + $0x1b8] sm:$0xff] %v4247
        %4312 = vst [vmem:[%s532 + $0x1c0] sm:$0xff] %v4248
        %4313 = vst [vmem:[%s532 + $0x1c8] sm:$0xff] %v4249
        %4314 = vst [vmem:[%s532 + $0x1d0] sm:$0xff] %v4250
        %4315 = vst [vmem:[%s532 + $0x1d8] sm:$0xff] %v4251
        %4316 = vst [vmem:[%s532 + $0x1e0] sm:$0xff] %v4252
        %4317 = vst [vmem:[%s532 + $0x1e8] sm:$0xff] %v4253
        %4318 = vst [vmem:[%s532 + $0x1f0] sm:$0xff] %v4254
        %4319 = vst [vmem:[%s532 + $0x1f8] sm:$0xff] %v4255
        %v4320 = vxor.u32 %v3744, 2147483648
        %v4321 = vxor.u32 %v3745, 2147483648
        %v4322 = vxor.u32 %v3746, 2147483648
        %v4323 = vxor.u32 %v3747, 2147483648
        %v4324 = vxor.u32 %v3748, 2147483648
        %v4325 = vxor.u32 %v3749, 2147483648
        %v4326 = vxor.u32 %v3750, 2147483648
        %v4327 = vxor.u32 %v3751, 2147483648
        %v4328 = vxor.u32 %v3752, 2147483648
        %v4329 = vxor.u32 %v3753, 2147483648
        %v4330 = vxor.u32 %v3754, 2147483648
        %v4331 = vxor.u32 %v3755, 2147483648
        %v4332 = vxor.u32 %v3756, 2147483648
        %v4333 = vxor.u32 %v3757, 2147483648
        %v4334 = vxor.u32 %v3758, 2147483648
        %v4335 = vxor.u32 %v3759, 2147483648
        %v4336 = vxor.u32 %v3760, 2147483648
        %v4337 = vxor.u32 %v3761, 2147483648
        %v4338 = vxor.u32 %v3762, 2147483648
        %v4339 = vxor.u32 %v3763, 2147483648
        %v4340 = vxor.u32 %v3764, 2147483648
        %v4341 = vxor.u32 %v3765, 2147483648
        %v4342 = vxor.u32 %v3766, 2147483648
        %v4343 = vxor.u32 %v3767, 2147483648
        %v4344 = vxor.u32 %v3768, 2147483648
        %v4345 = vxor.u32 %v3769, 2147483648
        %v4346 = vxor.u32 %v3770, 2147483648
        %v4347 = vxor.u32 %v3771, 2147483648
        %v4348 = vxor.u32 %v3772, 2147483648
        %v4349 = vxor.u32 %v3773, 2147483648
        %v4350 = vxor.u32 %v3774, 2147483648
        %v4351 = vxor.u32 %v3775, 2147483648
        %v4352 = vxor.u32 %v3776, 2147483648
        %v4353 = vxor.u32 %v3777, 2147483648
        %v4354 = vxor.u32 %v3778, 2147483648
        %v4355 = vxor.u32 %v3779, 2147483648
        %v4356 = vxor.u32 %v3780, 2147483648
        %v4357 = vxor.u32 %v3781, 2147483648
        %v4358 = vxor.u32 %v3782, 2147483648
        %v4359 = vxor.u32 %v3783, 2147483648
        %v4360 = vxor.u32 %v3784, 2147483648
        %v4361 = vxor.u32 %v3785, 2147483648
        %v4362 = vxor.u32 %v3786, 2147483648
        %v4363 = vxor.u32 %v3787, 2147483648
        %v4364 = vxor.u32 %v3788, 2147483648
        %v4365 = vxor.u32 %v3789, 2147483648
        %v4366 = vxor.u32 %v3790, 2147483648
        %v4367 = vxor.u32 %v3791, 2147483648
        %v4368 = vxor.u32 %v3792, 2147483648
        %v4369 = vxor.u32 %v3793, 2147483648
        %v4370 = vxor.u32 %v3794, 2147483648
        %v4371 = vxor.u32 %v3795, 2147483648
        %v4372 = vxor.u32 %v3796, 2147483648
        %v4373 = vxor.u32 %v3797, 2147483648
        %v4374 = vxor.u32 %v3798, 2147483648
        %v4375 = vxor.u32 %v3799, 2147483648
        %v4376 = vxor.u32 %v3800, 2147483648
        %v4377 = vxor.u32 %v3801, 2147483648
        %v4378 = vxor.u32 %v3802, 2147483648
        %v4379 = vxor.u32 %v3803, 2147483648
        %v4380 = vxor.u32 %v3804, 2147483648
        %v4381 = vxor.u32 %v3805, 2147483648
        %v4382 = vxor.u32 %v3806, 2147483648
        %v4383 = vxor.u32 %v3807, 2147483648
        %v4384 = vmul.f32 %v4320, 1.442695
        %v4385 = vpow.pop %v4384
        %v4386 = vmul.f32 %v4321, 1.442695
        %v4387 = vpow.pop %v4386
        %v4388 = vmul.f32 %v4322, 1.442695
        %v4389 = vpow.pop %v4388
        %v4390 = vmul.f32 %v4323, 1.442695
        %v4391 = vpow.pop %v4390
        %v4392 = vmul.f32 %v4324, 1.442695
        %v4393 = vpow.pop %v4392
        %v4394 = vmul.f32 %v4325, 1.442695
        %v4395 = vpow.pop %v4394
        %v4396 = vmul.f32 %v4326, 1.442695
        %v4397 = vpow.pop %v4396
        %v4398 = vmul.f32 %v4327, 1.442695
        %v4399 = vpow.pop %v4398
        %v4400 = vmul.f32 %v4328, 1.442695
        %v4401 = vpow.pop %v4400
        %v4402 = vmul.f32 %v4329, 1.442695
        %v4403 = vpow.pop %v4402
        %v4404 = vmul.f32 %v4330, 1.442695
        %v4405 = vpow.pop %v4404
        %v4406 = vmul.f32 %v4331, 1.442695
        %v4407 = vpow.pop %v4406
        %v4408 = vmul.f32 %v4332, 1.442695
        %v4409 = vpow.pop %v4408
        %v4410 = vmul.f32 %v4333, 1.442695
        %v4411 = vpow.pop %v4410
        %v4412 = vmul.f32 %v4334, 1.442695
        %v4413 = vpow.pop %v4412
        %v4414 = vmul.f32 %v4335, 1.442695
        %v4415 = vpow.pop %v4414
        %v4416 = vmul.f32 %v4336, 1.442695
        %v4417 = vpow.pop %v4416
        %v4418 = vmul.f32 %v4337, 1.442695
        %v4419 = vpow.pop %v4418
        %v4420 = vmul.f32 %v4338, 1.442695
        %v4421 = vpow.pop %v4420
        %v4422 = vmul.f32 %v4339, 1.442695
        %v4423 = vpow.pop %v4422
        %v4424 = vmul.f32 %v4340, 1.442695
        %v4425 = vpow.pop %v4424
        %v4426 = vmul.f32 %v4341, 1.442695
        %v4427 = vpow.pop %v4426
        %v4428 = vmul.f32 %v4342, 1.442695
        %v4429 = vpow.pop %v4428
        %v4430 = vmul.f32 %v4343, 1.442695
        %v4431 = vpow.pop %v4430
        %v4432 = vmul.f32 %v4344, 1.442695
        %v4433 = vpow.pop %v4432
        %v4434 = vmul.f32 %v4345, 1.442695
        %v4435 = vpow.pop %v4434
        %v4436 = vmul.f32 %v4346, 1.442695
        %v4437 = vpow.pop %v4436
        %v4438 = vmul.f32 %v4347, 1.442695
        %v4439 = vpow.pop %v4438
        %v4440 = vmul.f32 %v4348, 1.442695
        %v4441 = vpow.pop %v4440
        %v4442 = vmul.f32 %v4349, 1.442695
        %v4443 = vpow.pop %v4442
        %v4444 = vmul.f32 %v4350, 1.442695
        %v4445 = vpow.pop %v4444
        %v4446 = vmul.f32 %v4351, 1.442695
        %v4447 = vpow.pop %v4446
        %v4448 = vmul.f32 %v4352, 1.442695
        %v4449 = vpow.pop %v4448
        %v4450 = vmul.f32 %v4353, 1.442695
        %v4451 = vpow.pop %v4450
        %v4452 = vmul.f32 %v4354, 1.442695
        %v4453 = vpow.pop %v4452
        %v4454 = vmul.f32 %v4355, 1.442695
        %v4455 = vpow.pop %v4454
        %v4456 = vmul.f32 %v4356, 1.442695
        %v4457 = vpow.pop %v4456
        %v4458 = vmul.f32 %v4357, 1.442695
        %v4459 = vpow.pop %v4458
        %v4460 = vmul.f32 %v4358, 1.442695
        %v4461 = vpow.pop %v4460
        %v4462 = vmul.f32 %v4359, 1.442695
        %v4463 = vpow.pop %v4462
        %v4464 = vmul.f32 %v4360, 1.442695
        %v4465 = vpow.pop %v4464
        %v4466 = vmul.f32 %v4361, 1.442695
        %v4467 = vpow.pop %v4466
        %v4468 = vmul.f32 %v4362, 1.442695
        %v4469 = vpow.pop %v4468
        %v4470 = vmul.f32 %v4363, 1.442695
        %v4471 = vpow.pop %v4470
        %v4472 = vmul.f32 %v4364, 1.442695
        %v4473 = vpow.pop %v4472
        %v4474 = vmul.f32 %v4365, 1.442695
        %v4475 = vpow.pop %v4474
        %v4476 = vmul.f32 %v4366, 1.442695
        %v4477 = vpow.pop %v4476
        %v4478 = vmul.f32 %v4367, 1.442695
        %v4479 = vpow.pop %v4478
        %v4480 = vmul.f32 %v4368, 1.442695
        %v4481 = vpow.pop %v4480
        %v4482 = vmul.f32 %v4369, 1.442695
        %v4483 = vpow.pop %v4482
        %v4484 = vmul.f32 %v4370, 1.442695
        %v4485 = vpow.pop %v4484
        %v4486 = vmul.f32 %v4371, 1.442695
        %v4487 = vpow.pop %v4486
        %v4488 = vmul.f32 %v4372, 1.442695
        %v4489 = vpow.pop %v4488
        %v4490 = vmul.f32 %v4373, 1.442695
        %v4491 = vpow.pop %v4490
        %v4492 = vmul.f32 %v4374, 1.442695
        %v4493 = vpow.pop %v4492
        %v4494 = vmul.f32 %v4375, 1.442695
        %v4495 = vpow.pop %v4494
        %v4496 = vmul.f32 %v4376, 1.442695
        %v4497 = vpow.pop %v4496
        %v4498 = vmul.f32 %v4377, 1.442695
        %v4499 = vpow.pop %v4498
        %v4500 = vmul.f32 %v4378, 1.442695
        %v4501 = vpow.pop %v4500
        %v4502 = vmul.f32 %v4379, 1.442695
        %v4503 = vpow.pop %v4502
        %v4504 = vmul.f32 %v4380, 1.442695
        %v4505 = vpow.pop %v4504
        %v4506 = vmul.f32 %v4381, 1.442695
        %v4507 = vpow.pop %v4506
        %v4508 = vmul.f32 %v4382, 1.442695
        %v4509 = vpow.pop %v4508
        %v4510 = vmul.f32 %v4383, 1.442695
        %v4511 = vpow.pop %v4510
        %v4512 = vadd.f32 %v4385, 1.0
        %v4513 = vadd.f32 %v4387, 1.0
        %v4514 = vadd.f32 %v4389, 1.0
        %v4515 = vadd.f32 %v4391, 1.0
        %v4516 = vadd.f32 %v4393, 1.0
        %v4517 = vadd.f32 %v4395, 1.0
        %v4518 = vadd.f32 %v4397, 1.0
        %v4519 = vadd.f32 %v4399, 1.0
        %v4520 = vadd.f32 %v4401, 1.0
        %v4521 = vadd.f32 %v4403, 1.0
        %v4522 = vadd.f32 %v4405, 1.0
        %v4523 = vadd.f32 %v4407, 1.0
        %v4524 = vadd.f32 %v4409, 1.0
        %v4525 = vadd.f32 %v4411, 1.0
        %v4526 = vadd.f32 %v4413, 1.0
        %v4527 = vadd.f32 %v4415, 1.0
        %v4528 = vadd.f32 %v4417, 1.0
        %v4529 = vadd.f32 %v4419, 1.0
        %v4530 = vadd.f32 %v4421, 1.0
        %v4531 = vadd.f32 %v4423, 1.0
        %v4532 = vadd.f32 %v4425, 1.0
        %v4533 = vadd.f32 %v4427, 1.0
        %v4534 = vadd.f32 %v4429, 1.0
        %v4535 = vadd.f32 %v4431, 1.0
        %v4536 = vadd.f32 %v4433, 1.0
        %v4537 = vadd.f32 %v4435, 1.0
        %v4538 = vadd.f32 %v4437, 1.0
        %v4539 = vadd.f32 %v4439, 1.0
        %v4540 = vadd.f32 %v4441, 1.0
        %v4541 = vadd.f32 %v4443, 1.0
        %v4542 = vadd.f32 %v4445, 1.0
        %v4543 = vadd.f32 %v4447, 1.0
        %v4544 = vadd.f32 %v4449, 1.0
        %v4545 = vadd.f32 %v4451, 1.0
        %v4546 = vadd.f32 %v4453, 1.0
        %v4547 = vadd.f32 %v4455, 1.0
        %v4548 = vadd.f32 %v4457, 1.0
        %v4549 = vadd.f32 %v4459, 1.0
        %v4550 = vadd.f32 %v4461, 1.0
        %v4551 = vadd.f32 %v4463, 1.0
        %v4552 = vadd.f32 %v4465, 1.0
        %v4553 = vadd.f32 %v4467, 1.0
        %v4554 = vadd.f32 %v4469, 1.0
        %v4555 = vadd.f32 %v4471, 1.0
        %v4556 = vadd.f32 %v4473, 1.0
        %v4557 = vadd.f32 %v4475, 1.0
        %v4558 = vadd.f32 %v4477, 1.0
        %v4559 = vadd.f32 %v4479, 1.0
        %v4560 = vadd.f32 %v4481, 1.0
        %v4561 = vadd.f32 %v4483, 1.0
        %v4562 = vadd.f32 %v4485, 1.0
        %v4563 = vadd.f32 %v4487, 1.0
        %v4564 = vadd.f32 %v4489, 1.0
        %v4565 = vadd.f32 %v4491, 1.0
        %v4566 = vadd.f32 %v4493, 1.0
        %v4567 = vadd.f32 %v4495, 1.0
        %v4568 = vadd.f32 %v4497, 1.0
        %v4569 = vadd.f32 %v4499, 1.0
        %v4570 = vadd.f32 %v4501, 1.0
        %v4571 = vadd.f32 %v4503, 1.0
        %v4572 = vadd.f32 %v4505, 1.0
        %v4573 = vadd.f32 %v4507, 1.0
        %v4574 = vadd.f32 %v4509, 1.0
        %v4575 = vadd.f32 %v4511, 1.0
        %v4576 = vrcp.pop %v4512
        %v4577 = vmul.f32 1.0, %v4576
        %v4578 = vrcp.pop %v4513
        %v4579 = vmul.f32 1.0, %v4578
        %v4580 = vrcp.pop %v4514
        %v4581 = vmul.f32 1.0, %v4580
        %v4582 = vrcp.pop %v4515
        %v4583 = vmul.f32 1.0, %v4582
        %v4584 = vrcp.pop %v4516
        %v4585 = vmul.f32 1.0, %v4584
        %v4586 = vrcp.pop %v4517
        %v4587 = vmul.f32 1.0, %v4586
        %v4588 = vrcp.pop %v4518
        %v4589 = vmul.f32 1.0, %v4588
        %v4590 = vrcp.pop %v4519
        %v4591 = vmul.f32 1.0, %v4590
        %v4592 = vrcp.pop %v4520
        %v4593 = vmul.f32 1.0, %v4592
        %v4594 = vrcp.pop %v4521
        %v4595 = vmul.f32 1.0, %v4594
        %v4596 = vrcp.pop %v4522
        %v4597 = vmul.f32 1.0, %v4596
        %v4598 = vrcp.pop %v4523
        %v4599 = vmul.f32 1.0, %v4598
        %v4600 = vrcp.pop %v4524
        %v4601 = vmul.f32 1.0, %v4600
        %v4602 = vrcp.pop %v4525
        %v4603 = vmul.f32 1.0, %v4602
        %v4604 = vrcp.pop %v4526
        %v4605 = vmul.f32 1.0, %v4604
        %v4606 = vrcp.pop %v4527
        %v4607 = vmul.f32 1.0, %v4606
        %v4608 = vrcp.pop %v4528
        %v4609 = vmul.f32 1.0, %v4608
        %v4610 = vrcp.pop %v4529
        %v4611 = vmul.f32 1.0, %v4610
        %v4612 = vrcp.pop %v4530
        %v4613 = vmul.f32 1.0, %v4612
        %v4614 = vrcp.pop %v4531
        %v4615 = vmul.f32 1.0, %v4614
        %v4616 = vrcp.pop %v4532
        %v4617 = vmul.f32 1.0, %v4616
        %v4618 = vrcp.pop %v4533
        %v4619 = vmul.f32 1.0, %v4618
        %v4620 = vrcp.pop %v4534
        %v4621 = vmul.f32 1.0, %v4620
        %v4622 = vrcp.pop %v4535
        %v4623 = vmul.f32 1.0, %v4622
        %v4624 = vrcp.pop %v4536
        %v4625 = vmul.f32 1.0, %v4624
        %v4626 = vrcp.pop %v4537
        %v4627 = vmul.f32 1.0, %v4626
        %v4628 = vrcp.pop %v4538
        %v4629 = vmul.f32 1.0, %v4628
        %v4630 = vrcp.pop %v4539
        %v4631 = vmul.f32 1.0, %v4630
        %v4632 = vrcp.pop %v4540
        %v4633 = vmul.f32 1.0, %v4632
        %v4634 = vrcp.pop %v4541
        %v4635 = vmul.f32 1.0, %v4634
        %v4636 = vrcp.pop %v4542
        %v4637 = vmul.f32 1.0, %v4636
        %v4638 = vrcp.pop %v4543
        %v4639 = vmul.f32 1.0, %v4638
        %v4640 = vrcp.pop %v4544
        %v4641 = vmul.f32 1.0, %v4640
        %v4642 = vrcp.pop %v4545
        %v4643 = vmul.f32 1.0, %v4642
        %v4644 = vrcp.pop %v4546
        %v4645 = vmul.f32 1.0, %v4644
        %v4646 = vrcp.pop %v4547
        %v4647 = vmul.f32 1.0, %v4646
        %v4648 = vrcp.pop %v4548
        %v4649 = vmul.f32 1.0, %v4648
        %v4650 = vrcp.pop %v4549
        %v4651 = vmul.f32 1.0, %v4650
        %v4652 = vrcp.pop %v4550
        %v4653 = vmul.f32 1.0, %v4652
        %v4654 = vrcp.pop %v4551
        %v4655 = vmul.f32 1.0, %v4654
        %v4656 = vrcp.pop %v4552
        %v4657 = vmul.f32 1.0, %v4656
        %v4658 = vrcp.pop %v4553
        %v4659 = vmul.f32 1.0, %v4658
        %v4660 = vrcp.pop %v4554
        %v4661 = vmul.f32 1.0, %v4660
        %v4662 = vrcp.pop %v4555
        %v4663 = vmul.f32 1.0, %v4662
        %v4664 = vrcp.pop %v4556
        %v4665 = vmul.f32 1.0, %v4664
        %v4666 = vrcp.pop %v4557
        %v4667 = vmul.f32 1.0, %v4666
        %v4668 = vrcp.pop %v4558
        %v4669 = vmul.f32 1.0, %v4668
        %v4670 = vrcp.pop %v4559
        %v4671 = vmul.f32 1.0, %v4670
        %v4672 = vrcp.pop %v4560
        %v4673 = vmul.f32 1.0, %v4672
        %v4674 = vrcp.pop %v4561
        %v4675 = vmul.f32 1.0, %v4674
        %v4676 = vrcp.pop %v4562
        %v4677 = vmul.f32 1.0, %v4676
        %v4678 = vrcp.pop %v4563
        %v4679 = vmul.f32 1.0, %v4678
        %v4680 = vrcp.pop %v4564
        %v4681 = vmul.f32 1.0, %v4680
        %v4682 = vrcp.pop %v4565
        %v4683 = vmul.f32 1.0, %v4682
        %v4684 = vrcp.pop %v4566
        %v4685 = vmul.f32 1.0, %v4684
        %v4686 = vrcp.pop %v4567
        %v4687 = vmul.f32 1.0, %v4686
        %v4688 = vrcp.pop %v4568
        %v4689 = vmul.f32 1.0, %v4688
        %v4690 = vrcp.pop %v4569
        %v4691 = vmul.f32 1.0, %v4690
        %v4692 = vrcp.pop %v4570
        %v4693 = vmul.f32 1.0, %v4692
        %v4694 = vrcp.pop %v4571
        %v4695 = vmul.f32 1.0, %v4694
        %v4696 = vrcp.pop %v4572
        %v4697 = vmul.f32 1.0, %v4696
        %v4698 = vrcp.pop %v4573
        %v4699 = vmul.f32 1.0, %v4698
        %v4700 = vrcp.pop %v4574
        %v4701 = vmul.f32 1.0, %v4700
        %v4702 = vrcp.pop %v4575
        %v4703 = vmul.f32 1.0, %v4702
        %v4704 = vmul.f32 %v2934, %v4577
        %v4705 = vmul.f32 %v2935, %v4579
        %v4706 = vmul.f32 %v2936, %v4581
        %v4707 = vmul.f32 %v2937, %v4583
        %v4708 = vmul.f32 %v2938, %v4585
        %v4709 = vmul.f32 %v2939, %v4587
        %v4710 = vmul.f32 %v2940, %v4589
        %v4711 = vmul.f32 %v2941, %v4591
        %v4712 = vmul.f32 %v2942, %v4593
        %v4713 = vmul.f32 %v2943, %v4595
        %v4714 = vmul.f32 %v2944, %v4597
        %v4715 = vmul.f32 %v2945, %v4599
        %v4716 = vmul.f32 %v2946, %v4601
        %v4717 = vmul.f32 %v2947, %v4603
        %v4718 = vmul.f32 %v2948, %v4605
        %v4719 = vmul.f32 %v2949, %v4607
        %v4720 = vmul.f32 %v2950, %v4609
        %v4721 = vmul.f32 %v2951, %v4611
        %v4722 = vmul.f32 %v2952, %v4613
        %v4723 = vmul.f32 %v2953, %v4615
        %v4724 = vmul.f32 %v2954, %v4617
        %v4725 = vmul.f32 %v2955, %v4619
        %v4726 = vmul.f32 %v2956, %v4621
        %v4727 = vmul.f32 %v2957, %v4623
        %v4728 = vmul.f32 %v2958, %v4625
        %v4729 = vmul.f32 %v2959, %v4627
        %v4730 = vmul.f32 %v2960, %v4629
        %v4731 = vmul.f32 %v2961, %v4631
        %v4732 = vmul.f32 %v2962, %v4633
        %v4733 = vmul.f32 %v2963, %v4635
        %v4734 = vmul.f32 %v2964, %v4637
        %v4735 = vmul.f32 %v2965, %v4639
        %v4736 = vmul.f32 %v2966, %v4641
        %v4737 = vmul.f32 %v2967, %v4643
        %v4738 = vmul.f32 %v2968, %v4645
        %v4739 = vmul.f32 %v2969, %v4647
        %v4740 = vmul.f32 %v2970, %v4649
        %v4741 = vmul.f32 %v2971, %v4651
        %v4742 = vmul.f32 %v2972, %v4653
        %v4743 = vmul.f32 %v2973, %v4655
        %v4744 = vmul.f32 %v2974, %v4657
        %v4745 = vmul.f32 %v2975, %v4659
        %v4746 = vmul.f32 %v2976, %v4661
        %v4747 = vmul.f32 %v2977, %v4663
        %v4748 = vmul.f32 %v2978, %v4665
        %v4749 = vmul.f32 %v2979, %v4667
        %v4750 = vmul.f32 %v2980, %v4669
        %v4751 = vmul.f32 %v2981, %v4671
        %v4752 = vmul.f32 %v2982, %v4673
        %v4753 = vmul.f32 %v2983, %v4675
        %v4754 = vmul.f32 %v2984, %v4677
        %v4755 = vmul.f32 %v2985, %v4679
        %v4756 = vmul.f32 %v2986, %v4681
        %v4757 = vmul.f32 %v2987, %v4683
        %v4758 = vmul.f32 %v2988, %v4685
        %v4759 = vmul.f32 %v2989, %v4687
        %v4760 = vmul.f32 %v2990, %v4689
        %v4761 = vmul.f32 %v2991, %v4691
        %v4762 = vmul.f32 %v2992, %v4693
        %v4763 = vmul.f32 %v2993, %v4695
        %v4764 = vmul.f32 %v2994, %v4697
        %v4765 = vmul.f32 %v2995, %v4699
        %v4766 = vmul.f32 %v2996, %v4701
        %v4767 = vmul.f32 %v2997, %v4703
        %4768 = vst [vmem:[%s539] sm:$0xff] %v4704
        %4769 = vst [vmem:[%s539 + $0x8] sm:$0xff] %v4705
        %4770 = vst [vmem:[%s539 + $0x10] sm:$0xff] %v4706
        %4771 = vst [vmem:[%s539 + $0x18] sm:$0xff] %v4707
        %4772 = vst [vmem:[%s539 + $0x20] sm:$0xff] %v4708
        %4773 = vst [vmem:[%s539 + $0x28] sm:$0xff] %v4709
        %4774 = vst [vmem:[%s539 + $0x30] sm:$0xff] %v4710
        %4775 = vst [vmem:[%s539 + $0x38] sm:$0xff] %v4711
        %4776 = vst [vmem:[%s539 + $0x40] sm:$0xff] %v4712
        %4777 = vst [vmem:[%s539 + $0x48] sm:$0xff] %v4713
        %4778 = vst [vmem:[%s539 + $0x50] sm:$0xff] %v4714
        %4779 = vst [vmem:[%s539 + $0x58] sm:$0xff] %v4715
        %4780 = vst [vmem:[%s539 + $0x60] sm:$0xff] %v4716
        %4781 = vst [vmem:[%s539 + $0x68] sm:$0xff] %v4717
        %4782 = vst [vmem:[%s539 + $0x70] sm:$0xff] %v4718
        %4783 = vst [vmem:[%s539 + $0x78] sm:$0xff] %v4719
        %4784 = vst [vmem:[%s539 + $0x80] sm:$0xff] %v4720
        %4785 = vst [vmem:[%s539 + $0x88] sm:$0xff] %v4721
        %4786 = vst [vmem:[%s539 + $0x90] sm:$0xff] %v4722
        %4787 = vst [vmem:[%s539 + $0x98] sm:$0xff] %v4723
        %4788 = vst [vmem:[%s539 + $0xa0] sm:$0xff] %v4724
        %4789 = vst [vmem:[%s539 + $0xa8] sm:$0xff] %v4725
        %4790 = vst [vmem:[%s539 + $0xb0] sm:$0xff] %v4726
        %4791 = vst [vmem:[%s539 + $0xb8] sm:$0xff] %v4727
        %4792 = vst [vmem:[%s539 + $0xc0] sm:$0xff] %v4728
        %4793 = vst [vmem:[%s539 + $0xc8] sm:$0xff] %v4729
        %4794 = vst [vmem:[%s539 + $0xd0] sm:$0xff] %v4730
        %4795 = vst [vmem:[%s539 + $0xd8] sm:$0xff] %v4731
        %4796 = vst [vmem:[%s539 + $0xe0] sm:$0xff] %v4732
        %4797 = vst [vmem:[%s539 + $0xe8] sm:$0xff] %v4733
        %4798 = vst [vmem:[%s539 + $0xf0] sm:$0xff] %v4734
        %4799 = vst [vmem:[%s539 + $0xf8] sm:$0xff] %v4735
        %4800 = vst [vmem:[%s539 + $0x100] sm:$0xff] %v4736
        %4801 = vst [vmem:[%s539 + $0x108] sm:$0xff] %v4737
        %4802 = vst [vmem:[%s539 + $0x110] sm:$0xff] %v4738
        %4803 = vst [vmem:[%s539 + $0x118] sm:$0xff] %v4739
        %4804 = vst [vmem:[%s539 + $0x120] sm:$0xff] %v4740
        %4805 = vst [vmem:[%s539 + $0x128] sm:$0xff] %v4741
        %4806 = vst [vmem:[%s539 + $0x130] sm:$0xff] %v4742
        %4807 = vst [vmem:[%s539 + $0x138] sm:$0xff] %v4743
        %4808 = vst [vmem:[%s539 + $0x140] sm:$0xff] %v4744
        %4809 = vst [vmem:[%s539 + $0x148] sm:$0xff] %v4745
        %4810 = vst [vmem:[%s539 + $0x150] sm:$0xff] %v4746
        %4811 = vst [vmem:[%s539 + $0x158] sm:$0xff] %v4747
        %4812 = vst [vmem:[%s539 + $0x160] sm:$0xff] %v4748
        %4813 = vst [vmem:[%s539 + $0x168] sm:$0xff] %v4749
        %4814 = vst [vmem:[%s539 + $0x170] sm:$0xff] %v4750
        %4815 = vst [vmem:[%s539 + $0x178] sm:$0xff] %v4751
        %4816 = vst [vmem:[%s539 + $0x180] sm:$0xff] %v4752
        %4817 = vst [vmem:[%s539 + $0x188] sm:$0xff] %v4753
        %4818 = vst [vmem:[%s539 + $0x190] sm:$0xff] %v4754
        %4819 = vst [vmem:[%s539 + $0x198] sm:$0xff] %v4755
        %4820 = vst [vmem:[%s539 + $0x1a0] sm:$0xff] %v4756
        %4821 = vst [vmem:[%s539 + $0x1a8] sm:$0xff] %v4757
        %4822 = vst [vmem:[%s539 + $0x1b0] sm:$0xff] %v4758
        %4823 = vst [vmem:[%s539 + $0x1b8] sm:$0xff] %v4759
        %4824 = vst [vmem:[%s539 + $0x1c0] sm:$0xff] %v4760
        %4825 = vst [vmem:[%s539 + $0x1c8] sm:$0xff] %v4761
        %4826 = vst [vmem:[%s539 + $0x1d0] sm:$0xff] %v4762
        %4827 = vst [vmem:[%s539 + $0x1d8] sm:$0xff] %v4763
        %4828 = vst [vmem:[%s539 + $0x1e0] sm:$0xff] %v4764
        %4829 = vst [vmem:[%s539 + $0x1e8] sm:$0xff] %v4765
        %4830 = vst [vmem:[%s539 + $0x1f0] sm:$0xff] %v4766
        %4831 = vst [vmem:[%s539 + $0x1f8] sm:$0xff] %v4767
        %s4832 = sand.u32 %s257, 1
        %s4833 = scalar_lea.sflag [#allocation4], %s4832
        %s4834 = sand.u32 %s257, 1
        %s4835 = smul.addr %s4834, 512
        %s4836 = scalar_lea.vmem [#allocation11], %s4835
        %s4837 = sand.u32 %s287, 1
        %s4838 = scalar_lea.sflag [#allocation13], %s4837
        %s4839 = sand.u32 %s287, 1
        %s4840 = smul.addr %s4839, 512
        %s4841 = scalar_lea.vmem [#allocation12], %s4840
        // Predicated region
        $region65: #{tpu_custom_call.1} parent=43 // pred_check
          %p4842 = pneg %p267
        $region66: #{tpu_custom_call.1} parent=43 // pred_check_branch
          %4844 = sbr.rel (%p4842) target = $region68
        $region67: #{tpu_custom_call.1} parent=43 // pred_region
          %s4845 = smul.u32 64, %s40
          %s4847 = ssub.s32 8192, 8192
          %4848 = vsyncadd %s4833, %s4847
          %s4849 = sadd.s32 %s41, %s4845
          %s4850 = smul.addr %s39, 128
          %s4851 = sadd.s32 %s4849, %s4850
          %s4852 = smul.addr %s4851, 128
          %s4853 = scalar_lea.hbm %s6, %s4852
          %s4854 = sshll.u32 %s4836, 4
          %s4855 = int_to_ptr.vmem [resolvable:$true] %s4854
          %4860 = dma.vmem_to_hbm [thread:$0]  %s4855, 8192, %s4853, %s4833, 128, 128, 8
        $region68: #{tpu_custom_call.1} parent=43 // pred_fallthru
          _
        // Predicated region
        $region69: #{tpu_custom_call.1} parent=43 // pred_check
          %p4861 = pneg %p297
        $region70: #{tpu_custom_call.1} parent=43 // pred_check_branch
          %4863 = sbr.rel (%p4861) target = $region72
        $region71: #{tpu_custom_call.1} parent=43 // pred_region
          %s4864 = smul.u32 64, %s40
          %s4866 = ssub.s32 8192, 8192
          %4867 = vsyncadd %s4838, %s4866
          %s4868 = sadd.s32 %s41, %s4864
          %s4869 = smul.addr %s39, 128
          %s4870 = sadd.s32 %s4868, %s4869
          %s4871 = smul.addr %s4870, 128
          %s4872 = scalar_lea.hbm %s7, %s4871
          %s4873 = sshll.u32 %s4841, 4
          %s4874 = int_to_ptr.vmem [resolvable:$true] %s4873
          %4879 = dma.vmem_to_hbm [thread:$0]  %s4874, 8192, %s4872, %s4838, 128, 128, 8
        $region72: #{tpu_custom_call.1} parent=43 // pred_fallthru
          _
      $region44: #{tpu_custom_call.1} parent=5 // pred_fallthru
        _
      %p4880 = scmp.le.s32.totalorder 2, %s29
      // Predicated region
      $region73: #{tpu_custom_call.1} parent=5 // pred_check
        %p4881 = pneg %p4880
      $region74: #{tpu_custom_call.1} parent=5 // pred_check_branch
        %4883 = sbr.rel (%p4881) target = $region76
      $region75: #{tpu_custom_call.1} parent=5 // pred_region
        %s4884 = ssub.s32 %s29, 2
        // Predicated region
        $region77: #{tpu_custom_call.1} parent=75 // pred_check
          %p4885 = pneg %p273
        $region78: #{tpu_custom_call.1} parent=75 // pred_check_branch
          %4887 = sbr.rel (%p4885) target = $region80
        $region79: #{tpu_custom_call.1} parent=75 // pred_region
          %s4888 = sand.u32 %s258, 1
          %s4889 = scalar_lea.sflag [#allocation4], %s4888
          %s4890 = sand.u32 %s258, 1
          %s4891 = smul.addr %s4890, 512
          %s4892 = scalar_lea.vmem [#allocation11], %s4891
          %4893 = dma.done %s4889, 8192
        $region80: #{tpu_custom_call.1} parent=75 // pred_fallthru
          _
        // Predicated region
        $region81: #{tpu_custom_call.1} parent=75 // pred_check
          %p4894 = pneg %p303
        $region82: #{tpu_custom_call.1} parent=75 // pred_check_branch
          %4896 = sbr.rel (%p4894) target = $region84
        $region83: #{tpu_custom_call.1} parent=75 // pred_region
          %s4897 = sand.u32 %s288, 1
          %s4898 = scalar_lea.sflag [#allocation13], %s4897
          %s4899 = sand.u32 %s288, 1
          %s4900 = smul.addr %s4899, 512
          %s4901 = scalar_lea.vmem [#allocation12], %s4900
          %4902 = dma.done %s4898, 8192
        $region84: #{tpu_custom_call.1} parent=75 // pred_fallthru
          _
      $region76: #{tpu_custom_call.1} parent=5 // pred_fallthru
        _
    $region6: #{tpu_custom_call.1} parent=1 // loop_footer
      %s33 = sadd.s32 1, %s29
    $region7: #{tpu_custom_call.1} parent=1 // loop_footer_branch
      %28 = sbr.rel target = $region3
    $region8: #{tpu_custom_call.1} parent=1 // loop_exit
      _
    %4903 = vsyncpa [#allocation3], 1
    %s4904 = scalar_lea.sflag [#allocation3], 1
    %4905 = vsyncpa %s4904, 1
    %4906 = vsyncpa [#allocation6], 1
    %s4907 = scalar_lea.sflag [#allocation6], 1
    %4908 = vsyncpa %s4907, 1
    %4909 = vsyncpa [#allocation9], 1
    %s4910 = scalar_lea.sflag [#allocation9], 1
    %4911 = vsyncpa %s4910, 1
    %4912 = vsyncpa [#allocation4], 1
    %s4913 = scalar_lea.sflag [#allocation4], 1
    %4914 = vsyncpa %s4913, 1
    %4915 = vsyncpa [#allocation13], 1
    %s4916 = scalar_lea.sflag [#allocation13], 1
    %4917 = vsyncpa %s4916, 1

</llo_original>
